<compile_context>
chip_gen: v7x
topology: tpu7x:2x2x1
jax: 0.10.0
libtpu: 0.0.40
codegen_flags: <defaults>
</compile_context>

<pallas_src>
import functools

import jax
import jax.numpy as jnp
from jax.experimental import pallas as pl
from jax.experimental.pallas import tpu as pltpu


LANE = 128


def _rup(x, m):
    return ((x + m - 1) // m) * m


# ----------------------------------------------------------------------------
# Fused Pallas kernel: (k x k conv as k^2 shifted matmuls) -> ReLU
#                      -> 1x1 conv -> ReLU -> 1x1 conv -> ReLU
# BN is pre-folded into the weights; t*_ref are the per-channel shifts.
# ----------------------------------------------------------------------------
def _make_kernel(ksize, H, W, Cin):
    HW = H * W

    def kernel(x_ref, w1_ref, t1_ref, w2_ref, t2_ref, w3_ref, t3_ref, o_ref):
        # ---- main conv: im2col fused in-kernel as k*k shifted matmuls ------
        acc = None
        for i in range(ksize * ksize):
            kh, kw = divmod(i, ksize)
            patch = x_ref[kh:kh + H, kw:kw + W, :].reshape(HW, Cin)  # bf16
            term = jnp.dot(patch, w1_ref[i],
                           preferred_element_type=jnp.float32)
            acc = term if acc is None else acc + term
        h1 = jnp.maximum(acc + t1_ref[...], 0.0)          # BN folded -> shift
        # ---- mlp_conv1 (1x1 conv == channel matmul) + BN + ReLU ------------
        h2 = jnp.dot(h1.astype(jnp.bfloat16), w2_ref[...],
                     preferred_element_type=jnp.float32)
        h2 = jnp.maximum(h2 + t2_ref[...], 0.0)
        # ---- mlp_conv2 (1x1 conv) + BN + ReLU ------------------------------
        h3 = jnp.dot(h2.astype(jnp.bfloat16), w3_ref[...],
                     preferred_element_type=jnp.float32)
        o_ref[...] = jnp.maximum(h3 + t3_ref[...], 0.0).astype(o_ref.dtype)

    return kernel


def _fused_nin(x_pad, w1, t1, w2, t2, w3, t3, *, ksize, H, W):
    """x_pad: (N, H+2p, W+2p, Cin) bf16. Returns (N, H*W, C3p) f32."""
    N, Hp, Wp, Cin = x_pad.shape
    C1p = w2.shape[0]
    C2p = w3.shape[0]
    C3p = w3.shape[1]
    HW = H * W

    kernel = _make_kernel(ksize, H, W, Cin)

    # Constant-index blocks: DMA'd once, re-used across all grid steps.
    # (For multi-MiB weights one would additionally single-buffer them via
    #  pipeline_mode=pl.Buffered(1) or a one-shot DMA into scratch.)
    def const(shape):
        return pl.BlockSpec(shape, lambda n, _s=len(shape): (0,) * _s)

    # Advisory cost estimate for XLA's scheduler.
    flops = 2 * N * HW * (ksize * ksize * Cin * C1p + C1p * C2p + C2p * C3p)
    bytes_accessed = (N * Hp * Wp * Cin * 2                 # x (bf16)
                      + (w1.size + w2.size + w3.size) * 2   # weights (bf16)
                      + (t1.size + t2.size + t3.size) * 4   # shifts (f32)
                      + N * HW * C3p * 4)                   # output (f32)
    cost = pl.CostEstimate(flops=flops, transcendentals=0,
                           bytes_accessed=bytes_accessed)

    # VMEM budget: 2x-buffered x/out blocks + weights + f32 temporaries,
    # with layout padding (bf16 sublane tile 16, 128 lanes); clamp so the
    # request also fits v7x's 64 MiB per-TensorCore VMEM.
    x_blk = Hp * _rup(Wp, 16) * _rup(Cin, LANE) * 2
    out_blk = HW * C3p * 4
    w_bytes = (w1.size + w2.size + w3.size) * 2 + (C1p + C2p + C3p) * 8 * 4
    tmp_bytes = HW * (C1p + C2p) * 4 * 3
    need = 2 * (x_blk + out_blk) + 2 * w_bytes + tmp_bytes
    vmem_limit = int(min(max(2 * need, 16 * 1024 * 1024), 48 * 1024 * 1024))

    return pl.pallas_call(
        kernel,
        out_shape=jax.ShapeDtypeStruct((N, HW, C3p), jnp.float32),
        grid_spec=pltpu.PrefetchScalarGridSpec(
            num_scalar_prefetch=0,
            grid=(N,),                        # one padded image per step
            in_specs=[
                # full padded image (halo included) -> no HBM im2col
                pl.BlockSpec((None, Hp, Wp, Cin), lambda n: (n, 0, 0, 0)),
                const((ksize * ksize, Cin, C1p)),
                const((1, C1p)),
                const((C1p, C2p)),
                const((1, C2p)),
                const((C2p, C3p)),
                const((1, C3p)),
            ],
            out_specs=pl.BlockSpec((None, HW, C3p), lambda n: (n, 0, 0)),
        ),
        compiler_params=pltpu.CompilerParams(
            dimension_semantics=("parallel",),
            vmem_limit_bytes=vmem_limit),
        cost_estimate=cost,
    )(x_pad, w1, t1, w2, t2, w3, t3)


# ----------------------------------------------------------------------------
# Wrapper: BN folding into weights, channel padding, layout conversion
# ----------------------------------------------------------------------------
def _fold_bn_into_weight(w, bias, bn, eps=1e-5):
    """BN(x @ w + bias) == x @ (w * s) + shift,  s = gamma / sqrt(var+eps)."""
    gamma, beta, mean, var = bn
    s = gamma * jax.lax.rsqrt(var + eps)
    return w * s, (bias - mean) * s + beta


def nin_block_forward(x_nchw, params, ksize):
    """Forward of NIN_block. x_nchw: (N, Cin, H, W) f32 -> (N, C3, H, W) f32."""
    pad = (ksize - 1) // 2
    N, Cin, H, W = x_nchw.shape

    w1, sh1 = _fold_bn_into_weight(params["w1"], params["b1"], params["bn1"])
    w2, sh2 = _fold_bn_into_weight(params["w2"], params["b2"], params["bn2"])
    w3, sh3 = _fold_bn_into_weight(params["w3"], params["b3"], params["bn3"])

    C1, C2, C3 = w1.shape[-1], w2.shape[-1], w3.shape[-1]
    C1p, C2p, C3p = _rup(C1, LANE), _rup(C2, LANE), _rup(C3, LANE)

    # Zero-pad channels to lane-dense widths. Padded channels have zero
    # weight columns and zero shift -> stay exactly 0 through ReLU, so the
    # following layers (whose padded weight rows are also 0) are unaffected.
    w1p = jnp.pad(w1, ((0, 0), (0, 0), (0, 0), (0, C1p - C1)))
    w1p = w1p.reshape(ksize * ksize, Cin, C1p).astype(jnp.bfloat16)
    t1p = jnp.pad(sh1, (0, C1p - C1)).reshape(1, C1p).astype(jnp.float32)
    w2p = jnp.pad(w2, ((0, C1p - C1), (0, C2p - C2))).astype(jnp.bfloat16)
    t2p = jnp.pad(sh2, (0, C2p - C2)).reshape(1, C2p).astype(jnp.float32)
    w3p = jnp.pad(w3, ((0, C2p - C2), (0, C3p - C3))).astype(jnp.bfloat16)
    t3p = jnp.pad(sh3, (0, C3p - C3)).reshape(1, C3p).astype(jnp.float32)

    # NCHW -> NHWC, 'same' spatial padding, bf16 (single HBM copy of x;
    # ~1.2x the input size instead of the previous 9x im2col expansion).
    x = jnp.transpose(x_nchw, (0, 2, 3, 1)).astype(jnp.bfloat16)
    x_pad = jnp.pad(x, ((0, 0), (pad, pad), (pad, pad), (0, 0)))

    y = _fused_nin(x_pad, w1p, t1p, w2p, t2p, w3p, t3p, ksize=ksize, H=H, W=W)
    y = y[:, :, :C3].reshape(N, H, W, C3)
    return jnp.transpose(y, (0, 3, 1, 2))            # back to NCHW


# ----------------------------------------------------------------------------
# Deterministic parameter init (synthetic; matches nn.Module shapes)
# ----------------------------------------------------------------------------
def init_params(key, in_ch1, out_ch1, out_ch2, out_ch3, ksize):
    ks = jax.random.split(key, 12)

    def bn(keys, c):
        gamma = 1.0 + 0.1 * jax.random.normal(keys[0], (c,), jnp.float32)
        beta = 0.1 * jax.random.normal(keys[1], (c,), jnp.float32)
        mean = 0.05 * jax.random.normal(keys[2], (c,), jnp.float32)
        var = jnp.abs(1.0 + 0.1 * jax.random.normal(keys[3], (c,), jnp.float32))
        return (gamma, beta, mean, var)

    params = {
        # main conv stored as (kh, kw, cin, cout)
        "w1": 0.1 * jax.random.normal(ks[0], (ksize, ksize, in_ch1, out_ch1),
                                      jnp.float32),
        "b1": 0.1 * jax.random.normal(ks[1], (out_ch1,), jnp.float32),
        "bn1": bn(jax.random.split(ks[2], 4), out_ch1),
        "w2": 0.1 * jax.random.normal(ks[3], (out_ch1, out_ch2), jnp.float32),
        "b2": 0.1 * jax.random.normal(ks[4], (out_ch2,), jnp.float32),
        "bn2": bn(jax.random.split(ks[5], 4), out_ch2),
        "w3": 0.1 * jax.random.normal(ks[6], (out_ch2, out_ch3), jnp.float32),
        "b3": 0.1 * jax.random.normal(ks[7], (out_ch3,), jnp.float32),
        "bn3": bn(jax.random.split(ks[8], 4), out_ch3),
    }
    return params


# ----------------------------------------------------------------------------
# Pure-JAX f32 reference (sanity check)
# ----------------------------------------------------------------------------
def _reference(x_nchw, params, ksize):
    pad = (ksize - 1) // 2

    def bn_relu(z_nchw, bias, bn_params):
        gamma, beta, mean, var = bn_params
        z = z_nchw + bias[None, :, None, None]
        z = (z - mean[None, :, None, None]) / jnp.sqrt(
            var[None, :, None, None] + 1e-5)
        z = z * gamma[None, :, None, None] + beta[None, :, None, None]
        return jnp.maximum(z, 0.0)

    w1 = jnp.transpose(params["w1"], (3, 2, 0, 1))
    z = jax.lax.conv_general_dilated(
        x_nchw, w1, window_strides=(1, 1), padding=[(pad, pad), (pad, pad)],
        dimension_numbers=("NCHW", "OIHW", "NCHW"))
    z = bn_relu(z, params["b1"], params["bn1"])

    w2 = jnp.transpose(params["w2"], (1, 0))[:, :, None, None]
    z = jax.lax.conv_general_dilated(
        z, w2, window_strides=(1, 1), padding=[(0, 0), (0, 0)],
        dimension_numbers=("NCHW", "OIHW", "NCHW"))
    z = bn_relu(z, params["b2"], params["bn2"])

    w3 = jnp.transpose(params["w3"], (1, 0))[:, :, None, None]
    z = jax.lax.conv_general_dilated(
        z, w3, window_strides=(1, 1), padding=[(0, 0), (0, 0)],
        dimension_numbers=("NCHW", "OIHW", "NCHW"))
    z = bn_relu(z, params["b3"], params["bn3"])
    return z


if __name__ == "__main__":
    # Small shapes consistent with the module: N=2, in_ch1=4, H=W=16,
    # out_ch1=16, out_ch2=16, out_ch3=8, ksize=3.
    in_ch1, out_ch1, out_ch2, out_ch3, ksize = 4, 16, 16, 8, 3
    N, H, W = 2, 16, 16

    key = jax.random.PRNGKey(0)
    k_x, k_p = jax.random.split(key)
    x = jax.random.normal(k_x, (N, in_ch1, H, W), jnp.float32)
    params = init_params(k_p, in_ch1, out_ch1, out_ch2, out_ch3, ksize)

    fwd = jax.jit(functools.partial(nin_block_forward, ksize=ksize))
    y = jax.block_until_ready(fwd(x, params))

    # Sanity check against a pure-JAX f32 reference of the same math
    # (tolerance loosened for bf16 matmul inputs with f32 accumulation).
    y_ref = jax.block_until_ready(_reference(x, params, ksize))
    assert y.shape == (N, out_ch3, H, W)
    max_err = float(jnp.max(jnp.abs(y - y_ref)))
    assert jnp.allclose(y, y_ref, atol=5e-2, rtol=5e-2), f"max_err={max_err}"

    print("KERNEL_OK")
</pallas_src>

<mosaic_0001>
module attributes {stable_mosaic.version = 11 : i64} {
  func.func @kernel(%arg0: i32, %arg1: memref<1x18x18x4xbf16, #tpu.memory_space<vmem>>, %arg2: memref<9x4x128xbf16, #tpu.memory_space<vmem>>, %arg3: memref<1x128xf32, #tpu.memory_space<vmem>>, %arg4: memref<128x128xbf16, #tpu.memory_space<vmem>>, %arg5: memref<1x128xf32, #tpu.memory_space<vmem>>, %arg6: memref<128x128xbf16, #tpu.memory_space<vmem>>, %arg7: memref<1x128xf32, #tpu.memory_space<vmem>>, %arg8: memref<1x256x128xf32, #tpu.memory_space<vmem>>) attributes {dimension_semantics = [#tpu.dimension_semantics<parallel>], iteration_bounds = array<i64: 2>, scalar_prefetch = 0 : i64, scratch_operands = 0 : i64, tpu.core_type = #tpu.core_type<tc>, window_params = [{transform_indices = @transform_0, window_bounds = array<i64: 1, 18, 18, 4>}, {pipeline_mode = #tpu.pipeline_mode<synchronous>, transform_indices = @transform_1, window_bounds = array<i64: 9, 4, 128>}, {pipeline_mode = #tpu.pipeline_mode<synchronous>, transform_indices = @transform_2, window_bounds = array<i64: 1, 128>}, {pipeline_mode = #tpu.pipeline_mode<synchronous>, transform_indices = @transform_3, window_bounds = array<i64: 128, 128>}, {pipeline_mode = #tpu.pipeline_mode<synchronous>, transform_indices = @transform_4, window_bounds = array<i64: 1, 128>}, {pipeline_mode = #tpu.pipeline_mode<synchronous>, transform_indices = @transform_5, window_bounds = array<i64: 128, 128>}, {pipeline_mode = #tpu.pipeline_mode<synchronous>, transform_indices = @transform_6, window_bounds = array<i64: 1, 128>}, {transform_indices = @transform_7, window_bounds = array<i64: 1, 256, 128>}]} {
    %c0 = arith.constant 0 : index
    %c0_0 = arith.constant 0 : index
    %c0_1 = arith.constant 0 : index
    %c0_2 = arith.constant 0 : index
    %0 = vector.load %arg1[%c0, %c0_0, %c0_1, %c0_2] : memref<1x18x18x4xbf16, #tpu.memory_space<vmem>>, vector<1x16x16x4xbf16>
    %1 = vector.shape_cast %0 : vector<1x16x16x4xbf16> to vector<16x16x4xbf16>
    %2 = vector.shape_cast %1 : vector<16x16x4xbf16> to vector<256x4xbf16>
    %c0_3 = arith.constant 0 : index
    %c0_4 = arith.constant 0 : index
    %c0_5 = arith.constant 0 : index
    %3 = vector.load %arg2[%c0_3, %c0_4, %c0_5] : memref<9x4x128xbf16, #tpu.memory_space<vmem>>, vector<1x4x128xbf16>
    %4 = vector.shape_cast %3 : vector<1x4x128xbf16> to vector<4x128xbf16>
    %cst = arith.constant dense<0.000000e+00> : vector<256x128xf32>
    %5 = tpu.matmul %2, %4, %cst {dimension_numbers = #tpu.dot_dimension_numbers<[1], [0], [0], [1], [0, 0, 1, 1], [], []>} : vector<256x4xbf16>, vector<4x128xbf16>, vector<256x128xf32> -> vector<256x128xf32>
    %c0_6 = arith.constant 0 : index
    %c0_7 = arith.constant 0 : index
    %c1 = arith.constant 1 : index
    %c0_8 = arith.constant 0 : index
    %6 = vector.load %arg1[%c0_6, %c0_7, %c1, %c0_8] : memref<1x18x18x4xbf16, #tpu.memory_space<vmem>>, vector<1x16x16x4xbf16>
    %7 = vector.shape_cast %6 : vector<1x16x16x4xbf16> to vector<16x16x4xbf16>
    %8 = vector.shape_cast %7 : vector<16x16x4xbf16> to vector<256x4xbf16>
    %c1_9 = arith.constant 1 : index
    %c0_10 = arith.constant 0 : index
    %c0_11 = arith.constant 0 : index
    %9 = vector.load %arg2[%c1_9, %c0_10, %c0_11] : memref<9x4x128xbf16, #tpu.memory_space<vmem>>, vector<1x4x128xbf16>
    %10 = vector.shape_cast %9 : vector<1x4x128xbf16> to vector<4x128xbf16>
    %cst_12 = arith.constant dense<0.000000e+00> : vector<256x128xf32>
    %11 = tpu.matmul %8, %10, %cst_12 {dimension_numbers = #tpu.dot_dimension_numbers<[1], [0], [0], [1], [0, 0, 1, 1], [], []>} : vector<256x4xbf16>, vector<4x128xbf16>, vector<256x128xf32> -> vector<256x128xf32>
    %12 = arith.addf %5, %11 : vector<256x128xf32>
    %c0_13 = arith.constant 0 : index
    %c0_14 = arith.constant 0 : index
    %c2 = arith.constant 2 : index
    %c0_15 = arith.constant 0 : index
    %13 = vector.load %arg1[%c0_13, %c0_14, %c2, %c0_15] : memref<1x18x18x4xbf16, #tpu.memory_space<vmem>>, vector<1x16x16x4xbf16>
    %14 = vector.shape_cast %13 : vector<1x16x16x4xbf16> to vector<16x16x4xbf16>
    %15 = vector.shape_cast %14 : vector<16x16x4xbf16> to vector<256x4xbf16>
    %c2_16 = arith.constant 2 : index
    %c0_17 = arith.constant 0 : index
    %c0_18 = arith.constant 0 : index
    %16 = vector.load %arg2[%c2_16, %c0_17, %c0_18] : memref<9x4x128xbf16, #tpu.memory_space<vmem>>, vector<1x4x128xbf16>
    %17 = vector.shape_cast %16 : vector<1x4x128xbf16> to vector<4x128xbf16>
    %cst_19 = arith.constant dense<0.000000e+00> : vector<256x128xf32>
    %18 = tpu.matmul %15, %17, %cst_19 {dimension_numbers = #tpu.dot_dimension_numbers<[1], [0], [0], [1], [0, 0, 1, 1], [], []>} : vector<256x4xbf16>, vector<4x128xbf16>, vector<256x128xf32> -> vector<256x128xf32>
    %19 = arith.addf %12, %18 : vector<256x128xf32>
    %c0_20 = arith.constant 0 : index
    %c1_21 = arith.constant 1 : index
    %c0_22 = arith.constant 0 : index
    %c0_23 = arith.constant 0 : index
    %20 = vector.load %arg1[%c0_20, %c1_21, %c0_22, %c0_23] : memref<1x18x18x4xbf16, #tpu.memory_space<vmem>>, vector<1x16x16x4xbf16>
    %21 = vector.shape_cast %20 : vector<1x16x16x4xbf16> to vector<16x16x4xbf16>
    %22 = vector.shape_cast %21 : vector<16x16x4xbf16> to vector<256x4xbf16>
    %c3 = arith.constant 3 : index
    %c0_24 = arith.constant 0 : index
    %c0_25 = arith.constant 0 : index
    %23 = vector.load %arg2[%c3, %c0_24, %c0_25] : memref<9x4x128xbf16, #tpu.memory_space<vmem>>, vector<1x4x128xbf16>
    %24 = vector.shape_cast %23 : vector<1x4x128xbf16> to vector<4x128xbf16>
    %cst_26 = arith.constant dense<0.000000e+00> : vector<256x128xf32>
    %25 = tpu.matmul %22, %24, %cst_26 {dimension_numbers = #tpu.dot_dimension_numbers<[1], [0], [0], [1], [0, 0, 1, 1], [], []>} : vector<256x4xbf16>, vector<4x128xbf16>, vector<256x128xf32> -> vector<256x128xf32>
    %26 = arith.addf %19, %25 : vector<256x128xf32>
    %c0_27 = arith.constant 0 : index
    %c1_28 = arith.constant 1 : index
    %c1_29 = arith.constant 1 : index
    %c0_30 = arith.constant 0 : index
    %27 = vector.load %arg1[%c0_27, %c1_28, %c1_29, %c0_30] : memref<1x18x18x4xbf16, #tpu.memory_space<vmem>>, vector<1x16x16x4xbf16>
    %28 = vector.shape_cast %27 : vector<1x16x16x4xbf16> to vector<16x16x4xbf16>
    %29 = vector.shape_cast %28 : vector<16x16x4xbf16> to vector<256x4xbf16>
    %c4 = arith.constant 4 : index
    %c0_31 = arith.constant 0 : index
    %c0_32 = arith.constant 0 : index
    %30 = vector.load %arg2[%c4, %c0_31, %c0_32] : memref<9x4x128xbf16, #tpu.memory_space<vmem>>, vector<1x4x128xbf16>
    %31 = vector.shape_cast %30 : vector<1x4x128xbf16> to vector<4x128xbf16>
    %cst_33 = arith.constant dense<0.000000e+00> : vector<256x128xf32>
    %32 = tpu.matmul %29, %31, %cst_33 {dimension_numbers = #tpu.dot_dimension_numbers<[1], [0], [0], [1], [0, 0, 1, 1], [], []>} : vector<256x4xbf16>, vector<4x128xbf16>, vector<256x128xf32> -> vector<256x128xf32>
    %33 = arith.addf %26, %32 : vector<256x128xf32>
    %c0_34 = arith.constant 0 : index
    %c1_35 = arith.constant 1 : index
    %c2_36 = arith.constant 2 : index
    %c0_37 = arith.constant 0 : index
    %34 = vector.load %arg1[%c0_34, %c1_35, %c2_36, %c0_37] : memref<1x18x18x4xbf16, #tpu.memory_space<vmem>>, vector<1x16x16x4xbf16>
    %35 = vector.shape_cast %34 : vector<1x16x16x4xbf16> to vector<16x16x4xbf16>
    %36 = vector.shape_cast %35 : vector<16x16x4xbf16> to vector<256x4xbf16>
    %c5 = arith.constant 5 : index
    %c0_38 = arith.constant 0 : index
    %c0_39 = arith.constant 0 : index
    %37 = vector.load %arg2[%c5, %c0_38, %c0_39] : memref<9x4x128xbf16, #tpu.memory_space<vmem>>, vector<1x4x128xbf16>
    %38 = vector.shape_cast %37 : vector<1x4x128xbf16> to vector<4x128xbf16>
    %cst_40 = arith.constant dense<0.000000e+00> : vector<256x128xf32>
    %39 = tpu.matmul %36, %38, %cst_40 {dimension_numbers = #tpu.dot_dimension_numbers<[1], [0], [0], [1], [0, 0, 1, 1], [], []>} : vector<256x4xbf16>, vector<4x128xbf16>, vector<256x128xf32> -> vector<256x128xf32>
    %40 = arith.addf %33, %39 : vector<256x128xf32>
    %c0_41 = arith.constant 0 : index
    %c2_42 = arith.constant 2 : index
    %c0_43 = arith.constant 0 : index
    %c0_44 = arith.constant 0 : index
    %41 = vector.load %arg1[%c0_41, %c2_42, %c0_43, %c0_44] : memref<1x18x18x4xbf16, #tpu.memory_space<vmem>>, vector<1x16x16x4xbf16>
    %42 = vector.shape_cast %41 : vector<1x16x16x4xbf16> to vector<16x16x4xbf16>
    %43 = vector.shape_cast %42 : vector<16x16x4xbf16> to vector<256x4xbf16>
    %c6 = arith.constant 6 : index
    %c0_45 = arith.constant 0 : index
    %c0_46 = arith.constant 0 : index
    %44 = vector.load %arg2[%c6, %c0_45, %c0_46] : memref<9x4x128xbf16, #tpu.memory_space<vmem>>, vector<1x4x128xbf16>
    %45 = vector.shape_cast %44 : vector<1x4x128xbf16> to vector<4x128xbf16>
    %cst_47 = arith.constant dense<0.000000e+00> : vector<256x128xf32>
    %46 = tpu.matmul %43, %45, %cst_47 {dimension_numbers = #tpu.dot_dimension_numbers<[1], [0], [0], [1], [0, 0, 1, 1], [], []>} : vector<256x4xbf16>, vector<4x128xbf16>, vector<256x128xf32> -> vector<256x128xf32>
    %47 = arith.addf %40, %46 : vector<256x128xf32>
    %c0_48 = arith.constant 0 : index
    %c2_49 = arith.constant 2 : index
    %c1_50 = arith.constant 1 : index
    %c0_51 = arith.constant 0 : index
    %48 = vector.load %arg1[%c0_48, %c2_49, %c1_50, %c0_51] : memref<1x18x18x4xbf16, #tpu.memory_space<vmem>>, vector<1x16x16x4xbf16>
    %49 = vector.shape_cast %48 : vector<1x16x16x4xbf16> to vector<16x16x4xbf16>
    %50 = vector.shape_cast %49 : vector<16x16x4xbf16> to vector<256x4xbf16>
    %c7 = arith.constant 7 : index
    %c0_52 = arith.constant 0 : index
    %c0_53 = arith.constant 0 : index
    %51 = vector.load %arg2[%c7, %c0_52, %c0_53] : memref<9x4x128xbf16, #tpu.memory_space<vmem>>, vector<1x4x128xbf16>
    %52 = vector.shape_cast %51 : vector<1x4x128xbf16> to vector<4x128xbf16>
    %cst_54 = arith.constant dense<0.000000e+00> : vector<256x128xf32>
    %53 = tpu.matmul %50, %52, %cst_54 {dimension_numbers = #tpu.dot_dimension_numbers<[1], [0], [0], [1], [0, 0, 1, 1], [], []>} : vector<256x4xbf16>, vector<4x128xbf16>, vector<256x128xf32> -> vector<256x128xf32>
    %54 = arith.addf %47, %53 : vector<256x128xf32>
    %c0_55 = arith.constant 0 : index
    %c2_56 = arith.constant 2 : index
    %c2_57 = arith.constant 2 : index
    %c0_58 = arith.constant 0 : index
    %55 = vector.load %arg1[%c0_55, %c2_56, %c2_57, %c0_58] : memref<1x18x18x4xbf16, #tpu.memory_space<vmem>>, vector<1x16x16x4xbf16>
    %56 = vector.shape_cast %55 : vector<1x16x16x4xbf16> to vector<16x16x4xbf16>
    %57 = vector.shape_cast %56 : vector<16x16x4xbf16> to vector<256x4xbf16>
    %c8 = arith.constant 8 : index
    %c0_59 = arith.constant 0 : index
    %c0_60 = arith.constant 0 : index
    %58 = vector.load %arg2[%c8, %c0_59, %c0_60] : memref<9x4x128xbf16, #tpu.memory_space<vmem>>, vector<1x4x128xbf16>
    %59 = vector.shape_cast %58 : vector<1x4x128xbf16> to vector<4x128xbf16>
    %cst_61 = arith.constant dense<0.000000e+00> : vector<256x128xf32>
    %60 = tpu.matmul %57, %59, %cst_61 {dimension_numbers = #tpu.dot_dimension_numbers<[1], [0], [0], [1], [0, 0, 1, 1], [], []>} : vector<256x4xbf16>, vector<4x128xbf16>, vector<256x128xf32> -> vector<256x128xf32>
    %61 = arith.addf %54, %60 : vector<256x128xf32>
    %c0_62 = arith.constant 0 : index
    %c0_63 = arith.constant 0 : index
    %62 = vector.load %arg3[%c0_62, %c0_63] : memref<1x128xf32, #tpu.memory_space<vmem>>, vector<1x128xf32>
    %63 = vector.broadcast %62 : vector<1x128xf32> to vector<256x128xf32>
    %64 = arith.addf %61, %63 : vector<256x128xf32>
    %cst_64 = arith.constant 0.000000e+00 : f32
    %65 = vector.broadcast %cst_64 : f32 to vector<256x128xf32>
    %66 = arith.maximumf %64, %65 : vector<256x128xf32>
    %67 = arith.truncf %66 : vector<256x128xf32> to vector<256x128xbf16>
    %c0_65 = arith.constant 0 : index
    %c0_66 = arith.constant 0 : index
    %68 = vector.load %arg4[%c0_65, %c0_66] : memref<128x128xbf16, #tpu.memory_space<vmem>>, vector<128x128xbf16>
    %cst_67 = arith.constant dense<0.000000e+00> : vector<256x128xf32>
    %69 = tpu.matmul %67, %68, %cst_67 {dimension_numbers = #tpu.dot_dimension_numbers<[1], [0], [0], [1], [0, 0, 1, 1], [], []>} : vector<256x128xbf16>, vector<128x128xbf16>, vector<256x128xf32> -> vector<256x128xf32>
    %c0_68 = arith.constant 0 : index
    %c0_69 = arith.constant 0 : index
    %70 = vector.load %arg5[%c0_68, %c0_69] : memref<1x128xf32, #tpu.memory_space<vmem>>, vector<1x128xf32>
    %71 = vector.broadcast %70 : vector<1x128xf32> to vector<256x128xf32>
    %72 = arith.addf %69, %71 : vector<256x128xf32>
    %cst_70 = arith.constant 0.000000e+00 : f32
    %73 = vector.broadcast %cst_70 : f32 to vector<256x128xf32>
    %74 = arith.maximumf %72, %73 : vector<256x128xf32>
    %75 = arith.truncf %74 : vector<256x128xf32> to vector<256x128xbf16>
    %c0_71 = arith.constant 0 : index
    %c0_72 = arith.constant 0 : index
    %76 = vector.load %arg6[%c0_71, %c0_72] : memref<128x128xbf16, #tpu.memory_space<vmem>>, vector<128x128xbf16>
    %cst_73 = arith.constant dense<0.000000e+00> : vector<256x128xf32>
    %77 = tpu.matmul %75, %76, %cst_73 {dimension_numbers = #tpu.dot_dimension_numbers<[1], [0], [0], [1], [0, 0, 1, 1], [], []>} : vector<256x128xbf16>, vector<128x128xbf16>, vector<256x128xf32> -> vector<256x128xf32>
    %c0_74 = arith.constant 0 : index
    %c0_75 = arith.constant 0 : index
    %78 = vector.load %arg7[%c0_74, %c0_75] : memref<1x128xf32, #tpu.memory_space<vmem>>, vector<1x128xf32>
    %79 = vector.broadcast %78 : vector<1x128xf32> to vector<256x128xf32>
    %80 = arith.addf %77, %79 : vector<256x128xf32>
    %cst_76 = arith.constant 0.000000e+00 : f32
    %81 = vector.broadcast %cst_76 : f32 to vector<256x128xf32>
    %82 = arith.maximumf %80, %81 : vector<256x128xf32>
    %c0_77 = arith.constant 0 : index
    %c0_78 = arith.constant 0 : index
    %c0_79 = arith.constant 0 : index
    %83 = vector.load %arg8[%c0_77, %c0_78, %c0_79] : memref<1x256x128xf32, #tpu.memory_space<vmem>>, vector<1x256x128xf32>
    %84 = vector.shape_cast %83 : vector<1x256x128xf32> to vector<256x128xf32>
    %85 = vector.shape_cast %82 : vector<256x128xf32> to vector<1x256x128xf32>
    tpu.vector_store %arg8[%c0_77, %c0_78, %c0_79], %85 {strides = array<i32>} : memref<1x256x128xf32, #tpu.memory_space<vmem>>, vector<1x256x128xf32>,
    return
  }
  func.func @transform_0(%arg0: i32) -> (i32, i32, i32, i32) {
    %c0_i32 = arith.constant 0 : i32
    %c0_i32_0 = arith.constant 0 : i32
    %c0_i32_1 = arith.constant 0 : i32
    %c0_i32_2 = arith.constant 0 : i32
    return %arg0, %c0_i32, %c0_i32_0, %c0_i32_1 : i32, i32, i32, i32
  }
  func.func @transform_1(%arg0: i32) -> (i32, i32, i32) {
    %c0_i32 = arith.constant 0 : i32
    %c0_i32_0 = arith.constant 0 : i32
    %c0_i32_1 = arith.constant 0 : i32
    %c0_i32_2 = arith.constant 0 : i32
    return %c0_i32, %c0_i32_0, %c0_i32_1 : i32, i32, i32
  }
  func.func @transform_2(%arg0: i32) -> (i32, i32) {
    %c0_i32 = arith.constant 0 : i32
    %c0_i32_0 = arith.constant 0 : i32
    %c0_i32_1 = arith.constant 0 : i32
    return %c0_i32, %c0_i32_0 : i32, i32
  }
  func.func @transform_3(%arg0: i32) -> (i32, i32) {
    %c0_i32 = arith.constant 0 : i32
    %c0_i32_0 = arith.constant 0 : i32
    %c0_i32_1 = arith.constant 0 : i32
    return %c0_i32, %c0_i32_0 : i32, i32
  }
  func.func @transform_4(%arg0: i32) -> (i32, i32) {
    %c0_i32 = arith.constant 0 : i32
    %c0_i32_0 = arith.constant 0 : i32
    %c0_i32_1 = arith.constant 0 : i32
    return %c0_i32, %c0_i32_0 : i32, i32
  }
  func.func @transform_5(%arg0: i32) -> (i32, i32) {
    %c0_i32 = arith.constant 0 : i32
    %c0_i32_0 = arith.constant 0 : i32
    %c0_i32_1 = arith.constant 0 : i32
    return %c0_i32, %c0_i32_0 : i32, i32
  }
  func.func @transform_6(%arg0: i32) -> (i32, i32) {
    %c0_i32 = arith.constant 0 : i32
    %c0_i32_0 = arith.constant 0 : i32
    %c0_i32_1 = arith.constant 0 : i32
    return %c0_i32, %c0_i32_0 : i32, i32
  }
  func.func @transform_7(%arg0: i32) -> (i32, i32, i32) {
    %c0_i32 = arith.constant 0 : i32
    %c0_i32_0 = arith.constant 0 : i32
    %c0_i32_1 = arith.constant 0 : i32
    return %arg0, %c0_i32, %c0_i32_0 : i32, i32, i32
  }
}

</mosaic_0001>

<llo_original>
// kernel: nin_block_forward.1
$region0: #{nin_block_forward.1}
  #allocation0 [shape = 'u32[]', space=smem, size = 0x4, offset = 0x4, fixed_abs, tag = 'smem constant byte address 0x4 - core index']
  #allocation1 [shape = 'u32[144,128]{1,0:T(1,128)}', space=vmem, size = 0x12000, scoped, tag = 'internal scratch']
  %s0 = inlined_call_operand.vmem [shape: bf16[2,18,18,4], index: 0, kind: input, shape index: {}]
  %s1 = inlined_call_operand.vmem [shape: bf16[9,4,128], index: 1, kind: input, shape index: {}]
  %s2 = inlined_call_operand.vmem [shape: f32[1,128], index: 2, kind: input, shape index: {}]
  %s3 = inlined_call_operand.vmem [shape: bf16[128,128], index: 3, kind: input, shape index: {}]
  %s4 = inlined_call_operand.vmem [shape: f32[1,128], index: 4, kind: input, shape index: {}]
  %s5 = inlined_call_operand.vmem [shape: bf16[128,128], index: 5, kind: input, shape index: {}]
  %s6 = inlined_call_operand.vmem [shape: f32[1,128], index: 6, kind: input, shape index: {}]
  %s7 = inlined_call_operand.vmem [shape: f32[2,256,128], index: 7, kind: output, shape index: {}]
  %s8 = sld [smem:[#allocation0]]
  $region61: #{nin_block_forward.1} parent=0
    _
  %s10 = ssub.s32 1, %s8
  %s11 = scalar_select 0, %s10, %s8
  loop: start=0, step=1, limit=4
  $region2: #{nin_block_forward.1} parent=0 // loop_pre_header
    _
  $region3: #{nin_block_forward.1} parent=0 // loop_header
    %s13 = sphi 0, %s17
    %p14 = scmp.ge.s32.totalorder %s13, 4
    %s23 = sphi 0, %s25
    %s26 = sphi 0, %s23
    %s27 = sphi 0, %s26
    %s43 = sphi 0, %s27
    %s47 = sphi 0, %s47
    %s49 = sphi 0, %s47
    %s50 = sphi 0, %s49
    %s64 = sphi 0, %s50
    %s68 = sphi 0, %s68
    %s70 = sphi 0, %s68
    %s71 = sphi 0, %s70
    %s85 = sphi 0, %s71
    %s89 = sphi 0, %s89
    %s91 = sphi 0, %s89
    %s92 = sphi 0, %s91
    %s106 = sphi 0, %s92
    %s110 = sphi 0, %s110
    %s112 = sphi 0, %s110
    %s113 = sphi 0, %s112
    %s127 = sphi 0, %s113
    %s131 = sphi 0, %s131
    %s133 = sphi 0, %s131
    %s134 = sphi 0, %s133
    %s148 = sphi 0, %s134
    %s152 = sphi 0, %s152
    %s154 = sphi 0, %s152
    %s155 = sphi 0, %s154
    %s169 = sphi 0, %s155
    %s175 = sphi 0, %s177
    %s178 = sphi 0, %s175
    %s179 = sphi 0, %s178
    %s195 = sphi 0, %s179
  $region4: #{nin_block_forward.1} parent=0 // loop_header_branch
    %16 = sbr.rel (%p14) target = $region8
  $region5: #{nin_block_forward.1} parent=0 // loop_body
    %s18 = ssub.s32 %s13, 1
    %s19 = ssub.s32 %s13, 2
    %s20 = sadd.s32 %s13, 1
    %s21 = ssub.s32 %s13, %s20
    %p22 = scmp.eq.s32.totalorder %s21, 0
    %s24 = sadd.s32 %s23, 1
    %s25 = scalar_select %p22, %s23, %s24
    %p28 = pneg %p22
    %p29 = scmp.eq.s32.totalorder %s13, 1
    %p30 = por %p28, %p29
    %p31 = scmp.ne.s32.totalorder %s23, %s26
    %p32 = scmp.eq.s32.totalorder %s13, 0
    %p33 = por %p31, %p32
    %p34 = scmp.ne.s32.totalorder %s23, %s26
    %p35 = scmp.eq.s32.totalorder %s18, 1
    %p36 = por %p34, %p35
    %p37 = scmp.ne.s32.totalorder %s26, %s27
    %p38 = scmp.eq.s32.totalorder %s18, 0
    %p39 = por %p37, %p38
    %p40 = scmp.ne.s32.totalorder %s26, %s27
    %p41 = scmp.eq.s32.totalorder %s19, 1
    %p42 = por %p40, %p41
    %p44 = scmp.ne.s32.totalorder %s27, %s43
    %p45 = scmp.eq.s32.totalorder %s19, 0
    %p46 = por %p44, %p45
    %s48 = sadd.s32 %s47, 1
    %p51 = scmp.eq.s32.totalorder %s13, 1
    %p52 = scmp.ne.s32.totalorder %s47, %s49
    %p53 = scmp.eq.s32.totalorder %s13, 0
    %p54 = por %p52, %p53
    %p55 = scmp.ne.s32.totalorder %s47, %s49
    %p56 = scmp.eq.s32.totalorder %s18, 1
    %p57 = por %p55, %p56
    %p58 = scmp.ne.s32.totalorder %s49, %s50
    %p59 = scmp.eq.s32.totalorder %s18, 0
    %p60 = por %p58, %p59
    %p61 = scmp.ne.s32.totalorder %s49, %s50
    %p62 = scmp.eq.s32.totalorder %s19, 1
    %p63 = por %p61, %p62
    %p65 = scmp.ne.s32.totalorder %s50, %s64
    %p66 = scmp.eq.s32.totalorder %s19, 0
    %p67 = por %p65, %p66
    %s69 = sadd.s32 %s68, 1
    %p72 = scmp.eq.s32.totalorder %s13, 1
    %p73 = scmp.ne.s32.totalorder %s68, %s70
    %p74 = scmp.eq.s32.totalorder %s13, 0
    %p75 = por %p73, %p74
    %p76 = scmp.ne.s32.totalorder %s68, %s70
    %p77 = scmp.eq.s32.totalorder %s18, 1
    %p78 = por %p76, %p77
    %p79 = scmp.ne.s32.totalorder %s70, %s71
    %p80 = scmp.eq.s32.totalorder %s18, 0
    %p81 = por %p79, %p80
    %p82 = scmp.ne.s32.totalorder %s70, %s71
    %p83 = scmp.eq.s32.totalorder %s19, 1
    %p84 = por %p82, %p83
    %p86 = scmp.ne.s32.totalorder %s71, %s85
    %p87 = scmp.eq.s32.totalorder %s19, 0
    %p88 = por %p86, %p87
    %s90 = sadd.s32 %s89, 1
    %p93 = scmp.eq.s32.totalorder %s13, 1
    %p94 = scmp.ne.s32.totalorder %s89, %s91
    %p95 = scmp.eq.s32.totalorder %s13, 0
    %p96 = por %p94, %p95
    %p97 = scmp.ne.s32.totalorder %s89, %s91
    %p98 = scmp.eq.s32.totalorder %s18, 1
    %p99 = por %p97, %p98
    %p100 = scmp.ne.s32.totalorder %s91, %s92
    %p101 = scmp.eq.s32.totalorder %s18, 0
    %p102 = por %p100, %p101
    %p103 = scmp.ne.s32.totalorder %s91, %s92
    %p104 = scmp.eq.s32.totalorder %s19, 1
    %p105 = por %p103, %p104
    %p107 = scmp.ne.s32.totalorder %s92, %s106
    %p108 = scmp.eq.s32.totalorder %s19, 0
    %p109 = por %p107, %p108
    %s111 = sadd.s32 %s110, 1
    %p114 = scmp.eq.s32.totalorder %s13, 1
    %p115 = scmp.ne.s32.totalorder %s110, %s112
    %p116 = scmp.eq.s32.totalorder %s13, 0
    %p117 = por %p115, %p116
    %p118 = scmp.ne.s32.totalorder %s110, %s112
    %p119 = scmp.eq.s32.totalorder %s18, 1
    %p120 = por %p118, %p119
    %p121 = scmp.ne.s32.totalorder %s112, %s113
    %p122 = scmp.eq.s32.totalorder %s18, 0
    %p123 = por %p121, %p122
    %p124 = scmp.ne.s32.totalorder %s112, %s113
    %p125 = scmp.eq.s32.totalorder %s19, 1
    %p126 = por %p124, %p125
    %p128 = scmp.ne.s32.totalorder %s113, %s127
    %p129 = scmp.eq.s32.totalorder %s19, 0
    %p130 = por %p128, %p129
    %s132 = sadd.s32 %s131, 1
    %p135 = scmp.eq.s32.totalorder %s13, 1
    %p136 = scmp.ne.s32.totalorder %s131, %s133
    %p137 = scmp.eq.s32.totalorder %s13, 0
    %p138 = por %p136, %p137
    %p139 = scmp.ne.s32.totalorder %s131, %s133
    %p140 = scmp.eq.s32.totalorder %s18, 1
    %p141 = por %p139, %p140
    %p142 = scmp.ne.s32.totalorder %s133, %s134
    %p143 = scmp.eq.s32.totalorder %s18, 0
    %p144 = por %p142, %p143
    %p145 = scmp.ne.s32.totalorder %s133, %s134
    %p146 = scmp.eq.s32.totalorder %s19, 1
    %p147 = por %p145, %p146
    %p149 = scmp.ne.s32.totalorder %s134, %s148
    %p150 = scmp.eq.s32.totalorder %s19, 0
    %p151 = por %p149, %p150
    %s153 = sadd.s32 %s152, 1
    %p156 = scmp.eq.s32.totalorder %s13, 1
    %p157 = scmp.ne.s32.totalorder %s152, %s154
    %p158 = scmp.eq.s32.totalorder %s13, 0
    %p159 = por %p157, %p158
    %p160 = scmp.ne.s32.totalorder %s152, %s154
    %p161 = scmp.eq.s32.totalorder %s18, 1
    %p162 = por %p160, %p161
    %p163 = scmp.ne.s32.totalorder %s154, %s155
    %p164 = scmp.eq.s32.totalorder %s18, 0
    %p165 = por %p163, %p164
    %p166 = scmp.ne.s32.totalorder %s154, %s155
    %p167 = scmp.eq.s32.totalorder %s19, 1
    %p168 = por %p166, %p167
    %p170 = scmp.ne.s32.totalorder %s155, %s169
    %p171 = scmp.eq.s32.totalorder %s19, 0
    %p172 = por %p170, %p171
    %s173 = ssub.s32 %s13, %s20
    %p174 = scmp.eq.s32.totalorder %s173, 0
    %s176 = sadd.s32 %s175, 1
    %s177 = scalar_select %p174, %s175, %s176
    %p180 = pneg %p174
    %p181 = scmp.eq.s32.totalorder %s13, 1
    %p182 = por %p180, %p181
    %p183 = scmp.ne.s32.totalorder %s175, %s178
    %p184 = scmp.eq.s32.totalorder %s13, 0
    %p185 = por %p183, %p184
    %p186 = scmp.ne.s32.totalorder %s175, %s178
    %p187 = scmp.eq.s32.totalorder %s18, 1
    %p188 = por %p186, %p187
    %p189 = scmp.ne.s32.totalorder %s178, %s179
    %p190 = scmp.eq.s32.totalorder %s18, 0
    %p191 = por %p189, %p190
    %p192 = scmp.ne.s32.totalorder %s178, %s179
    %p193 = scmp.eq.s32.totalorder %s19, 1
    %p194 = por %p192, %p193
    %p196 = scmp.ne.s32.totalorder %s179, %s195
    %p197 = scmp.eq.s32.totalorder %s19, 0
    %p198 = por %p196, %p197
    %p199 = scmp.le.s32.totalorder 1, %s13
    %p200 = scmp.lt.s32.totalorder %s13, 3
    %p201 = pnand %p199, %p200
    %p202 = pneg %p201
    // Predicated region
    $region9: #{nin_block_forward.1} parent=5 // pred_check
      _
    $region10: #{nin_block_forward.1} parent=5 // pred_check_branch
      %204 = sbr.rel (%p201) target = $region12
    $region11: #{nin_block_forward.1} parent=5 // pred_region
      %s205 = ssub.s32 %s13, 1
      // Predicated region
      $region13: #{nin_block_forward.1} parent=11 // pred_check
        %p206 = pneg %p60
      $region14: #{nin_block_forward.1} parent=11 // pred_check_branch
        %208 = sbr.rel (%p206) target = $region16
      $region15: #{nin_block_forward.1} parent=11 // pred_region
        _
      $region16: #{nin_block_forward.1} parent=11 // pred_fallthru
        _
      // Predicated region
      $region17: #{nin_block_forward.1} parent=11 // pred_check
        %p209 = pneg %p81
      $region18: #{nin_block_forward.1} parent=11 // pred_check_branch
        %211 = sbr.rel (%p209) target = $region20
      $region19: #{nin_block_forward.1} parent=11 // pred_region
        _
      $region20: #{nin_block_forward.1} parent=11 // pred_fallthru
        _
      // Predicated region
      $region21: #{nin_block_forward.1} parent=11 // pred_check
        %p212 = pneg %p102
      $region22: #{nin_block_forward.1} parent=11 // pred_check_branch
        %214 = sbr.rel (%p212) target = $region24
      $region23: #{nin_block_forward.1} parent=11 // pred_region
        _
      $region24: #{nin_block_forward.1} parent=11 // pred_fallthru
        _
      // Predicated region
      $region25: #{nin_block_forward.1} parent=11 // pred_check
        %p215 = pneg %p123
      $region26: #{nin_block_forward.1} parent=11 // pred_check_branch
        %217 = sbr.rel (%p215) target = $region28
      $region27: #{nin_block_forward.1} parent=11 // pred_region
        _
      $region28: #{nin_block_forward.1} parent=11 // pred_fallthru
        _
      // Predicated region
      $region29: #{nin_block_forward.1} parent=11 // pred_check
        %p218 = pneg %p144
      $region30: #{nin_block_forward.1} parent=11 // pred_check_branch
        %220 = sbr.rel (%p218) target = $region32
      $region31: #{nin_block_forward.1} parent=11 // pred_region
        _
      $region32: #{nin_block_forward.1} parent=11 // pred_fallthru
        _
      // Predicated region
      $region33: #{nin_block_forward.1} parent=11 // pred_check
        %p221 = pneg %p165
      $region34: #{nin_block_forward.1} parent=11 // pred_check_branch
        %223 = sbr.rel (%p221) target = $region36
      $region35: #{nin_block_forward.1} parent=11 // pred_region
        _
      $region36: #{nin_block_forward.1} parent=11 // pred_fallthru
        _
    $region12: #{nin_block_forward.1} parent=5 // pred_fallthru
      _
    %p224 = scmp.lt.s32.totalorder %s13, 2
    // Predicated region
    $region37: #{nin_block_forward.1} parent=5 // pred_check
      %p225 = pneg %p224
    $region38: #{nin_block_forward.1} parent=5 // pred_check_branch
      %227 = sbr.rel (%p225) target = $region40
    $region39: #{nin_block_forward.1} parent=5 // pred_region
      // Predicated region
      $region41: #{nin_block_forward.1} parent=39 // pred_check
        %p228 = pneg %p33
      $region42: #{nin_block_forward.1} parent=39 // pred_check_branch
        %230 = sbr.rel (%p228) target = $region44
      $region43: #{nin_block_forward.1} parent=39 // pred_region
        %p231 = scmp.lt.s32.totalorder %s13, 1
        %s232 = scalar_select %p231, %s13, 1
        %s233 = smul.addr %s232, 54
        %s234 = smul.addr %s233, 4
        %s235 = scalar_lea.vmem %s0, %s234
      $region44: #{nin_block_forward.1} parent=39 // pred_fallthru
        _
    $region40: #{nin_block_forward.1} parent=5 // pred_fallthru
      _
    %p236 = scmp.le.s32.totalorder 1, %s13
    %p237 = scmp.lt.s32.totalorder %s13, 3
    %p238 = pnand %p236, %p237
    %p239 = pneg %p238
    // Predicated region
    $region45: #{nin_block_forward.1} parent=5 // pred_check
      _
    $region46: #{nin_block_forward.1} parent=5 // pred_check_branch
      %241 = sbr.rel (%p238) target = $region48
    $region47: #{nin_block_forward.1} parent=5 // pred_region
      %s242 = ssub.s32 %s13, 1
      %p243 = scmp.lt.s32.totalorder %s18, 1
      %s244 = scalar_select %p243, %s18, 1
      %s245 = smul.addr %s244, 54
      %s246 = smul.addr %s245, 4
      %s247 = scalar_lea.vmem %s0, %s246
      %p248 = pneg %p39
      %p249 = pneg %p36
      %p250 = pneg %p60
      %p251 = pneg %p57
      %p252 = pneg %p81
      %p253 = pneg %p78
      %p254 = pneg %p102
      %p255 = pneg %p99
      %p256 = pneg %p123
      %p257 = pneg %p120
      %p258 = pneg %p144
      %p259 = pneg %p141
      %p260 = pneg %p165
      %p261 = pneg %p162
      %p262 = pneg %p191
      %p263 = pneg %p188
      %p264 = scmp.lt.s32.totalorder %s18, 1
      %s265 = scalar_select %p264, %s18, 1
      %s266 = smul.addr %s265, 32
      %s267 = smul.addr %s266, 8
      %s268 = scalar_lea.vmem %s7, %s267
      %p269 = scmp.lt.s32.totalorder %s18, 1
      %s270 = scalar_select %p269, %s18, 1
      %s271 = smul.addr %s270, 54
      %s272 = smul.addr %s271, 4
      %s273 = scalar_lea.vmem %s0, %s272
      %p274 = scmp.lt.s32.totalorder %s18, 1
      %s275 = scalar_select %p274, %s18, 1
      %s276 = smul.addr %s275, 32
      %s277 = smul.addr %s276, 8
      %s278 = scalar_lea.vmem %s7, %s277
      %v280 = vld [vmem:[%s273] sm:$0xf]
      %v281 = vld [vmem:[%s273 + $0x4] sm:$0xf]
      %v282 = vld [vmem:[%s273 + $0xc] sm:$0xf]
      %v283 = vld [vmem:[%s273 + $0x10] sm:$0xf]
      %v284 = vld [vmem:[%s273 + $0x18] sm:$0xf]
      %v285 = vld [vmem:[%s273 + $0x1c] sm:$0xf]
      %v286 = vld [vmem:[%s273 + $0x24] sm:$0xf]
      %v287 = vld [vmem:[%s273 + $0x28] sm:$0xf]
      %v288 = vld [vmem:[%s273 + $0x30] sm:$0xf]
      %v289 = vld [vmem:[%s273 + $0x34] sm:$0xf]
      %v290 = vld [vmem:[%s273 + $0x3c] sm:$0xf]
      %v291 = vld [vmem:[%s273 + $0x40] sm:$0xf]
      %v292 = vld [vmem:[%s273 + $0x48] sm:$0xf]
      %v293 = vld [vmem:[%s273 + $0x4c] sm:$0xf]
      %v294 = vld [vmem:[%s273 + $0x54] sm:$0xf]
      %v295 = vld [vmem:[%s273 + $0x58] sm:$0xf]
      %v296 = vld [vmem:[%s273 + $0x60] sm:$0xf]
      %v297 = vld [vmem:[%s273 + $0x64] sm:$0xf]
      %v298 = vld [vmem:[%s273 + $0x6c] sm:$0xf]
      %v299 = vld [vmem:[%s273 + $0x70] sm:$0xf]
      %v300 = vld [vmem:[%s273 + $0x78] sm:$0xf]
      %v301 = vld [vmem:[%s273 + $0x7c] sm:$0xf]
      %v302 = vld [vmem:[%s273 + $0x84] sm:$0xf]
      %v303 = vld [vmem:[%s273 + $0x88] sm:$0xf]
      %v304 = vld [vmem:[%s273 + $0x90] sm:$0xf]
      %v305 = vld [vmem:[%s273 + $0x94] sm:$0xf]
      %v306 = vld [vmem:[%s273 + $0x9c] sm:$0xf]
      %v307 = vld [vmem:[%s273 + $0xa0] sm:$0xf]
      %v308 = vld [vmem:[%s273 + $0xa8] sm:$0xf]
      %v309 = vld [vmem:[%s273 + $0xac] sm:$0xf]
      %v310 = vld [vmem:[%s273 + $0xb4] sm:$0xf]
      %v311 = vld [vmem:[%s273 + $0xb8] sm:$0xf]
      %v312 = vld [vmem:[%s1] sm:$0x3]
      %v313 = vld [vmem:[%s273 + $0x8] sm:$0x1]
      %v314 = vld [vmem:[%s273 + $0x14] sm:$0x1]
      %v315 = vld [vmem:[%s273 + $0x20] sm:$0x1]
      %v316 = vld [vmem:[%s273 + $0x2c] sm:$0x1]
      %v317 = vld [vmem:[%s273 + $0x38] sm:$0x1]
      %v318 = vld [vmem:[%s273 + $0x44] sm:$0x1]
      %v319 = vld [vmem:[%s273 + $0x50] sm:$0x1]
      %v320 = vld [vmem:[%s273 + $0x5c] sm:$0x1]
      %v321 = vld [vmem:[%s273 + $0x68] sm:$0x1]
      %v322 = vld [vmem:[%s273 + $0x74] sm:$0x1]
      %v323 = vld [vmem:[%s273 + $0x80] sm:$0x1]
      %v324 = vld [vmem:[%s273 + $0x8c] sm:$0x1]
      %v325 = vld [vmem:[%s273 + $0x98] sm:$0x1]
      %v326 = vld [vmem:[%s273 + $0xa4] sm:$0x1]
      %v327 = vld [vmem:[%s273 + $0xb0] sm:$0x1]
      %v328 = vld [vmem:[%s273 + $0xbc] sm:$0x1]
      %vm329 = vsmask.f32 3328
      %vm330 = vsmask.f32 7440
      %vm331 = vmor %vm329, %vm330
      %v333 = vshrl.u32 %v280, 16
      %v335 = vrot.slane %v333, 4
      %v336 = vshll.u32 %v280, 16
      %v338 = vrot.slane %v336, 5
      %v339 = vor.u32 %v335, %v338
      %v340 = vrot.slane %v339, 4
      %v342 = vshll.u32 %v281, 16
      %v344 = vrot.slane %v342, 5
      %v345 = vsel %vm331, %v340, %v344
      %v346 = vshrl.u32 %v281, 16
      %v348 = vrot.slane %v346, 4
      %v349 = vor.u32 %v348, %v344
      %v350 = vrot.slane %v349, 4
      %v352 = vshll.u32 %v313, 16
      %v354 = vrot.slane %v352, 5
      %v355 = vsel %vm331, %v350, %v354
      %v357 = vshrl.u32 %v282, 16
      %v359 = vrot.slane %v357, 4
      %v360 = vshll.u32 %v282, 16
      %v362 = vrot.slane %v360, 5
      %v363 = vor.u32 %v359, %v362
      %v364 = vrot.slane %v363, 4
      %v366 = vshll.u32 %v283, 16
      %v368 = vrot.slane %v366, 5
      %v369 = vsel %vm331, %v364, %v368
      %v370 = vshrl.u32 %v283, 16
      %v372 = vrot.slane %v370, 4
      %v373 = vor.u32 %v372, %v368
      %v374 = vrot.slane %v373, 4
      %v376 = vshll.u32 %v314, 16
      %v378 = vrot.slane %v376, 5
      %v379 = vsel %vm331, %v374, %v378
      %v381 = vshrl.u32 %v284, 16
      %v383 = vrot.slane %v381, 4
      %v384 = vshll.u32 %v284, 16
      %v386 = vrot.slane %v384, 5
      %v387 = vor.u32 %v383, %v386
      %v388 = vrot.slane %v387, 4
      %v390 = vshll.u32 %v285, 16
      %v392 = vrot.slane %v390, 5
      %v393 = vsel %vm331, %v388, %v392
      %v394 = vshrl.u32 %v285, 16
      %v396 = vrot.slane %v394, 4
      %v397 = vor.u32 %v396, %v392
      %v398 = vrot.slane %v397, 4
      %v400 = vshll.u32 %v315, 16
      %v402 = vrot.slane %v400, 5
      %v403 = vsel %vm331, %v398, %v402
      %v405 = vshrl.u32 %v286, 16
      %v407 = vrot.slane %v405, 4
      %v408 = vshll.u32 %v286, 16
      %v410 = vrot.slane %v408, 5
      %v411 = vor.u32 %v407, %v410
      %v412 = vrot.slane %v411, 4
      %v414 = vshll.u32 %v287, 16
      %v416 = vrot.slane %v414, 5
      %v417 = vsel %vm331, %v412, %v416
      %v418 = vshrl.u32 %v287, 16
      %v420 = vrot.slane %v418, 4
      %v421 = vor.u32 %v420, %v416
      %v422 = vrot.slane %v421, 4
      %v424 = vshll.u32 %v316, 16
      %v426 = vrot.slane %v424, 5
      %v427 = vsel %vm331, %v422, %v426
      %v429 = vshrl.u32 %v288, 16
      %v431 = vrot.slane %v429, 4
      %v432 = vshll.u32 %v288, 16
      %v434 = vrot.slane %v432, 5
      %v435 = vor.u32 %v431, %v434
      %v436 = vrot.slane %v435, 4
      %v438 = vshll.u32 %v289, 16
      %v440 = vrot.slane %v438, 5
      %v441 = vsel %vm331, %v436, %v440
      %v442 = vshrl.u32 %v289, 16
      %v444 = vrot.slane %v442, 4
      %v445 = vor.u32 %v444, %v440
      %v446 = vrot.slane %v445, 4
      %v448 = vshll.u32 %v317, 16
      %v450 = vrot.slane %v448, 5
      %v451 = vsel %vm331, %v446, %v450
      %v453 = vshrl.u32 %v290, 16
      %v455 = vrot.slane %v453, 4
      %v456 = vshll.u32 %v290, 16
      %v458 = vrot.slane %v456, 5
      %v459 = vor.u32 %v455, %v458
      %v460 = vrot.slane %v459, 4
      %v462 = vshll.u32 %v291, 16
      %v464 = vrot.slane %v462, 5
      %v465 = vsel %vm331, %v460, %v464
      %v466 = vshrl.u32 %v291, 16
      %v468 = vrot.slane %v466, 4
      %v469 = vor.u32 %v468, %v464
      %v470 = vrot.slane %v469, 4
      %v472 = vshll.u32 %v318, 16
      %v474 = vrot.slane %v472, 5
      %v475 = vsel %vm331, %v470, %v474
      %v477 = vshrl.u32 %v292, 16
      %v479 = vrot.slane %v477, 4
      %v480 = vshll.u32 %v292, 16
      %v482 = vrot.slane %v480, 5
      %v483 = vor.u32 %v479, %v482
      %v484 = vrot.slane %v483, 4
      %v486 = vshll.u32 %v293, 16
      %v488 = vrot.slane %v486, 5
      %v489 = vsel %vm331, %v484, %v488
      %v490 = vshrl.u32 %v293, 16
      %v492 = vrot.slane %v490, 4
      %v493 = vor.u32 %v492, %v488
      %v494 = vrot.slane %v493, 4
      %v496 = vshll.u32 %v319, 16
      %v498 = vrot.slane %v496, 5
      %v499 = vsel %vm331, %v494, %v498
      %v501 = vshrl.u32 %v294, 16
      %v503 = vrot.slane %v501, 4
      %v504 = vshll.u32 %v294, 16
      %v506 = vrot.slane %v504, 5
      %v507 = vor.u32 %v503, %v506
      %v508 = vrot.slane %v507, 4
      %v510 = vshll.u32 %v295, 16
      %v512 = vrot.slane %v510, 5
      %v513 = vsel %vm331, %v508, %v512
      %v514 = vshrl.u32 %v295, 16
      %v516 = vrot.slane %v514, 4
      %v517 = vor.u32 %v516, %v512
      %v518 = vrot.slane %v517, 4
      %v520 = vshll.u32 %v320, 16
      %v522 = vrot.slane %v520, 5
      %v523 = vsel %vm331, %v518, %v522
      %v525 = vshrl.u32 %v296, 16
      %v527 = vrot.slane %v525, 4
      %v528 = vshll.u32 %v296, 16
      %v530 = vrot.slane %v528, 5
      %v531 = vor.u32 %v527, %v530
      %v532 = vrot.slane %v531, 4
      %v534 = vshll.u32 %v297, 16
      %v536 = vrot.slane %v534, 5
      %v537 = vsel %vm331, %v532, %v536
      %v538 = vshrl.u32 %v297, 16
      %v540 = vrot.slane %v538, 4
      %v541 = vor.u32 %v540, %v536
      %v542 = vrot.slane %v541, 4
      %v544 = vshll.u32 %v321, 16
      %v546 = vrot.slane %v544, 5
      %v547 = vsel %vm331, %v542, %v546
      %v549 = vshrl.u32 %v298, 16
      %v551 = vrot.slane %v549, 4
      %v552 = vshll.u32 %v298, 16
      %v554 = vrot.slane %v552, 5
      %v555 = vor.u32 %v551, %v554
      %v556 = vrot.slane %v555, 4
      %v558 = vshll.u32 %v299, 16
      %v560 = vrot.slane %v558, 5
      %v561 = vsel %vm331, %v556, %v560
      %v562 = vshrl.u32 %v299, 16
      %v564 = vrot.slane %v562, 4
      %v565 = vor.u32 %v564, %v560
      %v566 = vrot.slane %v565, 4
      %v568 = vshll.u32 %v322, 16
      %v570 = vrot.slane %v568, 5
      %v571 = vsel %vm331, %v566, %v570
      %v573 = vshrl.u32 %v300, 16
      %v575 = vrot.slane %v573, 4
      %v576 = vshll.u32 %v300, 16
      %v578 = vrot.slane %v576, 5
      %v579 = vor.u32 %v575, %v578
      %v580 = vrot.slane %v579, 4
      %v582 = vshll.u32 %v301, 16
      %v584 = vrot.slane %v582, 5
      %v585 = vsel %vm331, %v580, %v584
      %v586 = vshrl.u32 %v301, 16
      %v588 = vrot.slane %v586, 4
      %v589 = vor.u32 %v588, %v584
      %v590 = vrot.slane %v589, 4
      %v592 = vshll.u32 %v323, 16
      %v594 = vrot.slane %v592, 5
      %v595 = vsel %vm331, %v590, %v594
      %v597 = vshrl.u32 %v302, 16
      %v599 = vrot.slane %v597, 4
      %v600 = vshll.u32 %v302, 16
      %v602 = vrot.slane %v600, 5
      %v603 = vor.u32 %v599, %v602
      %v604 = vrot.slane %v603, 4
      %v606 = vshll.u32 %v303, 16
      %v608 = vrot.slane %v606, 5
      %v609 = vsel %vm331, %v604, %v608
      %v610 = vshrl.u32 %v303, 16
      %v612 = vrot.slane %v610, 4
      %v613 = vor.u32 %v612, %v608
      %v614 = vrot.slane %v613, 4
      %v616 = vshll.u32 %v324, 16
      %v618 = vrot.slane %v616, 5
      %v619 = vsel %vm331, %v614, %v618
      %v621 = vshrl.u32 %v304, 16
      %v623 = vrot.slane %v621, 4
      %v624 = vshll.u32 %v304, 16
      %v626 = vrot.slane %v624, 5
      %v627 = vor.u32 %v623, %v626
      %v628 = vrot.slane %v627, 4
      %v630 = vshll.u32 %v305, 16
      %v632 = vrot.slane %v630, 5
      %v633 = vsel %vm331, %v628, %v632
      %v634 = vshrl.u32 %v305, 16
      %v636 = vrot.slane %v634, 4
      %v637 = vor.u32 %v636, %v632
      %v638 = vrot.slane %v637, 4
      %v640 = vshll.u32 %v325, 16
      %v642 = vrot.slane %v640, 5
      %v643 = vsel %vm331, %v638, %v642
      %v645 = vshrl.u32 %v306, 16
      %v647 = vrot.slane %v645, 4
      %v648 = vshll.u32 %v306, 16
      %v650 = vrot.slane %v648, 5
      %v651 = vor.u32 %v647, %v650
      %v652 = vrot.slane %v651, 4
      %v654 = vshll.u32 %v307, 16
      %v656 = vrot.slane %v654, 5
      %v657 = vsel %vm331, %v652, %v656
      %v658 = vshrl.u32 %v307, 16
      %v660 = vrot.slane %v658, 4
      %v661 = vor.u32 %v660, %v656
      %v662 = vrot.slane %v661, 4
      %v664 = vshll.u32 %v326, 16
      %v666 = vrot.slane %v664, 5
      %v667 = vsel %vm331, %v662, %v666
      %v669 = vshrl.u32 %v308, 16
      %v671 = vrot.slane %v669, 4
      %v672 = vshll.u32 %v308, 16
      %v674 = vrot.slane %v672, 5
      %v675 = vor.u32 %v671, %v674
      %v676 = vrot.slane %v675, 4
      %v678 = vshll.u32 %v309, 16
      %v680 = vrot.slane %v678, 5
      %v681 = vsel %vm331, %v676, %v680
      %v682 = vshrl.u32 %v309, 16
      %v684 = vrot.slane %v682, 4
      %v685 = vor.u32 %v684, %v680
      %v686 = vrot.slane %v685, 4
      %v688 = vshll.u32 %v327, 16
      %v690 = vrot.slane %v688, 5
      %v691 = vsel %vm331, %v686, %v690
      %v693 = vshrl.u32 %v310, 16
      %v695 = vrot.slane %v693, 4
      %v696 = vshll.u32 %v310, 16
      %v698 = vrot.slane %v696, 5
      %v699 = vor.u32 %v695, %v698
      %v700 = vrot.slane %v699, 4
      %v702 = vshll.u32 %v311, 16
      %v704 = vrot.slane %v702, 5
      %v705 = vsel %vm331, %v700, %v704
      %v706 = vshrl.u32 %v311, 16
      %v708 = vrot.slane %v706, 4
      %v709 = vor.u32 %v708, %v704
      %v710 = vrot.slane %v709, 4
      %v712 = vshll.u32 %v328, 16
      %v714 = vrot.slane %v712, 5
      %v715 = vsel %vm331, %v710, %v714
      %s716 = scalar_lea.vmem %s1, 2
      %v717 = vld [vmem:[%s716] sm:$0x3]
      %v718 = vunpack.c.l.b16 %v345
      %v719 = vunpack.c.l.b16 %v355
      %v720 = vunpack.c.l.b16 %v369
      %v721 = vunpack.c.l.b16 %v379
      %v722 = vunpack.c.l.b16 %v393
      %v723 = vunpack.c.l.b16 %v403
      %v724 = vunpack.c.l.b16 %v417
      %v725 = vunpack.c.l.b16 %v427
      %v726 = vunpack.c.l.b16 %v441
      %v727 = vunpack.c.l.b16 %v451
      %v728 = vunpack.c.l.b16 %v465
      %v729 = vunpack.c.l.b16 %v475
      %v730 = vunpack.c.l.b16 %v489
      %v731 = vunpack.c.l.b16 %v499
      %v732 = vunpack.c.l.b16 %v513
      %v733 = vunpack.c.l.b16 %v523
      %v734 = vunpack.c.l.b16 %v537
      %v735 = vunpack.c.l.b16 %v547
      %v736 = vunpack.c.l.b16 %v561
      %v737 = vunpack.c.l.b16 %v571
      %v738 = vunpack.c.l.b16 %v585
      %v739 = vunpack.c.l.b16 %v595
      %v740 = vunpack.c.l.b16 %v609
      %v741 = vunpack.c.l.b16 %v619
      %v742 = vunpack.c.l.b16 %v633
      %v743 = vunpack.c.l.b16 %v643
      %v744 = vunpack.c.l.b16 %v657
      %v745 = vunpack.c.l.b16 %v667
      %v746 = vunpack.c.l.b16 %v681
      %v747 = vunpack.c.l.b16 %v691
      %v748 = vunpack.c.l.b16 %v705
      %v749 = vunpack.c.l.b16 %v715
      %v750 = vpack.c.b16 %v719, %v718
      %v751 = vpack.c.b16 %v721, %v720
      %v752 = vpack.c.b16 %v723, %v722
      %v753 = vpack.c.b16 %v725, %v724
      %v754 = vpack.c.b16 %v727, %v726
      %v755 = vpack.c.b16 %v729, %v728
      %v756 = vpack.c.b16 %v731, %v730
      %v757 = vpack.c.b16 %v733, %v732
      %v758 = vpack.c.b16 %v735, %v734
      %v759 = vpack.c.b16 %v737, %v736
      %v760 = vpack.c.b16 %v739, %v738
      %v761 = vpack.c.b16 %v741, %v740
      %v762 = vpack.c.b16 %v743, %v742
      %v763 = vpack.c.b16 %v745, %v744
      %v764 = vpack.c.b16 %v747, %v746
      %v765 = vpack.c.b16 %v749, %v748
      %vm766 = vcmask 31744
      %v768 = vsel %vm766, %v750, 0
      %v771 = vsel %vm766, %v751, 0
      %v774 = vsel %vm766, %v752, 0
      %v777 = vsel %vm766, %v753, 0
      %v780 = vsel %vm766, %v754, 0
      %v783 = vsel %vm766, %v755, 0
      %v786 = vsel %vm766, %v756, 0
      %v789 = vsel %vm766, %v757, 0
      %v792 = vsel %vm766, %v758, 0
      %v795 = vsel %vm766, %v759, 0
      %v798 = vsel %vm766, %v760, 0
      %v801 = vsel %vm766, %v761, 0
      %v804 = vsel %vm766, %v762, 0
      %v807 = vsel %vm766, %v763, 0
      %v810 = vsel %vm766, %v764, 0
      %v813 = vsel %vm766, %v765, 0
      %vm815 = vcmask 1041408
      %v817 = vsel %vm815, %v717, 0
      %819 = vmatprep.subr.bf16.mxu0 0
      %820 = vmatpush1.bf16.msra.mxu0 %v817
      %821 = vmatprep.subr.bf16.mxu0 0
      %822 = vmatpush1.bf16.msra.mxu0 0
      %823 = vmatprep.subr.bf16.mxu0 0
      %824 = vmatpush1.bf16.msra.mxu0 0
      %825 = vmatprep.subr.bf16.mxu0 0
      %826 = vmatpush1.bf16.msra.mxu0 0
      %827 = vmatprep.subr.bf16.mxu0 0
      %828 = vmatpush1.bf16.msra.mxu0 0
      %829 = vmatprep.subr.bf16.mxu0 0
      %830 = vmatpush1.bf16.msra.mxu0 0
      %831 = vmatprep.subr.bf16.mxu0 0
      %832 = vmatpush1.bf16.msra.mxu0 0
      %833 = vmatprep.subr.bf16.mxu0 0
      %834 = vmatpush1.bf16.msra.mxu0 0
      %835 = vmatprep.subr.bf16.mxu0 0
      %836 = vmatpush1.bf16.msra.mxu0 0
      %837 = vmatprep.subr.bf16.mxu0 0
      %838 = vmatpush1.bf16.msra.mxu0 0
      %839 = vmatprep.subr.bf16.mxu0 0
      %840 = vmatpush1.bf16.msra.mxu0 0
      %841 = vmatprep.subr.bf16.mxu0 0
      %842 = vmatpush1.bf16.msra.mxu0 0
      %843 = vmatprep.subr.bf16.mxu0 0
      %844 = vmatpush1.bf16.msra.mxu0 0
      %845 = vmatprep.subr.bf16.mxu0 0
      %846 = vmatpush1.bf16.msra.mxu0 0
      %847 = vmatprep.subr.bf16.mxu0 0
      %848 = vmatpush1.bf16.msra.mxu0 0
      %849 = vmatprep.subr.bf16.mxu0 0
      %850 = vmatpush1.bf16.msra.mxu0 0
      %851 = vmatprep.mubr.bf16.mxu0 0
      %852 = vmatmul.mubr.bf16.gmra.mrb[0].mxu0 %v768
      %v853 = vpop.f32.mrb[0].mxu0
      %v854 = vadd.f32 0.0, %v853
      %v855 = vpop.f32.mrb[0].mxu0
      %v856 = vpop.f32.mrb[0].mxu0
      %v857 = vadd.f32 0.0, %v856
      %v858 = vpop.f32.mrb[0].mxu0
      %859 = vmatprep.mubr.bf16.mxu0 0
      %860 = vmatmul.mubr.bf16.gmra.mrb[0].mxu0 %v771
      %v861 = vpop.f32.mrb[0].mxu0
      %v862 = vadd.f32 0.0, %v861
      %v863 = vpop.f32.mrb[0].mxu0
      %v864 = vpop.f32.mrb[0].mxu0
      %v865 = vadd.f32 0.0, %v864
      %v866 = vpop.f32.mrb[0].mxu0
      %867 = vmatprep.mubr.bf16.mxu0 0
      %868 = vmatmul.mubr.bf16.gmra.mrb[0].mxu0 %v774
      %v869 = vpop.f32.mrb[0].mxu0
      %v870 = vadd.f32 0.0, %v869
      %v871 = vpop.f32.mrb[0].mxu0
      %v872 = vpop.f32.mrb[0].mxu0
      %v873 = vadd.f32 0.0, %v872
      %v874 = vpop.f32.mrb[0].mxu0
      %875 = vmatprep.mubr.bf16.mxu0 0
      %876 = vmatmul.mubr.bf16.gmra.mrb[0].mxu0 %v777
      %v877 = vpop.f32.mrb[0].mxu0
      %v878 = vadd.f32 0.0, %v877
      %v879 = vpop.f32.mrb[0].mxu0
      %v880 = vpop.f32.mrb[0].mxu0
      %v881 = vadd.f32 0.0, %v880
      %v882 = vpop.f32.mrb[0].mxu0
      %883 = vmatprep.mubr.bf16.mxu0 0
      %884 = vmatmul.mubr.bf16.gmra.mrb[0].mxu0 %v780
      %v885 = vpop.f32.mrb[0].mxu0
      %v886 = vadd.f32 0.0, %v885
      %v887 = vpop.f32.mrb[0].mxu0
      %v888 = vpop.f32.mrb[0].mxu0
      %v889 = vadd.f32 0.0, %v888
      %v890 = vpop.f32.mrb[0].mxu0
      %891 = vmatprep.mubr.bf16.mxu0 0
      %892 = vmatmul.mubr.bf16.gmra.mrb[0].mxu0 %v783
      %v893 = vpop.f32.mrb[0].mxu0
      %v894 = vadd.f32 0.0, %v893
      %v895 = vpop.f32.mrb[0].mxu0
      %v896 = vpop.f32.mrb[0].mxu0
      %v897 = vadd.f32 0.0, %v896
      %v898 = vpop.f32.mrb[0].mxu0
      %899 = vmatprep.mubr.bf16.mxu0 0
      %900 = vmatmul.mubr.bf16.gmra.mrb[0].mxu0 %v786
      %v901 = vpop.f32.mrb[0].mxu0
      %v902 = vadd.f32 0.0, %v901
      %v903 = vpop.f32.mrb[0].mxu0
      %v904 = vpop.f32.mrb[0].mxu0
      %v905 = vadd.f32 0.0, %v904
      %v906 = vpop.f32.mrb[0].mxu0
      %907 = vmatprep.mubr.bf16.mxu0 0
      %908 = vmatmul.mubr.bf16.gmra.mrb[0].mxu0 %v789
      %v909 = vpop.f32.mrb[0].mxu0
      %v910 = vadd.f32 0.0, %v909
      %v911 = vpop.f32.mrb[0].mxu0
      %v912 = vpop.f32.mrb[0].mxu0
      %v913 = vadd.f32 0.0, %v912
      %v914 = vpop.f32.mrb[0].mxu0
      %915 = vmatprep.mubr.bf16.mxu0 0
      %916 = vmatmul.mubr.bf16.gmra.mrb[0].mxu0 %v792
      %v917 = vpop.f32.mrb[0].mxu0
      %v918 = vadd.f32 0.0, %v917
      %v919 = vpop.f32.mrb[0].mxu0
      %v920 = vpop.f32.mrb[0].mxu0
      %v921 = vadd.f32 0.0, %v920
      %v922 = vpop.f32.mrb[0].mxu0
      %923 = vmatprep.mubr.bf16.mxu0 0
      %924 = vmatmul.mubr.bf16.gmra.mrb[0].mxu0 %v795
      %v925 = vpop.f32.mrb[0].mxu0
      %v926 = vadd.f32 0.0, %v925
      %v927 = vpop.f32.mrb[0].mxu0
      %v928 = vpop.f32.mrb[0].mxu0
      %v929 = vadd.f32 0.0, %v928
      %v930 = vpop.f32.mrb[0].mxu0
      %931 = vmatprep.mubr.bf16.mxu0 0
      %932 = vmatmul.mubr.bf16.gmra.mrb[0].mxu0 %v798
      %v933 = vpop.f32.mrb[0].mxu0
      %v934 = vadd.f32 0.0, %v933
      %v935 = vpop.f32.mrb[0].mxu0
      %v936 = vpop.f32.mrb[0].mxu0
      %v937 = vadd.f32 0.0, %v936
      %v938 = vpop.f32.mrb[0].mxu0
      %939 = vmatprep.mubr.bf16.mxu0 0
      %940 = vmatmul.mubr.bf16.gmra.mrb[0].mxu0 %v801
      %v941 = vpop.f32.mrb[0].mxu0
      %v942 = vadd.f32 0.0, %v941
      %v943 = vpop.f32.mrb[0].mxu0
      %v944 = vpop.f32.mrb[0].mxu0
      %v945 = vadd.f32 0.0, %v944
      %v946 = vpop.f32.mrb[0].mxu0
      %947 = vmatprep.mubr.bf16.mxu0 0
      %948 = vmatmul.mubr.bf16.gmra.mrb[0].mxu0 %v804
      %v949 = vpop.f32.mrb[0].mxu0
      %v950 = vadd.f32 0.0, %v949
      %v951 = vpop.f32.mrb[0].mxu0
      %v952 = vpop.f32.mrb[0].mxu0
      %v953 = vadd.f32 0.0, %v952
      %v954 = vpop.f32.mrb[0].mxu0
      %955 = vmatprep.mubr.bf16.mxu0 0
      %956 = vmatmul.mubr.bf16.gmra.mrb[0].mxu0 %v807
      %v957 = vpop.f32.mrb[0].mxu0
      %v958 = vadd.f32 0.0, %v957
      %v959 = vpop.f32.mrb[0].mxu0
      %v960 = vpop.f32.mrb[0].mxu0
      %v961 = vadd.f32 0.0, %v960
      %v962 = vpop.f32.mrb[0].mxu0
      %963 = vmatprep.mubr.bf16.mxu0 0
      %964 = vmatmul.mubr.bf16.gmra.mrb[0].mxu0 %v810
      %v965 = vpop.f32.mrb[0].mxu0
      %v966 = vadd.f32 0.0, %v965
      %v967 = vpop.f32.mrb[0].mxu0
      %v968 = vpop.f32.mrb[0].mxu0
      %v969 = vadd.f32 0.0, %v968
      %v970 = vpop.f32.mrb[0].mxu0
      %971 = vmatprep.mubr.bf16.mxu0 0
      %972 = vmatmul.mubr.bf16.gmra.mrb[0].mxu0 %v813
      %v973 = vpop.f32.mrb[0].mxu0
      %v974 = vadd.f32 0.0, %v973
      %v975 = vpop.f32.mrb[0].mxu0
      %v976 = vpop.f32.mrb[0].mxu0
      %v977 = vadd.f32 0.0, %v976
      %v978 = vpop.f32.mrb[0].mxu0
      %979 = vdwg.mxu0
      %v1012 = vunpack.c.l.b16 %v280
      %v1013 = vunpack.c.l.b16 %v281
      %v1014 = vunpack.c.l.b16 %v282
      %v1015 = vunpack.c.l.b16 %v283
      %v1016 = vunpack.c.l.b16 %v284
      %v1017 = vunpack.c.l.b16 %v285
      %v1018 = vunpack.c.l.b16 %v286
      %v1019 = vunpack.c.l.b16 %v287
      %v1020 = vunpack.c.l.b16 %v288
      %v1021 = vunpack.c.l.b16 %v289
      %v1022 = vunpack.c.l.b16 %v290
      %v1023 = vunpack.c.l.b16 %v291
      %v1024 = vunpack.c.l.b16 %v292
      %v1025 = vunpack.c.l.b16 %v293
      %v1026 = vunpack.c.l.b16 %v294
      %v1027 = vunpack.c.l.b16 %v295
      %v1028 = vunpack.c.l.b16 %v296
      %v1029 = vunpack.c.l.b16 %v297
      %v1030 = vunpack.c.l.b16 %v298
      %v1031 = vunpack.c.l.b16 %v299
      %v1032 = vunpack.c.l.b16 %v300
      %v1033 = vunpack.c.l.b16 %v301
      %v1034 = vunpack.c.l.b16 %v302
      %v1035 = vunpack.c.l.b16 %v303
      %v1036 = vunpack.c.l.b16 %v304
      %v1037 = vunpack.c.l.b16 %v305
      %v1038 = vunpack.c.l.b16 %v306
      %v1039 = vunpack.c.l.b16 %v307
      %v1040 = vunpack.c.l.b16 %v308
      %v1041 = vunpack.c.l.b16 %v309
      %v1042 = vunpack.c.l.b16 %v310
      %v1043 = vunpack.c.l.b16 %v311
      %v1044 = vpack.c.b16 %v1013, %v1012
      %v1045 = vpack.c.b16 %v1015, %v1014
      %v1046 = vpack.c.b16 %v1017, %v1016
      %v1047 = vpack.c.b16 %v1019, %v1018
      %v1048 = vpack.c.b16 %v1021, %v1020
      %v1049 = vpack.c.b16 %v1023, %v1022
      %v1050 = vpack.c.b16 %v1025, %v1024
      %v1051 = vpack.c.b16 %v1027, %v1026
      %v1052 = vpack.c.b16 %v1029, %v1028
      %v1053 = vpack.c.b16 %v1031, %v1030
      %v1054 = vpack.c.b16 %v1033, %v1032
      %v1055 = vpack.c.b16 %v1035, %v1034
      %v1056 = vpack.c.b16 %v1037, %v1036
      %v1057 = vpack.c.b16 %v1039, %v1038
      %v1058 = vpack.c.b16 %v1041, %v1040
      %v1059 = vpack.c.b16 %v1043, %v1042
      %v1061 = vsel %vm766, %v1044, 0
      %v1064 = vsel %vm766, %v1045, 0
      %v1067 = vsel %vm766, %v1046, 0
      %v1070 = vsel %vm766, %v1047, 0
      %v1073 = vsel %vm766, %v1048, 0
      %v1076 = vsel %vm766, %v1049, 0
      %v1079 = vsel %vm766, %v1050, 0
      %v1082 = vsel %vm766, %v1051, 0
      %v1085 = vsel %vm766, %v1052, 0
      %v1088 = vsel %vm766, %v1053, 0
      %v1091 = vsel %vm766, %v1054, 0
      %v1094 = vsel %vm766, %v1055, 0
      %v1097 = vsel %vm766, %v1056, 0
      %v1100 = vsel %vm766, %v1057, 0
      %v1103 = vsel %vm766, %v1058, 0
      %v1106 = vsel %vm766, %v1059, 0
      %v1109 = vsel %vm815, %v312, 0
      %1111 = vmatprep.subr.bf16.mxu0 0
      %1112 = vmatpush1.bf16.msra.mxu0 %v1109
      %1113 = vmatprep.subr.bf16.mxu0 0
      %1114 = vmatpush1.bf16.msra.mxu0 0
      %1115 = vmatprep.subr.bf16.mxu0 0
      %1116 = vmatpush1.bf16.msra.mxu0 0
      %1117 = vmatprep.subr.bf16.mxu0 0
      %1118 = vmatpush1.bf16.msra.mxu0 0
      %1119 = vmatprep.subr.bf16.mxu0 0
      %1120 = vmatpush1.bf16.msra.mxu0 0
      %1121 = vmatprep.subr.bf16.mxu0 0
      %1122 = vmatpush1.bf16.msra.mxu0 0
      %1123 = vmatprep.subr.bf16.mxu0 0
      %1124 = vmatpush1.bf16.msra.mxu0 0
      %1125 = vmatprep.subr.bf16.mxu0 0
      %1126 = vmatpush1.bf16.msra.mxu0 0
      %1127 = vmatprep.subr.bf16.mxu0 0
      %1128 = vmatpush1.bf16.msra.mxu0 0
      %1129 = vmatprep.subr.bf16.mxu0 0
      %1130 = vmatpush1.bf16.msra.mxu0 0
      %1131 = vmatprep.subr.bf16.mxu0 0
      %1132 = vmatpush1.bf16.msra.mxu0 0
      %1133 = vmatprep.subr.bf16.mxu0 0
      %1134 = vmatpush1.bf16.msra.mxu0 0
      %1135 = vmatprep.subr.bf16.mxu0 0
      %1136 = vmatpush1.bf16.msra.mxu0 0
      %1137 = vmatprep.subr.bf16.mxu0 0
      %1138 = vmatpush1.bf16.msra.mxu0 0
      %1139 = vmatprep.subr.bf16.mxu0 0
      %1140 = vmatpush1.bf16.msra.mxu0 0
      %1141 = vmatprep.subr.bf16.mxu0 0
      %1142 = vmatpush1.bf16.msra.mxu0 0
      %1143 = vmatprep.mubr.bf16.mxu0 0
      %1144 = vmatmul.mubr.bf16.gmra.mrb[0].mxu0 %v1061
      %v1145 = vpop.f32.mrb[0].mxu0
      %v1146 = vadd.f32 %v854, %v1145
      %v1147 = vpop.f32.mrb[0].mxu0
      %v1148 = vpop.f32.mrb[0].mxu0
      %v1149 = vadd.f32 %v857, %v1148
      %v1150 = vpop.f32.mrb[0].mxu0
      %1151 = vmatprep.mubr.bf16.mxu0 0
      %1152 = vmatmul.mubr.bf16.gmra.mrb[0].mxu0 %v1064
      %v1153 = vpop.f32.mrb[0].mxu0
      %v1154 = vadd.f32 %v862, %v1153
      %v1155 = vpop.f32.mrb[0].mxu0
      %v1156 = vpop.f32.mrb[0].mxu0
      %v1157 = vadd.f32 %v865, %v1156
      %v1158 = vpop.f32.mrb[0].mxu0
      %1159 = vmatprep.mubr.bf16.mxu0 0
      %1160 = vmatmul.mubr.bf16.gmra.mrb[0].mxu0 %v1067
      %v1161 = vpop.f32.mrb[0].mxu0
      %v1162 = vadd.f32 %v870, %v1161
      %v1163 = vpop.f32.mrb[0].mxu0
      %v1164 = vpop.f32.mrb[0].mxu0
      %v1165 = vadd.f32 %v873, %v1164
      %v1166 = vpop.f32.mrb[0].mxu0
      %1167 = vmatprep.mubr.bf16.mxu0 0
      %1168 = vmatmul.mubr.bf16.gmra.mrb[0].mxu0 %v1070
      %v1169 = vpop.f32.mrb[0].mxu0
      %v1170 = vadd.f32 %v878, %v1169
      %v1171 = vpop.f32.mrb[0].mxu0
      %v1172 = vpop.f32.mrb[0].mxu0
      %v1173 = vadd.f32 %v881, %v1172
      %v1174 = vpop.f32.mrb[0].mxu0
      %1175 = vmatprep.mubr.bf16.mxu0 0
      %1176 = vmatmul.mubr.bf16.gmra.mrb[0].mxu0 %v1073
      %v1177 = vpop.f32.mrb[0].mxu0
      %v1178 = vadd.f32 %v886, %v1177
      %v1179 = vpop.f32.mrb[0].mxu0
      %v1180 = vpop.f32.mrb[0].mxu0
      %v1181 = vadd.f32 %v889, %v1180
      %v1182 = vpop.f32.mrb[0].mxu0
      %1183 = vmatprep.mubr.bf16.mxu0 0
      %1184 = vmatmul.mubr.bf16.gmra.mrb[0].mxu0 %v1076
      %v1185 = vpop.f32.mrb[0].mxu0
      %v1186 = vadd.f32 %v894, %v1185
      %v1187 = vpop.f32.mrb[0].mxu0
      %v1188 = vpop.f32.mrb[0].mxu0
      %v1189 = vadd.f32 %v897, %v1188
      %v1190 = vpop.f32.mrb[0].mxu0
      %1191 = vmatprep.mubr.bf16.mxu0 0
      %1192 = vmatmul.mubr.bf16.gmra.mrb[0].mxu0 %v1079
      %v1193 = vpop.f32.mrb[0].mxu0
      %v1194 = vadd.f32 %v902, %v1193
      %v1195 = vpop.f32.mrb[0].mxu0
      %v1196 = vpop.f32.mrb[0].mxu0
      %v1197 = vadd.f32 %v905, %v1196
      %v1198 = vpop.f32.mrb[0].mxu0
      %1199 = vmatprep.mubr.bf16.mxu0 0
      %1200 = vmatmul.mubr.bf16.gmra.mrb[0].mxu0 %v1082
      %v1201 = vpop.f32.mrb[0].mxu0
      %v1202 = vadd.f32 %v910, %v1201
      %v1203 = vpop.f32.mrb[0].mxu0
      %v1204 = vpop.f32.mrb[0].mxu0
      %v1205 = vadd.f32 %v913, %v1204
      %v1206 = vpop.f32.mrb[0].mxu0
      %1207 = vmatprep.mubr.bf16.mxu0 0
      %1208 = vmatmul.mubr.bf16.gmra.mrb[0].mxu0 %v1085
      %v1209 = vpop.f32.mrb[0].mxu0
      %v1210 = vadd.f32 %v918, %v1209
      %v1211 = vpop.f32.mrb[0].mxu0
      %v1212 = vpop.f32.mrb[0].mxu0
      %v1213 = vadd.f32 %v921, %v1212
      %v1214 = vpop.f32.mrb[0].mxu0
      %1215 = vmatprep.mubr.bf16.mxu0 0
      %1216 = vmatmul.mubr.bf16.gmra.mrb[0].mxu0 %v1088
      %v1217 = vpop.f32.mrb[0].mxu0
      %v1218 = vadd.f32 %v926, %v1217
      %v1219 = vpop.f32.mrb[0].mxu0
      %v1220 = vpop.f32.mrb[0].mxu0
      %v1221 = vadd.f32 %v929, %v1220
      %v1222 = vpop.f32.mrb[0].mxu0
      %1223 = vmatprep.mubr.bf16.mxu0 0
      %1224 = vmatmul.mubr.bf16.gmra.mrb[0].mxu0 %v1091
      %v1225 = vpop.f32.mrb[0].mxu0
      %v1226 = vadd.f32 %v934, %v1225
      %v1227 = vpop.f32.mrb[0].mxu0
      %v1228 = vpop.f32.mrb[0].mxu0
      %v1229 = vadd.f32 %v937, %v1228
      %v1230 = vpop.f32.mrb[0].mxu0
      %1231 = vmatprep.mubr.bf16.mxu0 0
      %1232 = vmatmul.mubr.bf16.gmra.mrb[0].mxu0 %v1094
      %v1233 = vpop.f32.mrb[0].mxu0
      %v1234 = vadd.f32 %v942, %v1233
      %v1235 = vpop.f32.mrb[0].mxu0
      %v1236 = vpop.f32.mrb[0].mxu0
      %v1237 = vadd.f32 %v945, %v1236
      %v1238 = vpop.f32.mrb[0].mxu0
      %1239 = vmatprep.mubr.bf16.mxu0 0
      %1240 = vmatmul.mubr.bf16.gmra.mrb[0].mxu0 %v1097
      %v1241 = vpop.f32.mrb[0].mxu0
      %v1242 = vadd.f32 %v950, %v1241
      %v1243 = vpop.f32.mrb[0].mxu0
      %v1244 = vpop.f32.mrb[0].mxu0
      %v1245 = vadd.f32 %v953, %v1244
      %v1246 = vpop.f32.mrb[0].mxu0
      %1247 = vmatprep.mubr.bf16.mxu0 0
      %1248 = vmatmul.mubr.bf16.gmra.mrb[0].mxu0 %v1100
      %v1249 = vpop.f32.mrb[0].mxu0
      %v1250 = vadd.f32 %v958, %v1249
      %v1251 = vpop.f32.mrb[0].mxu0
      %v1252 = vpop.f32.mrb[0].mxu0
      %v1253 = vadd.f32 %v961, %v1252
      %v1254 = vpop.f32.mrb[0].mxu0
      %1255 = vmatprep.mubr.bf16.mxu0 0
      %1256 = vmatmul.mubr.bf16.gmra.mrb[0].mxu0 %v1103
      %v1257 = vpop.f32.mrb[0].mxu0
      %v1258 = vadd.f32 %v966, %v1257
      %v1259 = vpop.f32.mrb[0].mxu0
      %v1260 = vpop.f32.mrb[0].mxu0
      %v1261 = vadd.f32 %v969, %v1260
      %v1262 = vpop.f32.mrb[0].mxu0
      %1263 = vmatprep.mubr.bf16.mxu0 0
      %1264 = vmatmul.mubr.bf16.gmra.mrb[0].mxu0 %v1106
      %v1265 = vpop.f32.mrb[0].mxu0
      %v1266 = vadd.f32 %v974, %v1265
      %v1267 = vpop.f32.mrb[0].mxu0
      %v1268 = vpop.f32.mrb[0].mxu0
      %v1269 = vadd.f32 %v977, %v1268
      %v1270 = vpop.f32.mrb[0].mxu0
      %1271 = vdwg.mxu0
      %v1272 = vld [vmem:[%s273] sm:$0xe]
      %v1273 = vld [vmem:[%s273 + $0xc] sm:$0xe]
      %v1274 = vld [vmem:[%s273 + $0x18] sm:$0xe]
      %v1275 = vld [vmem:[%s273 + $0x24] sm:$0xe]
      %v1276 = vld [vmem:[%s273 + $0x30] sm:$0xe]
      %v1277 = vld [vmem:[%s273 + $0x3c] sm:$0xe]
      %v1278 = vld [vmem:[%s273 + $0x48] sm:$0xe]
      %v1279 = vld [vmem:[%s273 + $0x54] sm:$0xe]
      %v1280 = vld [vmem:[%s273 + $0x60] sm:$0xe]
      %v1281 = vld [vmem:[%s273 + $0x6c] sm:$0xe]
      %v1282 = vld [vmem:[%s273 + $0x78] sm:$0xe]
      %v1283 = vld [vmem:[%s273 + $0x84] sm:$0xe]
      %v1284 = vld [vmem:[%s273 + $0x90] sm:$0xe]
      %v1285 = vld [vmem:[%s273 + $0x9c] sm:$0xe]
      %v1286 = vld [vmem:[%s273 + $0xa8] sm:$0xe]
      %v1287 = vld [vmem:[%s273 + $0xb4] sm:$0xe]
      %vm1320 = vcmask 1042432
      %vm1321 = vcmask 1046532
      %vm1322 = vmor %vm1320, %vm1321
      %v1323 = vrot.slane %v1272, 5
      %v1324 = vrot.slane %v1323, 4
      %v1325 = vrot.slane %v281, 5
      %v1326 = vsel %vm1322, %v1324, %v1325
      %v1327 = vrot.slane %v1325, 4
      %v1328 = vrot.slane %v313, 5
      %v1329 = vsel %vm1322, %v1327, %v1328
      %v1330 = vrot.slane %v1273, 5
      %v1331 = vrot.slane %v1330, 4
      %v1332 = vrot.slane %v283, 5
      %v1333 = vsel %vm1322, %v1331, %v1332
      %v1334 = vrot.slane %v1332, 4
      %v1335 = vrot.slane %v314, 5
      %v1336 = vsel %vm1322, %v1334, %v1335
      %v1337 = vrot.slane %v1274, 5
      %v1338 = vrot.slane %v1337, 4
      %v1339 = vrot.slane %v285, 5
      %v1340 = vsel %vm1322, %v1338, %v1339
      %v1341 = vrot.slane %v1339, 4
      %v1342 = vrot.slane %v315, 5
      %v1343 = vsel %vm1322, %v1341, %v1342
      %v1344 = vrot.slane %v1275, 5
      %v1345 = vrot.slane %v1344, 4
      %v1346 = vrot.slane %v287, 5
      %v1347 = vsel %vm1322, %v1345, %v1346
      %v1348 = vrot.slane %v1346, 4
      %v1349 = vrot.slane %v316, 5
      %v1350 = vsel %vm1322, %v1348, %v1349
      %v1351 = vrot.slane %v1276, 5
      %v1352 = vrot.slane %v1351, 4
      %v1353 = vrot.slane %v289, 5
      %v1354 = vsel %vm1322, %v1352, %v1353
      %v1355 = vrot.slane %v1353, 4
      %v1356 = vrot.slane %v317, 5
      %v1357 = vsel %vm1322, %v1355, %v1356
      %v1358 = vrot.slane %v1277, 5
      %v1359 = vrot.slane %v1358, 4
      %v1360 = vrot.slane %v291, 5
      %v1361 = vsel %vm1322, %v1359, %v1360
      %v1362 = vrot.slane %v1360, 4
      %v1363 = vrot.slane %v318, 5
      %v1364 = vsel %vm1322, %v1362, %v1363
      %v1365 = vrot.slane %v1278, 5
      %v1366 = vrot.slane %v1365, 4
      %v1367 = vrot.slane %v293, 5
      %v1368 = vsel %vm1322, %v1366, %v1367
      %v1369 = vrot.slane %v1367, 4
      %v1370 = vrot.slane %v319, 5
      %v1371 = vsel %vm1322, %v1369, %v1370
      %v1372 = vrot.slane %v1279, 5
      %v1373 = vrot.slane %v1372, 4
      %v1374 = vrot.slane %v295, 5
      %v1375 = vsel %vm1322, %v1373, %v1374
      %v1376 = vrot.slane %v1374, 4
      %v1377 = vrot.slane %v320, 5
      %v1378 = vsel %vm1322, %v1376, %v1377
      %v1379 = vrot.slane %v1280, 5
      %v1380 = vrot.slane %v1379, 4
      %v1381 = vrot.slane %v297, 5
      %v1382 = vsel %vm1322, %v1380, %v1381
      %v1383 = vrot.slane %v1381, 4
      %v1384 = vrot.slane %v321, 5
      %v1385 = vsel %vm1322, %v1383, %v1384
      %v1386 = vrot.slane %v1281, 5
      %v1387 = vrot.slane %v1386, 4
      %v1388 = vrot.slane %v299, 5
      %v1389 = vsel %vm1322, %v1387, %v1388
      %v1390 = vrot.slane %v1388, 4
      %v1391 = vrot.slane %v322, 5
      %v1392 = vsel %vm1322, %v1390, %v1391
      %v1393 = vrot.slane %v1282, 5
      %v1394 = vrot.slane %v1393, 4
      %v1395 = vrot.slane %v301, 5
      %v1396 = vsel %vm1322, %v1394, %v1395
      %v1397 = vrot.slane %v1395, 4
      %v1398 = vrot.slane %v323, 5
      %v1399 = vsel %vm1322, %v1397, %v1398
      %v1400 = vrot.slane %v1283, 5
      %v1401 = vrot.slane %v1400, 4
      %v1402 = vrot.slane %v303, 5
      %v1403 = vsel %vm1322, %v1401, %v1402
      %v1404 = vrot.slane %v1402, 4
      %v1405 = vrot.slane %v324, 5
      %v1406 = vsel %vm1322, %v1404, %v1405
      %v1407 = vrot.slane %v1284, 5
      %v1408 = vrot.slane %v1407, 4
      %v1409 = vrot.slane %v305, 5
      %v1410 = vsel %vm1322, %v1408, %v1409
      %v1411 = vrot.slane %v1409, 4
      %v1412 = vrot.slane %v325, 5
      %v1413 = vsel %vm1322, %v1411, %v1412
      %v1414 = vrot.slane %v1285, 5
      %v1415 = vrot.slane %v1414, 4
      %v1416 = vrot.slane %v307, 5
      %v1417 = vsel %vm1322, %v1415, %v1416
      %v1418 = vrot.slane %v1416, 4
      %v1419 = vrot.slane %v326, 5
      %v1420 = vsel %vm1322, %v1418, %v1419
      %v1421 = vrot.slane %v1286, 5
      %v1422 = vrot.slane %v1421, 4
      %v1423 = vrot.slane %v309, 5
      %v1424 = vsel %vm1322, %v1422, %v1423
      %v1425 = vrot.slane %v1423, 4
      %v1426 = vrot.slane %v327, 5
      %v1427 = vsel %vm1322, %v1425, %v1426
      %v1428 = vrot.slane %v1287, 5
      %v1429 = vrot.slane %v1428, 4
      %v1430 = vrot.slane %v311, 5
      %v1431 = vsel %vm1322, %v1429, %v1430
      %v1432 = vrot.slane %v1430, 4
      %v1433 = vrot.slane %v328, 5
      %v1434 = vsel %vm1322, %v1432, %v1433
      %s1435 = scalar_lea.vmem %s1, 4
      %v1436 = vld [vmem:[%s1435] sm:$0x3]
      %v1437 = vunpack.c.l.b16 %v1326
      %v1438 = vunpack.c.l.b16 %v1329
      %v1439 = vunpack.c.l.b16 %v1333
      %v1440 = vunpack.c.l.b16 %v1336
      %v1441 = vunpack.c.l.b16 %v1340
      %v1442 = vunpack.c.l.b16 %v1343
      %v1443 = vunpack.c.l.b16 %v1347
      %v1444 = vunpack.c.l.b16 %v1350
      %v1445 = vunpack.c.l.b16 %v1354
      %v1446 = vunpack.c.l.b16 %v1357
      %v1447 = vunpack.c.l.b16 %v1361
      %v1448 = vunpack.c.l.b16 %v1364
      %v1449 = vunpack.c.l.b16 %v1368
      %v1450 = vunpack.c.l.b16 %v1371
      %v1451 = vunpack.c.l.b16 %v1375
      %v1452 = vunpack.c.l.b16 %v1378
      %v1453 = vunpack.c.l.b16 %v1382
      %v1454 = vunpack.c.l.b16 %v1385
      %v1455 = vunpack.c.l.b16 %v1389
      %v1456 = vunpack.c.l.b16 %v1392
      %v1457 = vunpack.c.l.b16 %v1396
      %v1458 = vunpack.c.l.b16 %v1399
      %v1459 = vunpack.c.l.b16 %v1403
      %v1460 = vunpack.c.l.b16 %v1406
      %v1461 = vunpack.c.l.b16 %v1410
      %v1462 = vunpack.c.l.b16 %v1413
      %v1463 = vunpack.c.l.b16 %v1417
      %v1464 = vunpack.c.l.b16 %v1420
      %v1465 = vunpack.c.l.b16 %v1424
      %v1466 = vunpack.c.l.b16 %v1427
      %v1467 = vunpack.c.l.b16 %v1431
      %v1468 = vunpack.c.l.b16 %v1434
      %v1469 = vpack.c.b16 %v1438, %v1437
      %v1470 = vpack.c.b16 %v1440, %v1439
      %v1471 = vpack.c.b16 %v1442, %v1441
      %v1472 = vpack.c.b16 %v1444, %v1443
      %v1473 = vpack.c.b16 %v1446, %v1445
      %v1474 = vpack.c.b16 %v1448, %v1447
      %v1475 = vpack.c.b16 %v1450, %v1449
      %v1476 = vpack.c.b16 %v1452, %v1451
      %v1477 = vpack.c.b16 %v1454, %v1453
      %v1478 = vpack.c.b16 %v1456, %v1455
      %v1479 = vpack.c.b16 %v1458, %v1457
      %v1480 = vpack.c.b16 %v1460, %v1459
      %v1481 = vpack.c.b16 %v1462, %v1461
      %v1482 = vpack.c.b16 %v1464, %v1463
      %v1483 = vpack.c.b16 %v1466, %v1465
      %v1484 = vpack.c.b16 %v1468, %v1467
      %v1486 = vsel %vm766, %v1469, 0
      %v1489 = vsel %vm766, %v1470, 0
      %v1492 = vsel %vm766, %v1471, 0
      %v1495 = vsel %vm766, %v1472, 0
      %v1498 = vsel %vm766, %v1473, 0
      %v1501 = vsel %vm766, %v1474, 0
      %v1504 = vsel %vm766, %v1475, 0
      %v1507 = vsel %vm766, %v1476, 0
      %v1510 = vsel %vm766, %v1477, 0
      %v1513 = vsel %vm766, %v1478, 0
      %v1516 = vsel %vm766, %v1479, 0
      %v1519 = vsel %vm766, %v1480, 0
      %v1522 = vsel %vm766, %v1481, 0
      %v1525 = vsel %vm766, %v1482, 0
      %v1528 = vsel %vm766, %v1483, 0
      %v1531 = vsel %vm766, %v1484, 0
      %v1534 = vsel %vm815, %v1436, 0
      %1536 = vmatprep.subr.bf16.mxu0 0
      %1537 = vmatpush1.bf16.msra.mxu0 %v1534
      %1538 = vmatprep.subr.bf16.mxu0 0
      %1539 = vmatpush1.bf16.msra.mxu0 0
      %1540 = vmatprep.subr.bf16.mxu0 0
      %1541 = vmatpush1.bf16.msra.mxu0 0
      %1542 = vmatprep.subr.bf16.mxu0 0
      %1543 = vmatpush1.bf16.msra.mxu0 0
      %1544 = vmatprep.subr.bf16.mxu0 0
      %1545 = vmatpush1.bf16.msra.mxu0 0
      %1546 = vmatprep.subr.bf16.mxu0 0
      %1547 = vmatpush1.bf16.msra.mxu0 0
      %1548 = vmatprep.subr.bf16.mxu0 0
      %1549 = vmatpush1.bf16.msra.mxu0 0
      %1550 = vmatprep.subr.bf16.mxu0 0
      %1551 = vmatpush1.bf16.msra.mxu0 0
      %1552 = vmatprep.subr.bf16.mxu0 0
      %1553 = vmatpush1.bf16.msra.mxu0 0
      %1554 = vmatprep.subr.bf16.mxu0 0
      %1555 = vmatpush1.bf16.msra.mxu0 0
      %1556 = vmatprep.subr.bf16.mxu0 0
      %1557 = vmatpush1.bf16.msra.mxu0 0
      %1558 = vmatprep.subr.bf16.mxu0 0
      %1559 = vmatpush1.bf16.msra.mxu0 0
      %1560 = vmatprep.subr.bf16.mxu0 0
      %1561 = vmatpush1.bf16.msra.mxu0 0
      %1562 = vmatprep.subr.bf16.mxu0 0
      %1563 = vmatpush1.bf16.msra.mxu0 0
      %1564 = vmatprep.subr.bf16.mxu0 0
      %1565 = vmatpush1.bf16.msra.mxu0 0
      %1566 = vmatprep.subr.bf16.mxu0 0
      %1567 = vmatpush1.bf16.msra.mxu0 0
      %1568 = vmatprep.mubr.bf16.mxu0 0
      %1569 = vmatmul.mubr.bf16.gmra.mrb[0].mxu0 %v1486
      %v1570 = vpop.f32.mrb[0].mxu0
      %v1571 = vadd.f32 0.0, %v1570
      %v1572 = vpop.f32.mrb[0].mxu0
      %v1573 = vpop.f32.mrb[0].mxu0
      %v1574 = vadd.f32 0.0, %v1573
      %v1575 = vpop.f32.mrb[0].mxu0
      %1576 = vmatprep.mubr.bf16.mxu0 0
      %1577 = vmatmul.mubr.bf16.gmra.mrb[0].mxu0 %v1489
      %v1578 = vpop.f32.mrb[0].mxu0
      %v1579 = vadd.f32 0.0, %v1578
      %v1580 = vpop.f32.mrb[0].mxu0
      %v1581 = vpop.f32.mrb[0].mxu0
      %v1582 = vadd.f32 0.0, %v1581
      %v1583 = vpop.f32.mrb[0].mxu0
      %1584 = vmatprep.mubr.bf16.mxu0 0
      %1585 = vmatmul.mubr.bf16.gmra.mrb[0].mxu0 %v1492
      %v1586 = vpop.f32.mrb[0].mxu0
      %v1587 = vadd.f32 0.0, %v1586
      %v1588 = vpop.f32.mrb[0].mxu0
      %v1589 = vpop.f32.mrb[0].mxu0
      %v1590 = vadd.f32 0.0, %v1589
      %v1591 = vpop.f32.mrb[0].mxu0
      %1592 = vmatprep.mubr.bf16.mxu0 0
      %1593 = vmatmul.mubr.bf16.gmra.mrb[0].mxu0 %v1495
      %v1594 = vpop.f32.mrb[0].mxu0
      %v1595 = vadd.f32 0.0, %v1594
      %v1596 = vpop.f32.mrb[0].mxu0
      %v1597 = vpop.f32.mrb[0].mxu0
      %v1598 = vadd.f32 0.0, %v1597
      %v1599 = vpop.f32.mrb[0].mxu0
      %1600 = vmatprep.mubr.bf16.mxu0 0
      %1601 = vmatmul.mubr.bf16.gmra.mrb[0].mxu0 %v1498
      %v1602 = vpop.f32.mrb[0].mxu0
      %v1603 = vadd.f32 0.0, %v1602
      %v1604 = vpop.f32.mrb[0].mxu0
      %v1605 = vpop.f32.mrb[0].mxu0
      %v1606 = vadd.f32 0.0, %v1605
      %v1607 = vpop.f32.mrb[0].mxu0
      %1608 = vmatprep.mubr.bf16.mxu0 0
      %1609 = vmatmul.mubr.bf16.gmra.mrb[0].mxu0 %v1501
      %v1610 = vpop.f32.mrb[0].mxu0
      %v1611 = vadd.f32 0.0, %v1610
      %v1612 = vpop.f32.mrb[0].mxu0
      %v1613 = vpop.f32.mrb[0].mxu0
      %v1614 = vadd.f32 0.0, %v1613
      %v1615 = vpop.f32.mrb[0].mxu0
      %1616 = vmatprep.mubr.bf16.mxu0 0
      %1617 = vmatmul.mubr.bf16.gmra.mrb[0].mxu0 %v1504
      %v1618 = vpop.f32.mrb[0].mxu0
      %v1619 = vadd.f32 0.0, %v1618
      %v1620 = vpop.f32.mrb[0].mxu0
      %v1621 = vpop.f32.mrb[0].mxu0
      %v1622 = vadd.f32 0.0, %v1621
      %v1623 = vpop.f32.mrb[0].mxu0
      %1624 = vmatprep.mubr.bf16.mxu0 0
      %1625 = vmatmul.mubr.bf16.gmra.mrb[0].mxu0 %v1507
      %v1626 = vpop.f32.mrb[0].mxu0
      %v1627 = vadd.f32 0.0, %v1626
      %v1628 = vpop.f32.mrb[0].mxu0
      %v1629 = vpop.f32.mrb[0].mxu0
      %v1630 = vadd.f32 0.0, %v1629
      %v1631 = vpop.f32.mrb[0].mxu0
      %1632 = vmatprep.mubr.bf16.mxu0 0
      %1633 = vmatmul.mubr.bf16.gmra.mrb[0].mxu0 %v1510
      %v1634 = vpop.f32.mrb[0].mxu0
      %v1635 = vadd.f32 0.0, %v1634
      %v1636 = vpop.f32.mrb[0].mxu0
      %v1637 = vpop.f32.mrb[0].mxu0
      %v1638 = vadd.f32 0.0, %v1637
      %v1639 = vpop.f32.mrb[0].mxu0
      %1640 = vmatprep.mubr.bf16.mxu0 0
      %1641 = vmatmul.mubr.bf16.gmra.mrb[0].mxu0 %v1513
      %v1642 = vpop.f32.mrb[0].mxu0
      %v1643 = vadd.f32 0.0, %v1642
      %v1644 = vpop.f32.mrb[0].mxu0
      %v1645 = vpop.f32.mrb[0].mxu0
      %v1646 = vadd.f32 0.0, %v1645
      %v1647 = vpop.f32.mrb[0].mxu0
      %1648 = vmatprep.mubr.bf16.mxu0 0
      %1649 = vmatmul.mubr.bf16.gmra.mrb[0].mxu0 %v1516
      %v1650 = vpop.f32.mrb[0].mxu0
      %v1651 = vadd.f32 0.0, %v1650
      %v1652 = vpop.f32.mrb[0].mxu0
      %v1653 = vpop.f32.mrb[0].mxu0
      %v1654 = vadd.f32 0.0, %v1653
      %v1655 = vpop.f32.mrb[0].mxu0
      %1656 = vmatprep.mubr.bf16.mxu0 0
      %1657 = vmatmul.mubr.bf16.gmra.mrb[0].mxu0 %v1519
      %v1658 = vpop.f32.mrb[0].mxu0
      %v1659 = vadd.f32 0.0, %v1658
      %v1660 = vpop.f32.mrb[0].mxu0
      %v1661 = vpop.f32.mrb[0].mxu0
      %v1662 = vadd.f32 0.0, %v1661
      %v1663 = vpop.f32.mrb[0].mxu0
      %1664 = vmatprep.mubr.bf16.mxu0 0
      %1665 = vmatmul.mubr.bf16.gmra.mrb[0].mxu0 %v1522
      %v1666 = vpop.f32.mrb[0].mxu0
      %v1667 = vadd.f32 0.0, %v1666
      %v1668 = vpop.f32.mrb[0].mxu0
      %v1669 = vpop.f32.mrb[0].mxu0
      %v1670 = vadd.f32 0.0, %v1669
      %v1671 = vpop.f32.mrb[0].mxu0
      %1672 = vmatprep.mubr.bf16.mxu0 0
      %1673 = vmatmul.mubr.bf16.gmra.mrb[0].mxu0 %v1525
      %v1674 = vpop.f32.mrb[0].mxu0
      %v1675 = vadd.f32 0.0, %v1674
      %v1676 = vpop.f32.mrb[0].mxu0
      %v1677 = vpop.f32.mrb[0].mxu0
      %v1678 = vadd.f32 0.0, %v1677
      %v1679 = vpop.f32.mrb[0].mxu0
      %1680 = vmatprep.mubr.bf16.mxu0 0
      %1681 = vmatmul.mubr.bf16.gmra.mrb[0].mxu0 %v1528
      %v1682 = vpop.f32.mrb[0].mxu0
      %v1683 = vadd.f32 0.0, %v1682
      %v1684 = vpop.f32.mrb[0].mxu0
      %v1685 = vpop.f32.mrb[0].mxu0
      %v1686 = vadd.f32 0.0, %v1685
      %v1687 = vpop.f32.mrb[0].mxu0
      %1688 = vmatprep.mubr.bf16.mxu0 0
      %1689 = vmatmul.mubr.bf16.gmra.mrb[0].mxu0 %v1531
      %v1690 = vpop.f32.mrb[0].mxu0
      %v1691 = vadd.f32 0.0, %v1690
      %v1692 = vpop.f32.mrb[0].mxu0
      %v1693 = vpop.f32.mrb[0].mxu0
      %v1694 = vadd.f32 0.0, %v1693
      %v1695 = vpop.f32.mrb[0].mxu0
      %1696 = vdwg.mxu0
      %v1697 = vadd.f32 %v1146, %v1571
      %v1698 = vadd.f32 %v1149, %v1574
      %v1699 = vadd.f32 %v1154, %v1579
      %v1700 = vadd.f32 %v1157, %v1582
      %v1701 = vadd.f32 %v1162, %v1587
      %v1702 = vadd.f32 %v1165, %v1590
      %v1703 = vadd.f32 %v1170, %v1595
      %v1704 = vadd.f32 %v1173, %v1598
      %v1705 = vadd.f32 %v1178, %v1603
      %v1706 = vadd.f32 %v1181, %v1606
      %v1707 = vadd.f32 %v1186, %v1611
      %v1708 = vadd.f32 %v1189, %v1614
      %v1709 = vadd.f32 %v1194, %v1619
      %v1710 = vadd.f32 %v1197, %v1622
      %v1711 = vadd.f32 %v1202, %v1627
      %v1712 = vadd.f32 %v1205, %v1630
      %v1713 = vadd.f32 %v1210, %v1635
      %v1714 = vadd.f32 %v1213, %v1638
      %v1715 = vadd.f32 %v1218, %v1643
      %v1716 = vadd.f32 %v1221, %v1646
      %v1717 = vadd.f32 %v1226, %v1651
      %v1718 = vadd.f32 %v1229, %v1654
      %v1719 = vadd.f32 %v1234, %v1659
      %v1720 = vadd.f32 %v1237, %v1662
      %v1721 = vadd.f32 %v1242, %v1667
      %v1722 = vadd.f32 %v1245, %v1670
      %v1723 = vadd.f32 %v1250, %v1675
      %v1724 = vadd.f32 %v1253, %v1678
      %v1725 = vadd.f32 %v1258, %v1683
      %v1726 = vadd.f32 %v1261, %v1686
      %v1727 = vadd.f32 %v1266, %v1691
      %v1728 = vadd.f32 %v1269, %v1694
      %s1729 = scalar_lea.vmem %s273, 12
      %v1730 = vld [vmem:[%s1729] sm:$0xf]
      %v1731 = vld [vmem:[%s1729 + $0x4] sm:$0xf]
      %v1732 = vld [vmem:[%s1729 + $0xc] sm:$0xf]
      %v1733 = vld [vmem:[%s1729 + $0x10] sm:$0xf]
      %v1734 = vld [vmem:[%s1729 + $0x18] sm:$0xf]
      %v1735 = vld [vmem:[%s1729 + $0x1c] sm:$0xf]
      %v1736 = vld [vmem:[%s1729 + $0x24] sm:$0xf]
      %v1737 = vld [vmem:[%s1729 + $0x28] sm:$0xf]
      %v1738 = vld [vmem:[%s1729 + $0x30] sm:$0xf]
      %v1739 = vld [vmem:[%s1729 + $0x34] sm:$0xf]
      %v1740 = vld [vmem:[%s1729 + $0x3c] sm:$0xf]
      %v1741 = vld [vmem:[%s1729 + $0x40] sm:$0xf]
      %v1742 = vld [vmem:[%s1729 + $0x48] sm:$0xf]
      %v1743 = vld [vmem:[%s1729 + $0x4c] sm:$0xf]
      %v1744 = vld [vmem:[%s1729 + $0x54] sm:$0xf]
      %v1745 = vld [vmem:[%s1729 + $0x58] sm:$0xf]
      %v1746 = vld [vmem:[%s1729 + $0x60] sm:$0xf]
      %v1747 = vld [vmem:[%s1729 + $0x64] sm:$0xf]
      %v1748 = vld [vmem:[%s1729 + $0x6c] sm:$0xf]
      %v1749 = vld [vmem:[%s1729 + $0x70] sm:$0xf]
      %v1750 = vld [vmem:[%s1729 + $0x78] sm:$0xf]
      %v1751 = vld [vmem:[%s1729 + $0x7c] sm:$0xf]
      %v1752 = vld [vmem:[%s1729 + $0x84] sm:$0xf]
      %v1753 = vld [vmem:[%s1729 + $0x88] sm:$0xf]
      %v1754 = vld [vmem:[%s1729 + $0x90] sm:$0xf]
      %v1755 = vld [vmem:[%s1729 + $0x94] sm:$0xf]
      %v1756 = vld [vmem:[%s1729 + $0x9c] sm:$0xf]
      %v1757 = vld [vmem:[%s1729 + $0xa0] sm:$0xf]
      %v1758 = vld [vmem:[%s1729 + $0xa8] sm:$0xf]
      %v1759 = vld [vmem:[%s1729 + $0xac] sm:$0xf]
      %v1760 = vld [vmem:[%s1729 + $0xb4] sm:$0xf]
      %v1761 = vld [vmem:[%s1729 + $0xb8] sm:$0xf]
      %s1762 = scalar_lea.vmem %s1, 6
      %v1763 = vld [vmem:[%s1762] sm:$0x3]
      %v1796 = vunpack.c.l.b16 %v1730
      %v1797 = vunpack.c.l.b16 %v1731
      %v1798 = vunpack.c.l.b16 %v1732
      %v1799 = vunpack.c.l.b16 %v1733
      %v1800 = vunpack.c.l.b16 %v1734
      %v1801 = vunpack.c.l.b16 %v1735
      %v1802 = vunpack.c.l.b16 %v1736
      %v1803 = vunpack.c.l.b16 %v1737
      %v1804 = vunpack.c.l.b16 %v1738
      %v1805 = vunpack.c.l.b16 %v1739
      %v1806 = vunpack.c.l.b16 %v1740
      %v1807 = vunpack.c.l.b16 %v1741
      %v1808 = vunpack.c.l.b16 %v1742
      %v1809 = vunpack.c.l.b16 %v1743
      %v1810 = vunpack.c.l.b16 %v1744
      %v1811 = vunpack.c.l.b16 %v1745
      %v1812 = vunpack.c.l.b16 %v1746
      %v1813 = vunpack.c.l.b16 %v1747
      %v1814 = vunpack.c.l.b16 %v1748
      %v1815 = vunpack.c.l.b16 %v1749
      %v1816 = vunpack.c.l.b16 %v1750
      %v1817 = vunpack.c.l.b16 %v1751
      %v1818 = vunpack.c.l.b16 %v1752
      %v1819 = vunpack.c.l.b16 %v1753
      %v1820 = vunpack.c.l.b16 %v1754
      %v1821 = vunpack.c.l.b16 %v1755
      %v1822 = vunpack.c.l.b16 %v1756
      %v1823 = vunpack.c.l.b16 %v1757
      %v1824 = vunpack.c.l.b16 %v1758
      %v1825 = vunpack.c.l.b16 %v1759
      %v1826 = vunpack.c.l.b16 %v1760
      %v1827 = vunpack.c.l.b16 %v1761
      %v1828 = vpack.c.b16 %v1797, %v1796
      %v1829 = vpack.c.b16 %v1799, %v1798
      %v1830 = vpack.c.b16 %v1801, %v1800
      %v1831 = vpack.c.b16 %v1803, %v1802
      %v1832 = vpack.c.b16 %v1805, %v1804
      %v1833 = vpack.c.b16 %v1807, %v1806
      %v1834 = vpack.c.b16 %v1809, %v1808
      %v1835 = vpack.c.b16 %v1811, %v1810
      %v1836 = vpack.c.b16 %v1813, %v1812
      %v1837 = vpack.c.b16 %v1815, %v1814
      %v1838 = vpack.c.b16 %v1817, %v1816
      %v1839 = vpack.c.b16 %v1819, %v1818
      %v1840 = vpack.c.b16 %v1821, %v1820
      %v1841 = vpack.c.b16 %v1823, %v1822
      %v1842 = vpack.c.b16 %v1825, %v1824
      %v1843 = vpack.c.b16 %v1827, %v1826
      %v1845 = vsel %vm766, %v1828, 0
      %v1848 = vsel %vm766, %v1829, 0
      %v1851 = vsel %vm766, %v1830, 0
      %v1854 = vsel %vm766, %v1831, 0
      %v1857 = vsel %vm766, %v1832, 0
      %v1860 = vsel %vm766, %v1833, 0
      %v1863 = vsel %vm766, %v1834, 0
      %v1866 = vsel %vm766, %v1835, 0
      %v1869 = vsel %vm766, %v1836, 0
      %v1872 = vsel %vm766, %v1837, 0
      %v1875 = vsel %vm766, %v1838, 0
      %v1878 = vsel %vm766, %v1839, 0
      %v1881 = vsel %vm766, %v1840, 0
      %v1884 = vsel %vm766, %v1841, 0
      %v1887 = vsel %vm766, %v1842, 0
      %v1890 = vsel %vm766, %v1843, 0
      %v1893 = vsel %vm815, %v1763, 0
      %1895 = vmatprep.subr.bf16.mxu0 0
      %1896 = vmatpush1.bf16.msra.mxu0 %v1893
      %1897 = vmatprep.subr.bf16.mxu0 0
      %1898 = vmatpush1.bf16.msra.mxu0 0
      %1899 = vmatprep.subr.bf16.mxu0 0
      %1900 = vmatpush1.bf16.msra.mxu0 0
      %1901 = vmatprep.subr.bf16.mxu0 0
      %1902 = vmatpush1.bf16.msra.mxu0 0
      %1903 = vmatprep.subr.bf16.mxu0 0
      %1904 = vmatpush1.bf16.msra.mxu0 0
      %1905 = vmatprep.subr.bf16.mxu0 0
      %1906 = vmatpush1.bf16.msra.mxu0 0
      %1907 = vmatprep.subr.bf16.mxu0 0
      %1908 = vmatpush1.bf16.msra.mxu0 0
      %1909 = vmatprep.subr.bf16.mxu0 0
      %1910 = vmatpush1.bf16.msra.mxu0 0
      %1911 = vmatprep.subr.bf16.mxu0 0
      %1912 = vmatpush1.bf16.msra.mxu0 0
      %1913 = vmatprep.subr.bf16.mxu0 0
      %1914 = vmatpush1.bf16.msra.mxu0 0
      %1915 = vmatprep.subr.bf16.mxu0 0
      %1916 = vmatpush1.bf16.msra.mxu0 0
      %1917 = vmatprep.subr.bf16.mxu0 0
      %1918 = vmatpush1.bf16.msra.mxu0 0
      %1919 = vmatprep.subr.bf16.mxu0 0
      %1920 = vmatpush1.bf16.msra.mxu0 0
      %1921 = vmatprep.subr.bf16.mxu0 0
      %1922 = vmatpush1.bf16.msra.mxu0 0
      %1923 = vmatprep.subr.bf16.mxu0 0
      %1924 = vmatpush1.bf16.msra.mxu0 0
      %1925 = vmatprep.subr.bf16.mxu0 0
      %1926 = vmatpush1.bf16.msra.mxu0 0
      %1927 = vmatprep.mubr.bf16.mxu0 0
      %1928 = vmatmul.mubr.bf16.gmra.mrb[0].mxu0 %v1845
      %v1929 = vpop.f32.mrb[0].mxu0
      %v1930 = vadd.f32 0.0, %v1929
      %v1931 = vpop.f32.mrb[0].mxu0
      %v1932 = vpop.f32.mrb[0].mxu0
      %v1933 = vadd.f32 0.0, %v1932
      %v1934 = vpop.f32.mrb[0].mxu0
      %1935 = vmatprep.mubr.bf16.mxu0 0
      %1936 = vmatmul.mubr.bf16.gmra.mrb[0].mxu0 %v1848
      %v1937 = vpop.f32.mrb[0].mxu0
      %v1938 = vadd.f32 0.0, %v1937
      %v1939 = vpop.f32.mrb[0].mxu0
      %v1940 = vpop.f32.mrb[0].mxu0
      %v1941 = vadd.f32 0.0, %v1940
      %v1942 = vpop.f32.mrb[0].mxu0
      %1943 = vmatprep.mubr.bf16.mxu0 0
      %1944 = vmatmul.mubr.bf16.gmra.mrb[0].mxu0 %v1851
      %v1945 = vpop.f32.mrb[0].mxu0
      %v1946 = vadd.f32 0.0, %v1945
      %v1947 = vpop.f32.mrb[0].mxu0
      %v1948 = vpop.f32.mrb[0].mxu0
      %v1949 = vadd.f32 0.0, %v1948
      %v1950 = vpop.f32.mrb[0].mxu0
      %1951 = vmatprep.mubr.bf16.mxu0 0
      %1952 = vmatmul.mubr.bf16.gmra.mrb[0].mxu0 %v1854
      %v1953 = vpop.f32.mrb[0].mxu0
      %v1954 = vadd.f32 0.0, %v1953
      %v1955 = vpop.f32.mrb[0].mxu0
      %v1956 = vpop.f32.mrb[0].mxu0
      %v1957 = vadd.f32 0.0, %v1956
      %v1958 = vpop.f32.mrb[0].mxu0
      %1959 = vmatprep.mubr.bf16.mxu0 0
      %1960 = vmatmul.mubr.bf16.gmra.mrb[0].mxu0 %v1857
      %v1961 = vpop.f32.mrb[0].mxu0
      %v1962 = vadd.f32 0.0, %v1961
      %v1963 = vpop.f32.mrb[0].mxu0
      %v1964 = vpop.f32.mrb[0].mxu0
      %v1965 = vadd.f32 0.0, %v1964
      %v1966 = vpop.f32.mrb[0].mxu0
      %1967 = vmatprep.mubr.bf16.mxu0 0
      %1968 = vmatmul.mubr.bf16.gmra.mrb[0].mxu0 %v1860
      %v1969 = vpop.f32.mrb[0].mxu0
      %v1970 = vadd.f32 0.0, %v1969
      %v1971 = vpop.f32.mrb[0].mxu0
      %v1972 = vpop.f32.mrb[0].mxu0
      %v1973 = vadd.f32 0.0, %v1972
      %v1974 = vpop.f32.mrb[0].mxu0
      %1975 = vmatprep.mubr.bf16.mxu0 0
      %1976 = vmatmul.mubr.bf16.gmra.mrb[0].mxu0 %v1863
      %v1977 = vpop.f32.mrb[0].mxu0
      %v1978 = vadd.f32 0.0, %v1977
      %v1979 = vpop.f32.mrb[0].mxu0
      %v1980 = vpop.f32.mrb[0].mxu0
      %v1981 = vadd.f32 0.0, %v1980
      %v1982 = vpop.f32.mrb[0].mxu0
      %1983 = vmatprep.mubr.bf16.mxu0 0
      %1984 = vmatmul.mubr.bf16.gmra.mrb[0].mxu0 %v1866
      %v1985 = vpop.f32.mrb[0].mxu0
      %v1986 = vadd.f32 0.0, %v1985
      %v1987 = vpop.f32.mrb[0].mxu0
      %v1988 = vpop.f32.mrb[0].mxu0
      %v1989 = vadd.f32 0.0, %v1988
      %v1990 = vpop.f32.mrb[0].mxu0
      %1991 = vmatprep.mubr.bf16.mxu0 0
      %1992 = vmatmul.mubr.bf16.gmra.mrb[0].mxu0 %v1869
      %v1993 = vpop.f32.mrb[0].mxu0
      %v1994 = vadd.f32 0.0, %v1993
      %v1995 = vpop.f32.mrb[0].mxu0
      %v1996 = vpop.f32.mrb[0].mxu0
      %v1997 = vadd.f32 0.0, %v1996
      %v1998 = vpop.f32.mrb[0].mxu0
      %1999 = vmatprep.mubr.bf16.mxu0 0
      %2000 = vmatmul.mubr.bf16.gmra.mrb[0].mxu0 %v1872
      %v2001 = vpop.f32.mrb[0].mxu0
      %v2002 = vadd.f32 0.0, %v2001
      %v2003 = vpop.f32.mrb[0].mxu0
      %v2004 = vpop.f32.mrb[0].mxu0
      %v2005 = vadd.f32 0.0, %v2004
      %v2006 = vpop.f32.mrb[0].mxu0
      %2007 = vmatprep.mubr.bf16.mxu0 0
      %2008 = vmatmul.mubr.bf16.gmra.mrb[0].mxu0 %v1875
      %v2009 = vpop.f32.mrb[0].mxu0
      %v2010 = vadd.f32 0.0, %v2009
      %v2011 = vpop.f32.mrb[0].mxu0
      %v2012 = vpop.f32.mrb[0].mxu0
      %v2013 = vadd.f32 0.0, %v2012
      %v2014 = vpop.f32.mrb[0].mxu0
      %2015 = vmatprep.mubr.bf16.mxu0 0
      %2016 = vmatmul.mubr.bf16.gmra.mrb[0].mxu0 %v1878
      %v2017 = vpop.f32.mrb[0].mxu0
      %v2018 = vadd.f32 0.0, %v2017
      %v2019 = vpop.f32.mrb[0].mxu0
      %v2020 = vpop.f32.mrb[0].mxu0
      %v2021 = vadd.f32 0.0, %v2020
      %v2022 = vpop.f32.mrb[0].mxu0
      %2023 = vmatprep.mubr.bf16.mxu0 0
      %2024 = vmatmul.mubr.bf16.gmra.mrb[0].mxu0 %v1881
      %v2025 = vpop.f32.mrb[0].mxu0
      %v2026 = vadd.f32 0.0, %v2025
      %v2027 = vpop.f32.mrb[0].mxu0
      %v2028 = vpop.f32.mrb[0].mxu0
      %v2029 = vadd.f32 0.0, %v2028
      %v2030 = vpop.f32.mrb[0].mxu0
      %2031 = vmatprep.mubr.bf16.mxu0 0
      %2032 = vmatmul.mubr.bf16.gmra.mrb[0].mxu0 %v1884
      %v2033 = vpop.f32.mrb[0].mxu0
      %v2034 = vadd.f32 0.0, %v2033
      %v2035 = vpop.f32.mrb[0].mxu0
      %v2036 = vpop.f32.mrb[0].mxu0
      %v2037 = vadd.f32 0.0, %v2036
      %v2038 = vpop.f32.mrb[0].mxu0
      %2039 = vmatprep.mubr.bf16.mxu0 0
      %2040 = vmatmul.mubr.bf16.gmra.mrb[0].mxu0 %v1887
      %v2041 = vpop.f32.mrb[0].mxu0
      %v2042 = vadd.f32 0.0, %v2041
      %v2043 = vpop.f32.mrb[0].mxu0
      %v2044 = vpop.f32.mrb[0].mxu0
      %v2045 = vadd.f32 0.0, %v2044
      %v2046 = vpop.f32.mrb[0].mxu0
      %2047 = vmatprep.mubr.bf16.mxu0 0
      %2048 = vmatmul.mubr.bf16.gmra.mrb[0].mxu0 %v1890
      %v2049 = vpop.f32.mrb[0].mxu0
      %v2050 = vadd.f32 0.0, %v2049
      %v2051 = vpop.f32.mrb[0].mxu0
      %v2052 = vpop.f32.mrb[0].mxu0
      %v2053 = vadd.f32 0.0, %v2052
      %v2054 = vpop.f32.mrb[0].mxu0
      %2055 = vdwg.mxu0
      %v2056 = vadd.f32 %v1697, %v1930
      %v2057 = vadd.f32 %v1698, %v1933
      %v2058 = vadd.f32 %v1699, %v1938
      %v2059 = vadd.f32 %v1700, %v1941
      %v2060 = vadd.f32 %v1701, %v1946
      %v2061 = vadd.f32 %v1702, %v1949
      %v2062 = vadd.f32 %v1703, %v1954
      %v2063 = vadd.f32 %v1704, %v1957
      %v2064 = vadd.f32 %v1705, %v1962
      %v2065 = vadd.f32 %v1706, %v1965
      %v2066 = vadd.f32 %v1707, %v1970
      %v2067 = vadd.f32 %v1708, %v1973
      %v2068 = vadd.f32 %v1709, %v1978
      %v2069 = vadd.f32 %v1710, %v1981
      %v2070 = vadd.f32 %v1711, %v1986
      %v2071 = vadd.f32 %v1712, %v1989
      %v2072 = vadd.f32 %v1713, %v1994
      %v2073 = vadd.f32 %v1714, %v1997
      %v2074 = vadd.f32 %v1715, %v2002
      %v2075 = vadd.f32 %v1716, %v2005
      %v2076 = vadd.f32 %v1717, %v2010
      %v2077 = vadd.f32 %v1718, %v2013
      %v2078 = vadd.f32 %v1719, %v2018
      %v2079 = vadd.f32 %v1720, %v2021
      %v2080 = vadd.f32 %v1721, %v2026
      %v2081 = vadd.f32 %v1722, %v2029
      %v2082 = vadd.f32 %v1723, %v2034
      %v2083 = vadd.f32 %v1724, %v2037
      %v2084 = vadd.f32 %v1725, %v2042
      %v2085 = vadd.f32 %v1726, %v2045
      %v2086 = vadd.f32 %v1727, %v2050
      %v2087 = vadd.f32 %v1728, %v2053
      %v2088 = vld [vmem:[%s1729] sm:$0xf]
      %v2089 = vld [vmem:[%s1729 + $0x4] sm:$0xf]
      %v2090 = vld [vmem:[%s1729 + $0x8] sm:$0x1]
      %v2091 = vld [vmem:[%s1729 + $0xc] sm:$0xf]
      %v2092 = vld [vmem:[%s1729 + $0x10] sm:$0xf]
      %v2093 = vld [vmem:[%s1729 + $0x14] sm:$0x1]
      %v2094 = vld [vmem:[%s1729 + $0x18] sm:$0xf]
      %v2095 = vld [vmem:[%s1729 + $0x1c] sm:$0xf]
      %v2096 = vld [vmem:[%s1729 + $0x20] sm:$0x1]
      %v2097 = vld [vmem:[%s1729 + $0x24] sm:$0xf]
      %v2098 = vld [vmem:[%s1729 + $0x28] sm:$0xf]
      %v2099 = vld [vmem:[%s1729 + $0x2c] sm:$0x1]
      %v2100 = vld [vmem:[%s1729 + $0x30] sm:$0xf]
      %v2101 = vld [vmem:[%s1729 + $0x34] sm:$0xf]
      %v2102 = vld [vmem:[%s1729 + $0x38] sm:$0x1]
      %v2103 = vld [vmem:[%s1729 + $0x3c] sm:$0xf]
      %v2104 = vld [vmem:[%s1729 + $0x40] sm:$0xf]
      %v2105 = vld [vmem:[%s1729 + $0x44] sm:$0x1]
      %v2106 = vld [vmem:[%s1729 + $0x48] sm:$0xf]
      %v2107 = vld [vmem:[%s1729 + $0x4c] sm:$0xf]
      %v2108 = vld [vmem:[%s1729 + $0x50] sm:$0x1]
      %v2109 = vld [vmem:[%s1729 + $0x54] sm:$0xf]
      %v2110 = vld [vmem:[%s1729 + $0x58] sm:$0xf]
      %v2111 = vld [vmem:[%s1729 + $0x5c] sm:$0x1]
      %v2112 = vld [vmem:[%s1729 + $0x60] sm:$0xf]
      %v2113 = vld [vmem:[%s1729 + $0x64] sm:$0xf]
      %v2114 = vld [vmem:[%s1729 + $0x68] sm:$0x1]
      %v2115 = vld [vmem:[%s1729 + $0x6c] sm:$0xf]
      %v2116 = vld [vmem:[%s1729 + $0x70] sm:$0xf]
      %v2117 = vld [vmem:[%s1729 + $0x74] sm:$0x1]
      %v2118 = vld [vmem:[%s1729 + $0x78] sm:$0xf]
      %v2119 = vld [vmem:[%s1729 + $0x7c] sm:$0xf]
      %v2120 = vld [vmem:[%s1729 + $0x80] sm:$0x1]
      %v2121 = vld [vmem:[%s1729 + $0x84] sm:$0xf]
      %v2122 = vld [vmem:[%s1729 + $0x88] sm:$0xf]
      %v2123 = vld [vmem:[%s1729 + $0x8c] sm:$0x1]
      %v2124 = vld [vmem:[%s1729 + $0x90] sm:$0xf]
      %v2125 = vld [vmem:[%s1729 + $0x94] sm:$0xf]
      %v2126 = vld [vmem:[%s1729 + $0x98] sm:$0x1]
      %v2127 = vld [vmem:[%s1729 + $0x9c] sm:$0xf]
      %v2128 = vld [vmem:[%s1729 + $0xa0] sm:$0xf]
      %v2129 = vld [vmem:[%s1729 + $0xa4] sm:$0x1]
      %v2130 = vld [vmem:[%s1729 + $0xa8] sm:$0xf]
      %v2131 = vld [vmem:[%s1729 + $0xac] sm:$0xf]
      %v2132 = vld [vmem:[%s1729 + $0xb0] sm:$0x1]
      %v2133 = vld [vmem:[%s1729 + $0xb4] sm:$0xf]
      %v2134 = vld [vmem:[%s1729 + $0xb8] sm:$0xf]
      %v2135 = vld [vmem:[%s1729 + $0xbc] sm:$0x1]
      %v2137 = vshrl.u32 %v2088, 16
      %v2139 = vrot.slane %v2137, 4
      %v2140 = vshll.u32 %v2088, 16
      %v2142 = vrot.slane %v2140, 5
      %v2143 = vor.u32 %v2139, %v2142
      %v2144 = vrot.slane %v2143, 4
      %v2146 = vshll.u32 %v2089, 16
      %v2148 = vrot.slane %v2146, 5
      %v2149 = vsel %vm331, %v2144, %v2148
      %v2150 = vshrl.u32 %v2089, 16
      %v2152 = vrot.slane %v2150, 4
      %v2153 = vor.u32 %v2152, %v2148
      %v2154 = vrot.slane %v2153, 4
      %v2156 = vshll.u32 %v2090, 16
      %v2158 = vrot.slane %v2156, 5
      %v2159 = vsel %vm331, %v2154, %v2158
      %v2161 = vshrl.u32 %v2091, 16
      %v2163 = vrot.slane %v2161, 4
      %v2164 = vshll.u32 %v2091, 16
      %v2166 = vrot.slane %v2164, 5
      %v2167 = vor.u32 %v2163, %v2166
      %v2168 = vrot.slane %v2167, 4
      %v2170 = vshll.u32 %v2092, 16
      %v2172 = vrot.slane %v2170, 5
      %v2173 = vsel %vm331, %v2168, %v2172
      %v2174 = vshrl.u32 %v2092, 16
      %v2176 = vrot.slane %v2174, 4
      %v2177 = vor.u32 %v2176, %v2172
      %v2178 = vrot.slane %v2177, 4
      %v2180 = vshll.u32 %v2093, 16
      %v2182 = vrot.slane %v2180, 5
      %v2183 = vsel %vm331, %v2178, %v2182
      %v2185 = vshrl.u32 %v2094, 16
      %v2187 = vrot.slane %v2185, 4
      %v2188 = vshll.u32 %v2094, 16
      %v2190 = vrot.slane %v2188, 5
      %v2191 = vor.u32 %v2187, %v2190
      %v2192 = vrot.slane %v2191, 4
      %v2194 = vshll.u32 %v2095, 16
      %v2196 = vrot.slane %v2194, 5
      %v2197 = vsel %vm331, %v2192, %v2196
      %v2198 = vshrl.u32 %v2095, 16
      %v2200 = vrot.slane %v2198, 4
      %v2201 = vor.u32 %v2200, %v2196
      %v2202 = vrot.slane %v2201, 4
      %v2204 = vshll.u32 %v2096, 16
      %v2206 = vrot.slane %v2204, 5
      %v2207 = vsel %vm331, %v2202, %v2206
      %v2209 = vshrl.u32 %v2097, 16
      %v2211 = vrot.slane %v2209, 4
      %v2212 = vshll.u32 %v2097, 16
      %v2214 = vrot.slane %v2212, 5
      %v2215 = vor.u32 %v2211, %v2214
      %v2216 = vrot.slane %v2215, 4
      %v2218 = vshll.u32 %v2098, 16
      %v2220 = vrot.slane %v2218, 5
      %v2221 = vsel %vm331, %v2216, %v2220
      %v2222 = vshrl.u32 %v2098, 16
      %v2224 = vrot.slane %v2222, 4
      %v2225 = vor.u32 %v2224, %v2220
      %v2226 = vrot.slane %v2225, 4
      %v2228 = vshll.u32 %v2099, 16
      %v2230 = vrot.slane %v2228, 5
      %v2231 = vsel %vm331, %v2226, %v2230
      %v2233 = vshrl.u32 %v2100, 16
      %v2235 = vrot.slane %v2233, 4
      %v2236 = vshll.u32 %v2100, 16
      %v2238 = vrot.slane %v2236, 5
      %v2239 = vor.u32 %v2235, %v2238
      %v2240 = vrot.slane %v2239, 4
      %v2242 = vshll.u32 %v2101, 16
      %v2244 = vrot.slane %v2242, 5
      %v2245 = vsel %vm331, %v2240, %v2244
      %v2246 = vshrl.u32 %v2101, 16
      %v2248 = vrot.slane %v2246, 4
      %v2249 = vor.u32 %v2248, %v2244
      %v2250 = vrot.slane %v2249, 4
      %v2252 = vshll.u32 %v2102, 16
      %v2254 = vrot.slane %v2252, 5
      %v2255 = vsel %vm331, %v2250, %v2254
      %v2257 = vshrl.u32 %v2103, 16
      %v2259 = vrot.slane %v2257, 4
      %v2260 = vshll.u32 %v2103, 16
      %v2262 = vrot.slane %v2260, 5
      %v2263 = vor.u32 %v2259, %v2262
      %v2264 = vrot.slane %v2263, 4
      %v2266 = vshll.u32 %v2104, 16
      %v2268 = vrot.slane %v2266, 5
      %v2269 = vsel %vm331, %v2264, %v2268
      %v2270 = vshrl.u32 %v2104, 16
      %v2272 = vrot.slane %v2270, 4
      %v2273 = vor.u32 %v2272, %v2268
      %v2274 = vrot.slane %v2273, 4
      %v2276 = vshll.u32 %v2105, 16
      %v2278 = vrot.slane %v2276, 5
      %v2279 = vsel %vm331, %v2274, %v2278
      %v2281 = vshrl.u32 %v2106, 16
      %v2283 = vrot.slane %v2281, 4
      %v2284 = vshll.u32 %v2106, 16
      %v2286 = vrot.slane %v2284, 5
      %v2287 = vor.u32 %v2283, %v2286
      %v2288 = vrot.slane %v2287, 4
      %v2290 = vshll.u32 %v2107, 16
      %v2292 = vrot.slane %v2290, 5
      %v2293 = vsel %vm331, %v2288, %v2292
      %v2294 = vshrl.u32 %v2107, 16
      %v2296 = vrot.slane %v2294, 4
      %v2297 = vor.u32 %v2296, %v2292
      %v2298 = vrot.slane %v2297, 4
      %v2300 = vshll.u32 %v2108, 16
      %v2302 = vrot.slane %v2300, 5
      %v2303 = vsel %vm331, %v2298, %v2302
      %v2305 = vshrl.u32 %v2109, 16
      %v2307 = vrot.slane %v2305, 4
      %v2308 = vshll.u32 %v2109, 16
      %v2310 = vrot.slane %v2308, 5
      %v2311 = vor.u32 %v2307, %v2310
      %v2312 = vrot.slane %v2311, 4
      %v2314 = vshll.u32 %v2110, 16
      %v2316 = vrot.slane %v2314, 5
      %v2317 = vsel %vm331, %v2312, %v2316
      %v2318 = vshrl.u32 %v2110, 16
      %v2320 = vrot.slane %v2318, 4
      %v2321 = vor.u32 %v2320, %v2316
      %v2322 = vrot.slane %v2321, 4
      %v2324 = vshll.u32 %v2111, 16
      %v2326 = vrot.slane %v2324, 5
      %v2327 = vsel %vm331, %v2322, %v2326
      %v2329 = vshrl.u32 %v2112, 16
      %v2331 = vrot.slane %v2329, 4
      %v2332 = vshll.u32 %v2112, 16
      %v2334 = vrot.slane %v2332, 5
      %v2335 = vor.u32 %v2331, %v2334
      %v2336 = vrot.slane %v2335, 4
      %v2338 = vshll.u32 %v2113, 16
      %v2340 = vrot.slane %v2338, 5
      %v2341 = vsel %vm331, %v2336, %v2340
      %v2342 = vshrl.u32 %v2113, 16
      %v2344 = vrot.slane %v2342, 4
      %v2345 = vor.u32 %v2344, %v2340
      %v2346 = vrot.slane %v2345, 4
      %v2348 = vshll.u32 %v2114, 16
      %v2350 = vrot.slane %v2348, 5
      %v2351 = vsel %vm331, %v2346, %v2350
      %v2353 = vshrl.u32 %v2115, 16
      %v2355 = vrot.slane %v2353, 4
      %v2356 = vshll.u32 %v2115, 16
      %v2358 = vrot.slane %v2356, 5
      %v2359 = vor.u32 %v2355, %v2358
      %v2360 = vrot.slane %v2359, 4
      %v2362 = vshll.u32 %v2116, 16
      %v2364 = vrot.slane %v2362, 5
      %v2365 = vsel %vm331, %v2360, %v2364
      %v2366 = vshrl.u32 %v2116, 16
      %v2368 = vrot.slane %v2366, 4
      %v2369 = vor.u32 %v2368, %v2364
      %v2370 = vrot.slane %v2369, 4
      %v2372 = vshll.u32 %v2117, 16
      %v2374 = vrot.slane %v2372, 5
      %v2375 = vsel %vm331, %v2370, %v2374
      %v2377 = vshrl.u32 %v2118, 16
      %v2379 = vrot.slane %v2377, 4
      %v2380 = vshll.u32 %v2118, 16
      %v2382 = vrot.slane %v2380, 5
      %v2383 = vor.u32 %v2379, %v2382
      %v2384 = vrot.slane %v2383, 4
      %v2386 = vshll.u32 %v2119, 16
      %v2388 = vrot.slane %v2386, 5
      %v2389 = vsel %vm331, %v2384, %v2388
      %v2390 = vshrl.u32 %v2119, 16
      %v2392 = vrot.slane %v2390, 4
      %v2393 = vor.u32 %v2392, %v2388
      %v2394 = vrot.slane %v2393, 4
      %v2396 = vshll.u32 %v2120, 16
      %v2398 = vrot.slane %v2396, 5
      %v2399 = vsel %vm331, %v2394, %v2398
      %v2401 = vshrl.u32 %v2121, 16
      %v2403 = vrot.slane %v2401, 4
      %v2404 = vshll.u32 %v2121, 16
      %v2406 = vrot.slane %v2404, 5
      %v2407 = vor.u32 %v2403, %v2406
      %v2408 = vrot.slane %v2407, 4
      %v2410 = vshll.u32 %v2122, 16
      %v2412 = vrot.slane %v2410, 5
      %v2413 = vsel %vm331, %v2408, %v2412
      %v2414 = vshrl.u32 %v2122, 16
      %v2416 = vrot.slane %v2414, 4
      %v2417 = vor.u32 %v2416, %v2412
      %v2418 = vrot.slane %v2417, 4
      %v2420 = vshll.u32 %v2123, 16
      %v2422 = vrot.slane %v2420, 5
      %v2423 = vsel %vm331, %v2418, %v2422
      %v2425 = vshrl.u32 %v2124, 16
      %v2427 = vrot.slane %v2425, 4
      %v2428 = vshll.u32 %v2124, 16
      %v2430 = vrot.slane %v2428, 5
      %v2431 = vor.u32 %v2427, %v2430
      %v2432 = vrot.slane %v2431, 4
      %v2434 = vshll.u32 %v2125, 16
      %v2436 = vrot.slane %v2434, 5
      %v2437 = vsel %vm331, %v2432, %v2436
      %v2438 = vshrl.u32 %v2125, 16
      %v2440 = vrot.slane %v2438, 4
      %v2441 = vor.u32 %v2440, %v2436
      %v2442 = vrot.slane %v2441, 4
      %v2444 = vshll.u32 %v2126, 16
      %v2446 = vrot.slane %v2444, 5
      %v2447 = vsel %vm331, %v2442, %v2446
      %v2449 = vshrl.u32 %v2127, 16
      %v2451 = vrot.slane %v2449, 4
      %v2452 = vshll.u32 %v2127, 16
      %v2454 = vrot.slane %v2452, 5
      %v2455 = vor.u32 %v2451, %v2454
      %v2456 = vrot.slane %v2455, 4
      %v2458 = vshll.u32 %v2128, 16
      %v2460 = vrot.slane %v2458, 5
      %v2461 = vsel %vm331, %v2456, %v2460
      %v2462 = vshrl.u32 %v2128, 16
      %v2464 = vrot.slane %v2462, 4
      %v2465 = vor.u32 %v2464, %v2460
      %v2466 = vrot.slane %v2465, 4
      %v2468 = vshll.u32 %v2129, 16
      %v2470 = vrot.slane %v2468, 5
      %v2471 = vsel %vm331, %v2466, %v2470
      %v2473 = vshrl.u32 %v2130, 16
      %v2475 = vrot.slane %v2473, 4
      %v2476 = vshll.u32 %v2130, 16
      %v2478 = vrot.slane %v2476, 5
      %v2479 = vor.u32 %v2475, %v2478
      %v2480 = vrot.slane %v2479, 4
      %v2482 = vshll.u32 %v2131, 16
      %v2484 = vrot.slane %v2482, 5
      %v2485 = vsel %vm331, %v2480, %v2484
      %v2486 = vshrl.u32 %v2131, 16
      %v2488 = vrot.slane %v2486, 4
      %v2489 = vor.u32 %v2488, %v2484
      %v2490 = vrot.slane %v2489, 4
      %v2492 = vshll.u32 %v2132, 16
      %v2494 = vrot.slane %v2492, 5
      %v2495 = vsel %vm331, %v2490, %v2494
      %v2497 = vshrl.u32 %v2133, 16
      %v2499 = vrot.slane %v2497, 4
      %v2500 = vshll.u32 %v2133, 16
      %v2502 = vrot.slane %v2500, 5
      %v2503 = vor.u32 %v2499, %v2502
      %v2504 = vrot.slane %v2503, 4
      %v2506 = vshll.u32 %v2134, 16
      %v2508 = vrot.slane %v2506, 5
      %v2509 = vsel %vm331, %v2504, %v2508
      %v2510 = vshrl.u32 %v2134, 16
      %v2512 = vrot.slane %v2510, 4
      %v2513 = vor.u32 %v2512, %v2508
      %v2514 = vrot.slane %v2513, 4
      %v2516 = vshll.u32 %v2135, 16
      %v2518 = vrot.slane %v2516, 5
      %v2519 = vsel %vm331, %v2514, %v2518
      %s2520 = scalar_lea.vmem %s1, 8
      %v2521 = vld [vmem:[%s2520] sm:$0x3]
      %v2522 = vunpack.c.l.b16 %v2149
      %v2523 = vunpack.c.l.b16 %v2159
      %v2524 = vunpack.c.l.b16 %v2173
      %v2525 = vunpack.c.l.b16 %v2183
      %v2526 = vunpack.c.l.b16 %v2197
      %v2527 = vunpack.c.l.b16 %v2207
      %v2528 = vunpack.c.l.b16 %v2221
      %v2529 = vunpack.c.l.b16 %v2231
      %v2530 = vunpack.c.l.b16 %v2245
      %v2531 = vunpack.c.l.b16 %v2255
      %v2532 = vunpack.c.l.b16 %v2269
      %v2533 = vunpack.c.l.b16 %v2279
      %v2534 = vunpack.c.l.b16 %v2293
      %v2535 = vunpack.c.l.b16 %v2303
      %v2536 = vunpack.c.l.b16 %v2317
      %v2537 = vunpack.c.l.b16 %v2327
      %v2538 = vunpack.c.l.b16 %v2341
      %v2539 = vunpack.c.l.b16 %v2351
      %v2540 = vunpack.c.l.b16 %v2365
      %v2541 = vunpack.c.l.b16 %v2375
      %v2542 = vunpack.c.l.b16 %v2389
      %v2543 = vunpack.c.l.b16 %v2399
      %v2544 = vunpack.c.l.b16 %v2413
      %v2545 = vunpack.c.l.b16 %v2423
      %v2546 = vunpack.c.l.b16 %v2437
      %v2547 = vunpack.c.l.b16 %v2447
      %v2548 = vunpack.c.l.b16 %v2461
      %v2549 = vunpack.c.l.b16 %v2471
      %v2550 = vunpack.c.l.b16 %v2485
      %v2551 = vunpack.c.l.b16 %v2495
      %v2552 = vunpack.c.l.b16 %v2509
      %v2553 = vunpack.c.l.b16 %v2519
      %v2554 = vpack.c.b16 %v2523, %v2522
      %v2555 = vpack.c.b16 %v2525, %v2524
      %v2556 = vpack.c.b16 %v2527, %v2526
      %v2557 = vpack.c.b16 %v2529, %v2528
      %v2558 = vpack.c.b16 %v2531, %v2530
      %v2559 = vpack.c.b16 %v2533, %v2532
      %v2560 = vpack.c.b16 %v2535, %v2534
      %v2561 = vpack.c.b16 %v2537, %v2536
      %v2562 = vpack.c.b16 %v2539, %v2538
      %v2563 = vpack.c.b16 %v2541, %v2540
      %v2564 = vpack.c.b16 %v2543, %v2542
      %v2565 = vpack.c.b16 %v2545, %v2544
      %v2566 = vpack.c.b16 %v2547, %v2546
      %v2567 = vpack.c.b16 %v2549, %v2548
      %v2568 = vpack.c.b16 %v2551, %v2550
      %v2569 = vpack.c.b16 %v2553, %v2552
      %v2571 = vsel %vm766, %v2554, 0
      %v2574 = vsel %vm766, %v2555, 0
      %v2577 = vsel %vm766, %v2556, 0
      %v2580 = vsel %vm766, %v2557, 0
      %v2583 = vsel %vm766, %v2558, 0
      %v2586 = vsel %vm766, %v2559, 0
      %v2589 = vsel %vm766, %v2560, 0
      %v2592 = vsel %vm766, %v2561, 0
      %v2595 = vsel %vm766, %v2562, 0
      %v2598 = vsel %vm766, %v2563, 0
      %v2601 = vsel %vm766, %v2564, 0
      %v2604 = vsel %vm766, %v2565, 0
      %v2607 = vsel %vm766, %v2566, 0
      %v2610 = vsel %vm766, %v2567, 0
      %v2613 = vsel %vm766, %v2568, 0
      %v2616 = vsel %vm766, %v2569, 0
      %v2619 = vsel %vm815, %v2521, 0
      %2621 = vmatprep.subr.bf16.mxu0 0
      %2622 = vmatpush1.bf16.msra.mxu0 %v2619
      %2623 = vmatprep.subr.bf16.mxu0 0
      %2624 = vmatpush1.bf16.msra.mxu0 0
      %2625 = vmatprep.subr.bf16.mxu0 0
      %2626 = vmatpush1.bf16.msra.mxu0 0
      %2627 = vmatprep.subr.bf16.mxu0 0
      %2628 = vmatpush1.bf16.msra.mxu0 0
      %2629 = vmatprep.subr.bf16.mxu0 0
      %2630 = vmatpush1.bf16.msra.mxu0 0
      %2631 = vmatprep.subr.bf16.mxu0 0
      %2632 = vmatpush1.bf16.msra.mxu0 0
      %2633 = vmatprep.subr.bf16.mxu0 0
      %2634 = vmatpush1.bf16.msra.mxu0 0
      %2635 = vmatprep.subr.bf16.mxu0 0
      %2636 = vmatpush1.bf16.msra.mxu0 0
      %2637 = vmatprep.subr.bf16.mxu0 0
      %2638 = vmatpush1.bf16.msra.mxu0 0
      %2639 = vmatprep.subr.bf16.mxu0 0
      %2640 = vmatpush1.bf16.msra.mxu0 0
      %2641 = vmatprep.subr.bf16.mxu0 0
      %2642 = vmatpush1.bf16.msra.mxu0 0
      %2643 = vmatprep.subr.bf16.mxu0 0
      %2644 = vmatpush1.bf16.msra.mxu0 0
      %2645 = vmatprep.subr.bf16.mxu0 0
      %2646 = vmatpush1.bf16.msra.mxu0 0
      %2647 = vmatprep.subr.bf16.mxu0 0
      %2648 = vmatpush1.bf16.msra.mxu0 0
      %2649 = vmatprep.subr.bf16.mxu0 0
      %2650 = vmatpush1.bf16.msra.mxu0 0
      %2651 = vmatprep.subr.bf16.mxu0 0
      %2652 = vmatpush1.bf16.msra.mxu0 0
      %2653 = vmatprep.mubr.bf16.mxu0 0
      %2654 = vmatmul.mubr.bf16.gmra.mrb[0].mxu0 %v2571
      %v2655 = vpop.f32.mrb[0].mxu0
      %v2656 = vadd.f32 0.0, %v2655
      %v2657 = vpop.f32.mrb[0].mxu0
      %v2658 = vpop.f32.mrb[0].mxu0
      %v2659 = vadd.f32 0.0, %v2658
      %v2660 = vpop.f32.mrb[0].mxu0
      %2661 = vmatprep.mubr.bf16.mxu0 0
      %2662 = vmatmul.mubr.bf16.gmra.mrb[0].mxu0 %v2574
      %v2663 = vpop.f32.mrb[0].mxu0
      %v2664 = vadd.f32 0.0, %v2663
      %v2665 = vpop.f32.mrb[0].mxu0
      %v2666 = vpop.f32.mrb[0].mxu0
      %v2667 = vadd.f32 0.0, %v2666
      %v2668 = vpop.f32.mrb[0].mxu0
      %2669 = vmatprep.mubr.bf16.mxu0 0
      %2670 = vmatmul.mubr.bf16.gmra.mrb[0].mxu0 %v2577
      %v2671 = vpop.f32.mrb[0].mxu0
      %v2672 = vadd.f32 0.0, %v2671
      %v2673 = vpop.f32.mrb[0].mxu0
      %v2674 = vpop.f32.mrb[0].mxu0
      %v2675 = vadd.f32 0.0, %v2674
      %v2676 = vpop.f32.mrb[0].mxu0
      %2677 = vmatprep.mubr.bf16.mxu0 0
      %2678 = vmatmul.mubr.bf16.gmra.mrb[0].mxu0 %v2580
      %v2679 = vpop.f32.mrb[0].mxu0
      %v2680 = vadd.f32 0.0, %v2679
      %v2681 = vpop.f32.mrb[0].mxu0
      %v2682 = vpop.f32.mrb[0].mxu0
      %v2683 = vadd.f32 0.0, %v2682
      %v2684 = vpop.f32.mrb[0].mxu0
      %2685 = vmatprep.mubr.bf16.mxu0 0
      %2686 = vmatmul.mubr.bf16.gmra.mrb[0].mxu0 %v2583
      %v2687 = vpop.f32.mrb[0].mxu0
      %v2688 = vadd.f32 0.0, %v2687
      %v2689 = vpop.f32.mrb[0].mxu0
      %v2690 = vpop.f32.mrb[0].mxu0
      %v2691 = vadd.f32 0.0, %v2690
      %v2692 = vpop.f32.mrb[0].mxu0
      %2693 = vmatprep.mubr.bf16.mxu0 0
      %2694 = vmatmul.mubr.bf16.gmra.mrb[0].mxu0 %v2586
      %v2695 = vpop.f32.mrb[0].mxu0
      %v2696 = vadd.f32 0.0, %v2695
      %v2697 = vpop.f32.mrb[0].mxu0
      %v2698 = vpop.f32.mrb[0].mxu0
      %v2699 = vadd.f32 0.0, %v2698
      %v2700 = vpop.f32.mrb[0].mxu0
      %2701 = vmatprep.mubr.bf16.mxu0 0
      %2702 = vmatmul.mubr.bf16.gmra.mrb[0].mxu0 %v2589
      %v2703 = vpop.f32.mrb[0].mxu0
      %v2704 = vadd.f32 0.0, %v2703
      %v2705 = vpop.f32.mrb[0].mxu0
      %v2706 = vpop.f32.mrb[0].mxu0
      %v2707 = vadd.f32 0.0, %v2706
      %v2708 = vpop.f32.mrb[0].mxu0
      %2709 = vmatprep.mubr.bf16.mxu0 0
      %2710 = vmatmul.mubr.bf16.gmra.mrb[0].mxu0 %v2592
      %v2711 = vpop.f32.mrb[0].mxu0
      %v2712 = vadd.f32 0.0, %v2711
      %v2713 = vpop.f32.mrb[0].mxu0
      %v2714 = vpop.f32.mrb[0].mxu0
      %v2715 = vadd.f32 0.0, %v2714
      %v2716 = vpop.f32.mrb[0].mxu0
      %2717 = vmatprep.mubr.bf16.mxu0 0
      %2718 = vmatmul.mubr.bf16.gmra.mrb[0].mxu0 %v2595
      %v2719 = vpop.f32.mrb[0].mxu0
      %v2720 = vadd.f32 0.0, %v2719
      %v2721 = vpop.f32.mrb[0].mxu0
      %v2722 = vpop.f32.mrb[0].mxu0
      %v2723 = vadd.f32 0.0, %v2722
      %v2724 = vpop.f32.mrb[0].mxu0
      %2725 = vmatprep.mubr.bf16.mxu0 0
      %2726 = vmatmul.mubr.bf16.gmra.mrb[0].mxu0 %v2598
      %v2727 = vpop.f32.mrb[0].mxu0
      %v2728 = vadd.f32 0.0, %v2727
      %v2729 = vpop.f32.mrb[0].mxu0
      %v2730 = vpop.f32.mrb[0].mxu0
      %v2731 = vadd.f32 0.0, %v2730
      %v2732 = vpop.f32.mrb[0].mxu0
      %2733 = vmatprep.mubr.bf16.mxu0 0
      %2734 = vmatmul.mubr.bf16.gmra.mrb[0].mxu0 %v2601
      %v2735 = vpop.f32.mrb[0].mxu0
      %v2736 = vadd.f32 0.0, %v2735
      %v2737 = vpop.f32.mrb[0].mxu0
      %v2738 = vpop.f32.mrb[0].mxu0
      %v2739 = vadd.f32 0.0, %v2738
      %v2740 = vpop.f32.mrb[0].mxu0
      %2741 = vmatprep.mubr.bf16.mxu0 0
      %2742 = vmatmul.mubr.bf16.gmra.mrb[0].mxu0 %v2604
      %v2743 = vpop.f32.mrb[0].mxu0
      %v2744 = vadd.f32 0.0, %v2743
      %v2745 = vpop.f32.mrb[0].mxu0
      %v2746 = vpop.f32.mrb[0].mxu0
      %v2747 = vadd.f32 0.0, %v2746
      %v2748 = vpop.f32.mrb[0].mxu0
      %2749 = vmatprep.mubr.bf16.mxu0 0
      %2750 = vmatmul.mubr.bf16.gmra.mrb[0].mxu0 %v2607
      %v2751 = vpop.f32.mrb[0].mxu0
      %v2752 = vadd.f32 0.0, %v2751
      %v2753 = vpop.f32.mrb[0].mxu0
      %v2754 = vpop.f32.mrb[0].mxu0
      %v2755 = vadd.f32 0.0, %v2754
      %v2756 = vpop.f32.mrb[0].mxu0
      %2757 = vmatprep.mubr.bf16.mxu0 0
      %2758 = vmatmul.mubr.bf16.gmra.mrb[0].mxu0 %v2610
      %v2759 = vpop.f32.mrb[0].mxu0
      %v2760 = vadd.f32 0.0, %v2759
      %v2761 = vpop.f32.mrb[0].mxu0
      %v2762 = vpop.f32.mrb[0].mxu0
      %v2763 = vadd.f32 0.0, %v2762
      %v2764 = vpop.f32.mrb[0].mxu0
      %2765 = vmatprep.mubr.bf16.mxu0 0
      %2766 = vmatmul.mubr.bf16.gmra.mrb[0].mxu0 %v2613
      %v2767 = vpop.f32.mrb[0].mxu0
      %v2768 = vadd.f32 0.0, %v2767
      %v2769 = vpop.f32.mrb[0].mxu0
      %v2770 = vpop.f32.mrb[0].mxu0
      %v2771 = vadd.f32 0.0, %v2770
      %v2772 = vpop.f32.mrb[0].mxu0
      %2773 = vmatprep.mubr.bf16.mxu0 0
      %2774 = vmatmul.mubr.bf16.gmra.mrb[0].mxu0 %v2616
      %v2775 = vpop.f32.mrb[0].mxu0
      %v2776 = vadd.f32 0.0, %v2775
      %v2777 = vpop.f32.mrb[0].mxu0
      %v2778 = vpop.f32.mrb[0].mxu0
      %v2779 = vadd.f32 0.0, %v2778
      %v2780 = vpop.f32.mrb[0].mxu0
      %2781 = vdwg.mxu0
      %v2782 = vadd.f32 %v2056, %v2656
      %v2783 = vadd.f32 %v2057, %v2659
      %v2784 = vadd.f32 %v2058, %v2664
      %v2785 = vadd.f32 %v2059, %v2667
      %v2786 = vadd.f32 %v2060, %v2672
      %v2787 = vadd.f32 %v2061, %v2675
      %v2788 = vadd.f32 %v2062, %v2680
      %v2789 = vadd.f32 %v2063, %v2683
      %v2790 = vadd.f32 %v2064, %v2688
      %v2791 = vadd.f32 %v2065, %v2691
      %v2792 = vadd.f32 %v2066, %v2696
      %v2793 = vadd.f32 %v2067, %v2699
      %v2794 = vadd.f32 %v2068, %v2704
      %v2795 = vadd.f32 %v2069, %v2707
      %v2796 = vadd.f32 %v2070, %v2712
      %v2797 = vadd.f32 %v2071, %v2715
      %v2798 = vadd.f32 %v2072, %v2720
      %v2799 = vadd.f32 %v2073, %v2723
      %v2800 = vadd.f32 %v2074, %v2728
      %v2801 = vadd.f32 %v2075, %v2731
      %v2802 = vadd.f32 %v2076, %v2736
      %v2803 = vadd.f32 %v2077, %v2739
      %v2804 = vadd.f32 %v2078, %v2744
      %v2805 = vadd.f32 %v2079, %v2747
      %v2806 = vadd.f32 %v2080, %v2752
      %v2807 = vadd.f32 %v2081, %v2755
      %v2808 = vadd.f32 %v2082, %v2760
      %v2809 = vadd.f32 %v2083, %v2763
      %v2810 = vadd.f32 %v2084, %v2768
      %v2811 = vadd.f32 %v2085, %v2771
      %v2812 = vadd.f32 %v2086, %v2776
      %v2813 = vadd.f32 %v2087, %v2779
      %v2814 = vld [vmem:[%s1729] sm:$0xe]
      %v2815 = vld [vmem:[%s1729 + $0xc] sm:$0xe]
      %v2816 = vld [vmem:[%s1729 + $0x18] sm:$0xe]
      %v2817 = vld [vmem:[%s1729 + $0x24] sm:$0xe]
      %v2818 = vld [vmem:[%s1729 + $0x30] sm:$0xe]
      %v2819 = vld [vmem:[%s1729 + $0x3c] sm:$0xe]
      %v2820 = vld [vmem:[%s1729 + $0x48] sm:$0xe]
      %v2821 = vld [vmem:[%s1729 + $0x54] sm:$0xe]
      %v2822 = vld [vmem:[%s1729 + $0x60] sm:$0xe]
      %v2823 = vld [vmem:[%s1729 + $0x6c] sm:$0xe]
      %v2824 = vld [vmem:[%s1729 + $0x78] sm:$0xe]
      %v2825 = vld [vmem:[%s1729 + $0x84] sm:$0xe]
      %v2826 = vld [vmem:[%s1729 + $0x90] sm:$0xe]
      %v2827 = vld [vmem:[%s1729 + $0x9c] sm:$0xe]
      %v2828 = vld [vmem:[%s1729 + $0xa8] sm:$0xe]
      %v2829 = vld [vmem:[%s1729 + $0xb4] sm:$0xe]
      %v2878 = vrot.slane %v2814, 5
      %v2879 = vrot.slane %v2878, 4
      %v2880 = vrot.slane %v2089, 5
      %v2881 = vsel %vm1322, %v2879, %v2880
      %v2882 = vrot.slane %v2880, 4
      %v2883 = vrot.slane %v2090, 5
      %v2884 = vsel %vm1322, %v2882, %v2883
      %v2885 = vrot.slane %v2815, 5
      %v2886 = vrot.slane %v2885, 4
      %v2887 = vrot.slane %v2092, 5
      %v2888 = vsel %vm1322, %v2886, %v2887
      %v2889 = vrot.slane %v2887, 4
      %v2890 = vrot.slane %v2093, 5
      %v2891 = vsel %vm1322, %v2889, %v2890
      %v2892 = vrot.slane %v2816, 5
      %v2893 = vrot.slane %v2892, 4
      %v2894 = vrot.slane %v2095, 5
      %v2895 = vsel %vm1322, %v2893, %v2894
      %v2896 = vrot.slane %v2894, 4
      %v2897 = vrot.slane %v2096, 5
      %v2898 = vsel %vm1322, %v2896, %v2897
      %v2899 = vrot.slane %v2817, 5
      %v2900 = vrot.slane %v2899, 4
      %v2901 = vrot.slane %v2098, 5
      %v2902 = vsel %vm1322, %v2900, %v2901
      %v2903 = vrot.slane %v2901, 4
      %v2904 = vrot.slane %v2099, 5
      %v2905 = vsel %vm1322, %v2903, %v2904
      %v2906 = vrot.slane %v2818, 5
      %v2907 = vrot.slane %v2906, 4
      %v2908 = vrot.slane %v2101, 5
      %v2909 = vsel %vm1322, %v2907, %v2908
      %v2910 = vrot.slane %v2908, 4
      %v2911 = vrot.slane %v2102, 5
      %v2912 = vsel %vm1322, %v2910, %v2911
      %v2913 = vrot.slane %v2819, 5
      %v2914 = vrot.slane %v2913, 4
      %v2915 = vrot.slane %v2104, 5
      %v2916 = vsel %vm1322, %v2914, %v2915
      %v2917 = vrot.slane %v2915, 4
      %v2918 = vrot.slane %v2105, 5
      %v2919 = vsel %vm1322, %v2917, %v2918
      %v2920 = vrot.slane %v2820, 5
      %v2921 = vrot.slane %v2920, 4
      %v2922 = vrot.slane %v2107, 5
      %v2923 = vsel %vm1322, %v2921, %v2922
      %v2924 = vrot.slane %v2922, 4
      %v2925 = vrot.slane %v2108, 5
      %v2926 = vsel %vm1322, %v2924, %v2925
      %v2927 = vrot.slane %v2821, 5
      %v2928 = vrot.slane %v2927, 4
      %v2929 = vrot.slane %v2110, 5
      %v2930 = vsel %vm1322, %v2928, %v2929
      %v2931 = vrot.slane %v2929, 4
      %v2932 = vrot.slane %v2111, 5
      %v2933 = vsel %vm1322, %v2931, %v2932
      %v2934 = vrot.slane %v2822, 5
      %v2935 = vrot.slane %v2934, 4
      %v2936 = vrot.slane %v2113, 5
      %v2937 = vsel %vm1322, %v2935, %v2936
      %v2938 = vrot.slane %v2936, 4
      %v2939 = vrot.slane %v2114, 5
      %v2940 = vsel %vm1322, %v2938, %v2939
      %v2941 = vrot.slane %v2823, 5
      %v2942 = vrot.slane %v2941, 4
      %v2943 = vrot.slane %v2116, 5
      %v2944 = vsel %vm1322, %v2942, %v2943
      %v2945 = vrot.slane %v2943, 4
      %v2946 = vrot.slane %v2117, 5
      %v2947 = vsel %vm1322, %v2945, %v2946
      %v2948 = vrot.slane %v2824, 5
      %v2949 = vrot.slane %v2948, 4
      %v2950 = vrot.slane %v2119, 5
      %v2951 = vsel %vm1322, %v2949, %v2950
      %v2952 = vrot.slane %v2950, 4
      %v2953 = vrot.slane %v2120, 5
      %v2954 = vsel %vm1322, %v2952, %v2953
      %v2955 = vrot.slane %v2825, 5
      %v2956 = vrot.slane %v2955, 4
      %v2957 = vrot.slane %v2122, 5
      %v2958 = vsel %vm1322, %v2956, %v2957
      %v2959 = vrot.slane %v2957, 4
      %v2960 = vrot.slane %v2123, 5
      %v2961 = vsel %vm1322, %v2959, %v2960
      %v2962 = vrot.slane %v2826, 5
      %v2963 = vrot.slane %v2962, 4
      %v2964 = vrot.slane %v2125, 5
      %v2965 = vsel %vm1322, %v2963, %v2964
      %v2966 = vrot.slane %v2964, 4
      %v2967 = vrot.slane %v2126, 5
      %v2968 = vsel %vm1322, %v2966, %v2967
      %v2969 = vrot.slane %v2827, 5
      %v2970 = vrot.slane %v2969, 4
      %v2971 = vrot.slane %v2128, 5
      %v2972 = vsel %vm1322, %v2970, %v2971
      %v2973 = vrot.slane %v2971, 4
      %v2974 = vrot.slane %v2129, 5
      %v2975 = vsel %vm1322, %v2973, %v2974
      %v2976 = vrot.slane %v2828, 5
      %v2977 = vrot.slane %v2976, 4
      %v2978 = vrot.slane %v2131, 5
      %v2979 = vsel %vm1322, %v2977, %v2978
      %v2980 = vrot.slane %v2978, 4
      %v2981 = vrot.slane %v2132, 5
      %v2982 = vsel %vm1322, %v2980, %v2981
      %v2983 = vrot.slane %v2829, 5
      %v2984 = vrot.slane %v2983, 4
      %v2985 = vrot.slane %v2134, 5
      %v2986 = vsel %vm1322, %v2984, %v2985
      %v2987 = vrot.slane %v2985, 4
      %v2988 = vrot.slane %v2135, 5
      %v2989 = vsel %vm1322, %v2987, %v2988
      %s2990 = scalar_lea.vmem %s1, 10
      %v2991 = vld [vmem:[%s2990] sm:$0x3]
      %v2992 = vunpack.c.l.b16 %v2881
      %v2993 = vunpack.c.l.b16 %v2884
      %v2994 = vunpack.c.l.b16 %v2888
      %v2995 = vunpack.c.l.b16 %v2891
      %v2996 = vunpack.c.l.b16 %v2895
      %v2997 = vunpack.c.l.b16 %v2898
      %v2998 = vunpack.c.l.b16 %v2902
      %v2999 = vunpack.c.l.b16 %v2905
      %v3000 = vunpack.c.l.b16 %v2909
      %v3001 = vunpack.c.l.b16 %v2912
      %v3002 = vunpack.c.l.b16 %v2916
      %v3003 = vunpack.c.l.b16 %v2919
      %v3004 = vunpack.c.l.b16 %v2923
      %v3005 = vunpack.c.l.b16 %v2926
      %v3006 = vunpack.c.l.b16 %v2930
      %v3007 = vunpack.c.l.b16 %v2933
      %v3008 = vunpack.c.l.b16 %v2937
      %v3009 = vunpack.c.l.b16 %v2940
      %v3010 = vunpack.c.l.b16 %v2944
      %v3011 = vunpack.c.l.b16 %v2947
      %v3012 = vunpack.c.l.b16 %v2951
      %v3013 = vunpack.c.l.b16 %v2954
      %v3014 = vunpack.c.l.b16 %v2958
      %v3015 = vunpack.c.l.b16 %v2961
      %v3016 = vunpack.c.l.b16 %v2965
      %v3017 = vunpack.c.l.b16 %v2968
      %v3018 = vunpack.c.l.b16 %v2972
      %v3019 = vunpack.c.l.b16 %v2975
      %v3020 = vunpack.c.l.b16 %v2979
      %v3021 = vunpack.c.l.b16 %v2982
      %v3022 = vunpack.c.l.b16 %v2986
      %v3023 = vunpack.c.l.b16 %v2989
      %v3024 = vpack.c.b16 %v2993, %v2992
      %v3025 = vpack.c.b16 %v2995, %v2994
      %v3026 = vpack.c.b16 %v2997, %v2996
      %v3027 = vpack.c.b16 %v2999, %v2998
      %v3028 = vpack.c.b16 %v3001, %v3000
      %v3029 = vpack.c.b16 %v3003, %v3002
      %v3030 = vpack.c.b16 %v3005, %v3004
      %v3031 = vpack.c.b16 %v3007, %v3006
      %v3032 = vpack.c.b16 %v3009, %v3008
      %v3033 = vpack.c.b16 %v3011, %v3010
      %v3034 = vpack.c.b16 %v3013, %v3012
      %v3035 = vpack.c.b16 %v3015, %v3014
      %v3036 = vpack.c.b16 %v3017, %v3016
      %v3037 = vpack.c.b16 %v3019, %v3018
      %v3038 = vpack.c.b16 %v3021, %v3020
      %v3039 = vpack.c.b16 %v3023, %v3022
      %v3041 = vsel %vm766, %v3024, 0
      %v3044 = vsel %vm766, %v3025, 0
      %v3047 = vsel %vm766, %v3026, 0
      %v3050 = vsel %vm766, %v3027, 0
      %v3053 = vsel %vm766, %v3028, 0
      %v3056 = vsel %vm766, %v3029, 0
      %v3059 = vsel %vm766, %v3030, 0
      %v3062 = vsel %vm766, %v3031, 0
      %v3065 = vsel %vm766, %v3032, 0
      %v3068 = vsel %vm766, %v3033, 0
      %v3071 = vsel %vm766, %v3034, 0
      %v3074 = vsel %vm766, %v3035, 0
      %v3077 = vsel %vm766, %v3036, 0
      %v3080 = vsel %vm766, %v3037, 0
      %v3083 = vsel %vm766, %v3038, 0
      %v3086 = vsel %vm766, %v3039, 0
      %v3089 = vsel %vm815, %v2991, 0
      %3091 = vmatprep.subr.bf16.mxu0 0
      %3092 = vmatpush1.bf16.msra.mxu0 %v3089
      %3093 = vmatprep.subr.bf16.mxu0 0
      %3094 = vmatpush1.bf16.msra.mxu0 0
      %3095 = vmatprep.subr.bf16.mxu0 0
      %3096 = vmatpush1.bf16.msra.mxu0 0
      %3097 = vmatprep.subr.bf16.mxu0 0
      %3098 = vmatpush1.bf16.msra.mxu0 0
      %3099 = vmatprep.subr.bf16.mxu0 0
      %3100 = vmatpush1.bf16.msra.mxu0 0
      %3101 = vmatprep.subr.bf16.mxu0 0
      %3102 = vmatpush1.bf16.msra.mxu0 0
      %3103 = vmatprep.subr.bf16.mxu0 0
      %3104 = vmatpush1.bf16.msra.mxu0 0
      %3105 = vmatprep.subr.bf16.mxu0 0
      %3106 = vmatpush1.bf16.msra.mxu0 0
      %3107 = vmatprep.subr.bf16.mxu0 0
      %3108 = vmatpush1.bf16.msra.mxu0 0
      %3109 = vmatprep.subr.bf16.mxu0 0
      %3110 = vmatpush1.bf16.msra.mxu0 0
      %3111 = vmatprep.subr.bf16.mxu0 0
      %3112 = vmatpush1.bf16.msra.mxu0 0
      %3113 = vmatprep.subr.bf16.mxu0 0
      %3114 = vmatpush1.bf16.msra.mxu0 0
      %3115 = vmatprep.subr.bf16.mxu0 0
      %3116 = vmatpush1.bf16.msra.mxu0 0
      %3117 = vmatprep.subr.bf16.mxu0 0
      %3118 = vmatpush1.bf16.msra.mxu0 0
      %3119 = vmatprep.subr.bf16.mxu0 0
      %3120 = vmatpush1.bf16.msra.mxu0 0
      %3121 = vmatprep.subr.bf16.mxu0 0
      %3122 = vmatpush1.bf16.msra.mxu0 0
      %3123 = vmatprep.mubr.bf16.mxu0 0
      %3124 = vmatmul.mubr.bf16.gmra.mrb[0].mxu0 %v3041
      %v3125 = vpop.f32.mrb[0].mxu0
      %v3126 = vadd.f32 0.0, %v3125
      %v3127 = vpop.f32.mrb[0].mxu0
      %v3128 = vpop.f32.mrb[0].mxu0
      %v3129 = vadd.f32 0.0, %v3128
      %v3130 = vpop.f32.mrb[0].mxu0
      %3131 = vmatprep.mubr.bf16.mxu0 0
      %3132 = vmatmul.mubr.bf16.gmra.mrb[0].mxu0 %v3044
      %v3133 = vpop.f32.mrb[0].mxu0
      %v3134 = vadd.f32 0.0, %v3133
      %v3135 = vpop.f32.mrb[0].mxu0
      %v3136 = vpop.f32.mrb[0].mxu0
      %v3137 = vadd.f32 0.0, %v3136
      %v3138 = vpop.f32.mrb[0].mxu0
      %3139 = vmatprep.mubr.bf16.mxu0 0
      %3140 = vmatmul.mubr.bf16.gmra.mrb[0].mxu0 %v3047
      %v3141 = vpop.f32.mrb[0].mxu0
      %v3142 = vadd.f32 0.0, %v3141
      %v3143 = vpop.f32.mrb[0].mxu0
      %v3144 = vpop.f32.mrb[0].mxu0
      %v3145 = vadd.f32 0.0, %v3144
      %v3146 = vpop.f32.mrb[0].mxu0
      %3147 = vmatprep.mubr.bf16.mxu0 0
      %3148 = vmatmul.mubr.bf16.gmra.mrb[0].mxu0 %v3050
      %v3149 = vpop.f32.mrb[0].mxu0
      %v3150 = vadd.f32 0.0, %v3149
      %v3151 = vpop.f32.mrb[0].mxu0
      %v3152 = vpop.f32.mrb[0].mxu0
      %v3153 = vadd.f32 0.0, %v3152
      %v3154 = vpop.f32.mrb[0].mxu0
      %3155 = vmatprep.mubr.bf16.mxu0 0
      %3156 = vmatmul.mubr.bf16.gmra.mrb[0].mxu0 %v3053
      %v3157 = vpop.f32.mrb[0].mxu0
      %v3158 = vadd.f32 0.0, %v3157
      %v3159 = vpop.f32.mrb[0].mxu0
      %v3160 = vpop.f32.mrb[0].mxu0
      %v3161 = vadd.f32 0.0, %v3160
      %v3162 = vpop.f32.mrb[0].mxu0
      %3163 = vmatprep.mubr.bf16.mxu0 0
      %3164 = vmatmul.mubr.bf16.gmra.mrb[0].mxu0 %v3056
      %v3165 = vpop.f32.mrb[0].mxu0
      %v3166 = vadd.f32 0.0, %v3165
      %v3167 = vpop.f32.mrb[0].mxu0
      %v3168 = vpop.f32.mrb[0].mxu0
      %v3169 = vadd.f32 0.0, %v3168
      %v3170 = vpop.f32.mrb[0].mxu0
      %3171 = vmatprep.mubr.bf16.mxu0 0
      %3172 = vmatmul.mubr.bf16.gmra.mrb[0].mxu0 %v3059
      %v3173 = vpop.f32.mrb[0].mxu0
      %v3174 = vadd.f32 0.0, %v3173
      %v3175 = vpop.f32.mrb[0].mxu0
      %v3176 = vpop.f32.mrb[0].mxu0
      %v3177 = vadd.f32 0.0, %v3176
      %v3178 = vpop.f32.mrb[0].mxu0
      %3179 = vmatprep.mubr.bf16.mxu0 0
      %3180 = vmatmul.mubr.bf16.gmra.mrb[0].mxu0 %v3062
      %v3181 = vpop.f32.mrb[0].mxu0
      %v3182 = vadd.f32 0.0, %v3181
      %v3183 = vpop.f32.mrb[0].mxu0
      %v3184 = vpop.f32.mrb[0].mxu0
      %v3185 = vadd.f32 0.0, %v3184
      %v3186 = vpop.f32.mrb[0].mxu0
      %3187 = vmatprep.mubr.bf16.mxu0 0
      %3188 = vmatmul.mubr.bf16.gmra.mrb[0].mxu0 %v3065
      %v3189 = vpop.f32.mrb[0].mxu0
      %v3190 = vadd.f32 0.0, %v3189
      %v3191 = vpop.f32.mrb[0].mxu0
      %v3192 = vpop.f32.mrb[0].mxu0
      %v3193 = vadd.f32 0.0, %v3192
      %v3194 = vpop.f32.mrb[0].mxu0
      %3195 = vmatprep.mubr.bf16.mxu0 0
      %3196 = vmatmul.mubr.bf16.gmra.mrb[0].mxu0 %v3068
      %v3197 = vpop.f32.mrb[0].mxu0
      %v3198 = vadd.f32 0.0, %v3197
      %v3199 = vpop.f32.mrb[0].mxu0
      %v3200 = vpop.f32.mrb[0].mxu0
      %v3201 = vadd.f32 0.0, %v3200
      %v3202 = vpop.f32.mrb[0].mxu0
      %3203 = vmatprep.mubr.bf16.mxu0 0
      %3204 = vmatmul.mubr.bf16.gmra.mrb[0].mxu0 %v3071
      %v3205 = vpop.f32.mrb[0].mxu0
      %v3206 = vadd.f32 0.0, %v3205
      %v3207 = vpop.f32.mrb[0].mxu0
      %v3208 = vpop.f32.mrb[0].mxu0
      %v3209 = vadd.f32 0.0, %v3208
      %v3210 = vpop.f32.mrb[0].mxu0
      %3211 = vmatprep.mubr.bf16.mxu0 0
      %3212 = vmatmul.mubr.bf16.gmra.mrb[0].mxu0 %v3074
      %v3213 = vpop.f32.mrb[0].mxu0
      %v3214 = vadd.f32 0.0, %v3213
      %v3215 = vpop.f32.mrb[0].mxu0
      %v3216 = vpop.f32.mrb[0].mxu0
      %v3217 = vadd.f32 0.0, %v3216
      %v3218 = vpop.f32.mrb[0].mxu0
      %3219 = vmatprep.mubr.bf16.mxu0 0
      %3220 = vmatmul.mubr.bf16.gmra.mrb[0].mxu0 %v3077
      %v3221 = vpop.f32.mrb[0].mxu0
      %v3222 = vadd.f32 0.0, %v3221
      %v3223 = vpop.f32.mrb[0].mxu0
      %v3224 = vpop.f32.mrb[0].mxu0
      %v3225 = vadd.f32 0.0, %v3224
      %v3226 = vpop.f32.mrb[0].mxu0
      %3227 = vmatprep.mubr.bf16.mxu0 0
      %3228 = vmatmul.mubr.bf16.gmra.mrb[0].mxu0 %v3080
      %v3229 = vpop.f32.mrb[0].mxu0
      %v3230 = vadd.f32 0.0, %v3229
      %v3231 = vpop.f32.mrb[0].mxu0
      %v3232 = vpop.f32.mrb[0].mxu0
      %v3233 = vadd.f32 0.0, %v3232
      %v3234 = vpop.f32.mrb[0].mxu0
      %3235 = vmatprep.mubr.bf16.mxu0 0
      %3236 = vmatmul.mubr.bf16.gmra.mrb[0].mxu0 %v3083
      %v3237 = vpop.f32.mrb[0].mxu0
      %v3238 = vadd.f32 0.0, %v3237
      %v3239 = vpop.f32.mrb[0].mxu0
      %v3240 = vpop.f32.mrb[0].mxu0
      %v3241 = vadd.f32 0.0, %v3240
      %v3242 = vpop.f32.mrb[0].mxu0
      %3243 = vmatprep.mubr.bf16.mxu0 0
      %3244 = vmatmul.mubr.bf16.gmra.mrb[0].mxu0 %v3086
      %v3245 = vpop.f32.mrb[0].mxu0
      %v3246 = vadd.f32 0.0, %v3245
      %v3247 = vpop.f32.mrb[0].mxu0
      %v3248 = vpop.f32.mrb[0].mxu0
      %v3249 = vadd.f32 0.0, %v3248
      %v3250 = vpop.f32.mrb[0].mxu0
      %3251 = vdwg.mxu0
      %v3252 = vadd.f32 %v2782, %v3126
      %v3253 = vadd.f32 %v2783, %v3129
      %v3254 = vadd.f32 %v2784, %v3134
      %v3255 = vadd.f32 %v2785, %v3137
      %v3256 = vadd.f32 %v2786, %v3142
      %v3257 = vadd.f32 %v2787, %v3145
      %v3258 = vadd.f32 %v2788, %v3150
      %v3259 = vadd.f32 %v2789, %v3153
      %v3260 = vadd.f32 %v2790, %v3158
      %v3261 = vadd.f32 %v2791, %v3161
      %v3262 = vadd.f32 %v2792, %v3166
      %v3263 = vadd.f32 %v2793, %v3169
      %v3264 = vadd.f32 %v2794, %v3174
      %v3265 = vadd.f32 %v2795, %v3177
      %v3266 = vadd.f32 %v2796, %v3182
      %v3267 = vadd.f32 %v2797, %v3185
      %v3268 = vadd.f32 %v2798, %v3190
      %v3269 = vadd.f32 %v2799, %v3193
      %v3270 = vadd.f32 %v2800, %v3198
      %v3271 = vadd.f32 %v2801, %v3201
      %v3272 = vadd.f32 %v2802, %v3206
      %v3273 = vadd.f32 %v2803, %v3209
      %v3274 = vadd.f32 %v2804, %v3214
      %v3275 = vadd.f32 %v2805, %v3217
      %v3276 = vadd.f32 %v2806, %v3222
      %v3277 = vadd.f32 %v2807, %v3225
      %v3278 = vadd.f32 %v2808, %v3230
      %v3279 = vadd.f32 %v2809, %v3233
      %v3280 = vadd.f32 %v2810, %v3238
      %v3281 = vadd.f32 %v2811, %v3241
      %v3282 = vadd.f32 %v2812, %v3246
      %v3283 = vadd.f32 %v2813, %v3249
      %s3284 = scalar_lea.vmem %s273, 24
      %v3285 = vld [vmem:[%s3284] sm:$0xf]
      %v3286 = vld [vmem:[%s3284 + $0x4] sm:$0xf]
      %v3287 = vld [vmem:[%s3284 + $0xc] sm:$0xf]
      %v3288 = vld [vmem:[%s3284 + $0x10] sm:$0xf]
      %v3289 = vld [vmem:[%s3284 + $0x18] sm:$0xf]
      %v3290 = vld [vmem:[%s3284 + $0x1c] sm:$0xf]
      %v3291 = vld [vmem:[%s3284 + $0x24] sm:$0xf]
      %v3292 = vld [vmem:[%s3284 + $0x28] sm:$0xf]
      %v3293 = vld [vmem:[%s3284 + $0x30] sm:$0xf]
      %v3294 = vld [vmem:[%s3284 + $0x34] sm:$0xf]
      %v3295 = vld [vmem:[%s3284 + $0x3c] sm:$0xf]
      %v3296 = vld [vmem:[%s3284 + $0x40] sm:$0xf]
      %v3297 = vld [vmem:[%s3284 + $0x48] sm:$0xf]
      %v3298 = vld [vmem:[%s3284 + $0x4c] sm:$0xf]
      %v3299 = vld [vmem:[%s3284 + $0x54] sm:$0xf]
      %v3300 = vld [vmem:[%s3284 + $0x58] sm:$0xf]
      %v3301 = vld [vmem:[%s3284 + $0x60] sm:$0xf]
      %v3302 = vld [vmem:[%s3284 + $0x64] sm:$0xf]
      %v3303 = vld [vmem:[%s3284 + $0x6c] sm:$0xf]
      %v3304 = vld [vmem:[%s3284 + $0x70] sm:$0xf]
      %v3305 = vld [vmem:[%s3284 + $0x78] sm:$0xf]
      %v3306 = vld [vmem:[%s3284 + $0x7c] sm:$0xf]
      %v3307 = vld [vmem:[%s3284 + $0x84] sm:$0xf]
      %v3308 = vld [vmem:[%s3284 + $0x88] sm:$0xf]
      %v3309 = vld [vmem:[%s3284 + $0x90] sm:$0xf]
      %v3310 = vld [vmem:[%s3284 + $0x94] sm:$0xf]
      %v3311 = vld [vmem:[%s3284 + $0x9c] sm:$0xf]
      %v3312 = vld [vmem:[%s3284 + $0xa0] sm:$0xf]
      %v3313 = vld [vmem:[%s3284 + $0xa8] sm:$0xf]
      %v3314 = vld [vmem:[%s3284 + $0xac] sm:$0xf]
      %v3315 = vld [vmem:[%s3284 + $0xb4] sm:$0xf]
      %v3316 = vld [vmem:[%s3284 + $0xb8] sm:$0xf]
      %s3317 = scalar_lea.vmem %s1, 12
      %v3318 = vld [vmem:[%s3317] sm:$0x3]
      %v3351 = vunpack.c.l.b16 %v3285
      %v3352 = vunpack.c.l.b16 %v3286
      %v3353 = vunpack.c.l.b16 %v3287
      %v3354 = vunpack.c.l.b16 %v3288
      %v3355 = vunpack.c.l.b16 %v3289
      %v3356 = vunpack.c.l.b16 %v3290
      %v3357 = vunpack.c.l.b16 %v3291
      %v3358 = vunpack.c.l.b16 %v3292
      %v3359 = vunpack.c.l.b16 %v3293
      %v3360 = vunpack.c.l.b16 %v3294
      %v3361 = vunpack.c.l.b16 %v3295
      %v3362 = vunpack.c.l.b16 %v3296
      %v3363 = vunpack.c.l.b16 %v3297
      %v3364 = vunpack.c.l.b16 %v3298
      %v3365 = vunpack.c.l.b16 %v3299
      %v3366 = vunpack.c.l.b16 %v3300
      %v3367 = vunpack.c.l.b16 %v3301
      %v3368 = vunpack.c.l.b16 %v3302
      %v3369 = vunpack.c.l.b16 %v3303
      %v3370 = vunpack.c.l.b16 %v3304
      %v3371 = vunpack.c.l.b16 %v3305
      %v3372 = vunpack.c.l.b16 %v3306
      %v3373 = vunpack.c.l.b16 %v3307
      %v3374 = vunpack.c.l.b16 %v3308
      %v3375 = vunpack.c.l.b16 %v3309
      %v3376 = vunpack.c.l.b16 %v3310
      %v3377 = vunpack.c.l.b16 %v3311
      %v3378 = vunpack.c.l.b16 %v3312
      %v3379 = vunpack.c.l.b16 %v3313
      %v3380 = vunpack.c.l.b16 %v3314
      %v3381 = vunpack.c.l.b16 %v3315
      %v3382 = vunpack.c.l.b16 %v3316
      %v3383 = vpack.c.b16 %v3352, %v3351
      %v3384 = vpack.c.b16 %v3354, %v3353
      %v3385 = vpack.c.b16 %v3356, %v3355
      %v3386 = vpack.c.b16 %v3358, %v3357
      %v3387 = vpack.c.b16 %v3360, %v3359
      %v3388 = vpack.c.b16 %v3362, %v3361
      %v3389 = vpack.c.b16 %v3364, %v3363
      %v3390 = vpack.c.b16 %v3366, %v3365
      %v3391 = vpack.c.b16 %v3368, %v3367
      %v3392 = vpack.c.b16 %v3370, %v3369
      %v3393 = vpack.c.b16 %v3372, %v3371
      %v3394 = vpack.c.b16 %v3374, %v3373
      %v3395 = vpack.c.b16 %v3376, %v3375
      %v3396 = vpack.c.b16 %v3378, %v3377
      %v3397 = vpack.c.b16 %v3380, %v3379
      %v3398 = vpack.c.b16 %v3382, %v3381
      %v3400 = vsel %vm766, %v3383, 0
      %v3403 = vsel %vm766, %v3384, 0
      %v3406 = vsel %vm766, %v3385, 0
      %v3409 = vsel %vm766, %v3386, 0
      %v3412 = vsel %vm766, %v3387, 0
      %v3415 = vsel %vm766, %v3388, 0
      %v3418 = vsel %vm766, %v3389, 0
      %v3421 = vsel %vm766, %v3390, 0
      %v3424 = vsel %vm766, %v3391, 0
      %v3427 = vsel %vm766, %v3392, 0
      %v3430 = vsel %vm766, %v3393, 0
      %v3433 = vsel %vm766, %v3394, 0
      %v3436 = vsel %vm766, %v3395, 0
      %v3439 = vsel %vm766, %v3396, 0
      %v3442 = vsel %vm766, %v3397, 0
      %v3445 = vsel %vm766, %v3398, 0
      %v3448 = vsel %vm815, %v3318, 0
      %3450 = vmatprep.subr.bf16.mxu0 0
      %3451 = vmatpush1.bf16.msra.mxu0 %v3448
      %3452 = vmatprep.subr.bf16.mxu0 0
      %3453 = vmatpush1.bf16.msra.mxu0 0
      %3454 = vmatprep.subr.bf16.mxu0 0
      %3455 = vmatpush1.bf16.msra.mxu0 0
      %3456 = vmatprep.subr.bf16.mxu0 0
      %3457 = vmatpush1.bf16.msra.mxu0 0
      %3458 = vmatprep.subr.bf16.mxu0 0
      %3459 = vmatpush1.bf16.msra.mxu0 0
      %3460 = vmatprep.subr.bf16.mxu0 0
      %3461 = vmatpush1.bf16.msra.mxu0 0
      %3462 = vmatprep.subr.bf16.mxu0 0
      %3463 = vmatpush1.bf16.msra.mxu0 0
      %3464 = vmatprep.subr.bf16.mxu0 0
      %3465 = vmatpush1.bf16.msra.mxu0 0
      %3466 = vmatprep.subr.bf16.mxu0 0
      %3467 = vmatpush1.bf16.msra.mxu0 0
      %3468 = vmatprep.subr.bf16.mxu0 0
      %3469 = vmatpush1.bf16.msra.mxu0 0
      %3470 = vmatprep.subr.bf16.mxu0 0
      %3471 = vmatpush1.bf16.msra.mxu0 0
      %3472 = vmatprep.subr.bf16.mxu0 0
      %3473 = vmatpush1.bf16.msra.mxu0 0
      %3474 = vmatprep.subr.bf16.mxu0 0
      %3475 = vmatpush1.bf16.msra.mxu0 0
      %3476 = vmatprep.subr.bf16.mxu0 0
      %3477 = vmatpush1.bf16.msra.mxu0 0
      %3478 = vmatprep.subr.bf16.mxu0 0
      %3479 = vmatpush1.bf16.msra.mxu0 0
      %3480 = vmatprep.subr.bf16.mxu0 0
      %3481 = vmatpush1.bf16.msra.mxu0 0
      %3482 = vmatprep.mubr.bf16.mxu0 0
      %3483 = vmatmul.mubr.bf16.gmra.mrb[0].mxu0 %v3400
      %v3484 = vpop.f32.mrb[0].mxu0
      %v3485 = vadd.f32 0.0, %v3484
      %v3486 = vpop.f32.mrb[0].mxu0
      %v3487 = vpop.f32.mrb[0].mxu0
      %v3488 = vadd.f32 0.0, %v3487
      %v3489 = vpop.f32.mrb[0].mxu0
      %3490 = vmatprep.mubr.bf16.mxu0 0
      %3491 = vmatmul.mubr.bf16.gmra.mrb[0].mxu0 %v3403
      %v3492 = vpop.f32.mrb[0].mxu0
      %v3493 = vadd.f32 0.0, %v3492
      %v3494 = vpop.f32.mrb[0].mxu0
      %v3495 = vpop.f32.mrb[0].mxu0
      %v3496 = vadd.f32 0.0, %v3495
      %v3497 = vpop.f32.mrb[0].mxu0
      %3498 = vmatprep.mubr.bf16.mxu0 0
      %3499 = vmatmul.mubr.bf16.gmra.mrb[0].mxu0 %v3406
      %v3500 = vpop.f32.mrb[0].mxu0
      %v3501 = vadd.f32 0.0, %v3500
      %v3502 = vpop.f32.mrb[0].mxu0
      %v3503 = vpop.f32.mrb[0].mxu0
      %v3504 = vadd.f32 0.0, %v3503
      %v3505 = vpop.f32.mrb[0].mxu0
      %3506 = vmatprep.mubr.bf16.mxu0 0
      %3507 = vmatmul.mubr.bf16.gmra.mrb[0].mxu0 %v3409
      %v3508 = vpop.f32.mrb[0].mxu0
      %v3509 = vadd.f32 0.0, %v3508
      %v3510 = vpop.f32.mrb[0].mxu0
      %v3511 = vpop.f32.mrb[0].mxu0
      %v3512 = vadd.f32 0.0, %v3511
      %v3513 = vpop.f32.mrb[0].mxu0
      %3514 = vmatprep.mubr.bf16.mxu0 0
      %3515 = vmatmul.mubr.bf16.gmra.mrb[0].mxu0 %v3412
      %v3516 = vpop.f32.mrb[0].mxu0
      %v3517 = vadd.f32 0.0, %v3516
      %v3518 = vpop.f32.mrb[0].mxu0
      %v3519 = vpop.f32.mrb[0].mxu0
      %v3520 = vadd.f32 0.0, %v3519
      %v3521 = vpop.f32.mrb[0].mxu0
      %3522 = vmatprep.mubr.bf16.mxu0 0
      %3523 = vmatmul.mubr.bf16.gmra.mrb[0].mxu0 %v3415
      %v3524 = vpop.f32.mrb[0].mxu0
      %v3525 = vadd.f32 0.0, %v3524
      %v3526 = vpop.f32.mrb[0].mxu0
      %v3527 = vpop.f32.mrb[0].mxu0
      %v3528 = vadd.f32 0.0, %v3527
      %v3529 = vpop.f32.mrb[0].mxu0
      %3530 = vmatprep.mubr.bf16.mxu0 0
      %3531 = vmatmul.mubr.bf16.gmra.mrb[0].mxu0 %v3418
      %v3532 = vpop.f32.mrb[0].mxu0
      %v3533 = vadd.f32 0.0, %v3532
      %v3534 = vpop.f32.mrb[0].mxu0
      %v3535 = vpop.f32.mrb[0].mxu0
      %v3536 = vadd.f32 0.0, %v3535
      %v3537 = vpop.f32.mrb[0].mxu0
      %3538 = vmatprep.mubr.bf16.mxu0 0
      %3539 = vmatmul.mubr.bf16.gmra.mrb[0].mxu0 %v3421
      %v3540 = vpop.f32.mrb[0].mxu0
      %v3541 = vadd.f32 0.0, %v3540
      %v3542 = vpop.f32.mrb[0].mxu0
      %v3543 = vpop.f32.mrb[0].mxu0
      %v3544 = vadd.f32 0.0, %v3543
      %v3545 = vpop.f32.mrb[0].mxu0
      %3546 = vmatprep.mubr.bf16.mxu0 0
      %3547 = vmatmul.mubr.bf16.gmra.mrb[0].mxu0 %v3424
      %v3548 = vpop.f32.mrb[0].mxu0
      %v3549 = vadd.f32 0.0, %v3548
      %v3550 = vpop.f32.mrb[0].mxu0
      %v3551 = vpop.f32.mrb[0].mxu0
      %v3552 = vadd.f32 0.0, %v3551
      %v3553 = vpop.f32.mrb[0].mxu0
      %3554 = vmatprep.mubr.bf16.mxu0 0
      %3555 = vmatmul.mubr.bf16.gmra.mrb[0].mxu0 %v3427
      %v3556 = vpop.f32.mrb[0].mxu0
      %v3557 = vadd.f32 0.0, %v3556
      %v3558 = vpop.f32.mrb[0].mxu0
      %v3559 = vpop.f32.mrb[0].mxu0
      %v3560 = vadd.f32 0.0, %v3559
      %v3561 = vpop.f32.mrb[0].mxu0
      %3562 = vmatprep.mubr.bf16.mxu0 0
      %3563 = vmatmul.mubr.bf16.gmra.mrb[0].mxu0 %v3430
      %v3564 = vpop.f32.mrb[0].mxu0
      %v3565 = vadd.f32 0.0, %v3564
      %v3566 = vpop.f32.mrb[0].mxu0
      %v3567 = vpop.f32.mrb[0].mxu0
      %v3568 = vadd.f32 0.0, %v3567
      %v3569 = vpop.f32.mrb[0].mxu0
      %3570 = vmatprep.mubr.bf16.mxu0 0
      %3571 = vmatmul.mubr.bf16.gmra.mrb[0].mxu0 %v3433
      %v3572 = vpop.f32.mrb[0].mxu0
      %v3573 = vadd.f32 0.0, %v3572
      %v3574 = vpop.f32.mrb[0].mxu0
      %v3575 = vpop.f32.mrb[0].mxu0
      %v3576 = vadd.f32 0.0, %v3575
      %v3577 = vpop.f32.mrb[0].mxu0
      %3578 = vmatprep.mubr.bf16.mxu0 0
      %3579 = vmatmul.mubr.bf16.gmra.mrb[0].mxu0 %v3436
      %v3580 = vpop.f32.mrb[0].mxu0
      %v3581 = vadd.f32 0.0, %v3580
      %v3582 = vpop.f32.mrb[0].mxu0
      %v3583 = vpop.f32.mrb[0].mxu0
      %v3584 = vadd.f32 0.0, %v3583
      %v3585 = vpop.f32.mrb[0].mxu0
      %3586 = vmatprep.mubr.bf16.mxu0 0
      %3587 = vmatmul.mubr.bf16.gmra.mrb[0].mxu0 %v3439
      %v3588 = vpop.f32.mrb[0].mxu0
      %v3589 = vadd.f32 0.0, %v3588
      %v3590 = vpop.f32.mrb[0].mxu0
      %v3591 = vpop.f32.mrb[0].mxu0
      %v3592 = vadd.f32 0.0, %v3591
      %v3593 = vpop.f32.mrb[0].mxu0
      %3594 = vmatprep.mubr.bf16.mxu0 0
      %3595 = vmatmul.mubr.bf16.gmra.mrb[0].mxu0 %v3442
      %v3596 = vpop.f32.mrb[0].mxu0
      %v3597 = vadd.f32 0.0, %v3596
      %v3598 = vpop.f32.mrb[0].mxu0
      %v3599 = vpop.f32.mrb[0].mxu0
      %v3600 = vadd.f32 0.0, %v3599
      %v3601 = vpop.f32.mrb[0].mxu0
      %3602 = vmatprep.mubr.bf16.mxu0 0
      %3603 = vmatmul.mubr.bf16.gmra.mrb[0].mxu0 %v3445
      %v3604 = vpop.f32.mrb[0].mxu0
      %v3605 = vadd.f32 0.0, %v3604
      %v3606 = vpop.f32.mrb[0].mxu0
      %v3607 = vpop.f32.mrb[0].mxu0
      %v3608 = vadd.f32 0.0, %v3607
      %v3609 = vpop.f32.mrb[0].mxu0
      %3610 = vdwg.mxu0
      %v3611 = vadd.f32 %v3252, %v3485
      %v3612 = vadd.f32 %v3253, %v3488
      %v3613 = vadd.f32 %v3254, %v3493
      %v3614 = vadd.f32 %v3255, %v3496
      %v3615 = vadd.f32 %v3256, %v3501
      %v3616 = vadd.f32 %v3257, %v3504
      %v3617 = vadd.f32 %v3258, %v3509
      %v3618 = vadd.f32 %v3259, %v3512
      %v3619 = vadd.f32 %v3260, %v3517
      %v3620 = vadd.f32 %v3261, %v3520
      %v3621 = vadd.f32 %v3262, %v3525
      %v3622 = vadd.f32 %v3263, %v3528
      %v3623 = vadd.f32 %v3264, %v3533
      %v3624 = vadd.f32 %v3265, %v3536
      %v3625 = vadd.f32 %v3266, %v3541
      %v3626 = vadd.f32 %v3267, %v3544
      %v3627 = vadd.f32 %v3268, %v3549
      %v3628 = vadd.f32 %v3269, %v3552
      %v3629 = vadd.f32 %v3270, %v3557
      %v3630 = vadd.f32 %v3271, %v3560
      %v3631 = vadd.f32 %v3272, %v3565
      %v3632 = vadd.f32 %v3273, %v3568
      %v3633 = vadd.f32 %v3274, %v3573
      %v3634 = vadd.f32 %v3275, %v3576
      %v3635 = vadd.f32 %v3276, %v3581
      %v3636 = vadd.f32 %v3277, %v3584
      %v3637 = vadd.f32 %v3278, %v3589
      %v3638 = vadd.f32 %v3279, %v3592
      %v3639 = vadd.f32 %v3280, %v3597
      %v3640 = vadd.f32 %v3281, %v3600
      %v3641 = vadd.f32 %v3282, %v3605
      %v3642 = vadd.f32 %v3283, %v3608
      %v3643 = vld [vmem:[%s3284] sm:$0xf]
      %v3644 = vld [vmem:[%s3284 + $0x4] sm:$0xf]
      %v3645 = vld [vmem:[%s3284 + $0x8] sm:$0x1]
      %v3646 = vld [vmem:[%s3284 + $0xc] sm:$0xf]
      %v3647 = vld [vmem:[%s3284 + $0x10] sm:$0xf]
      %v3648 = vld [vmem:[%s3284 + $0x14] sm:$0x1]
      %v3649 = vld [vmem:[%s3284 + $0x18] sm:$0xf]
      %v3650 = vld [vmem:[%s3284 + $0x1c] sm:$0xf]
      %v3651 = vld [vmem:[%s3284 + $0x20] sm:$0x1]
      %v3652 = vld [vmem:[%s3284 + $0x24] sm:$0xf]
      %v3653 = vld [vmem:[%s3284 + $0x28] sm:$0xf]
      %v3654 = vld [vmem:[%s3284 + $0x2c] sm:$0x1]
      %v3655 = vld [vmem:[%s3284 + $0x30] sm:$0xf]
      %v3656 = vld [vmem:[%s3284 + $0x34] sm:$0xf]
      %v3657 = vld [vmem:[%s3284 + $0x38] sm:$0x1]
      %v3658 = vld [vmem:[%s3284 + $0x3c] sm:$0xf]
      %v3659 = vld [vmem:[%s3284 + $0x40] sm:$0xf]
      %v3660 = vld [vmem:[%s3284 + $0x44] sm:$0x1]
      %v3661 = vld [vmem:[%s3284 + $0x48] sm:$0xf]
      %v3662 = vld [vmem:[%s3284 + $0x4c] sm:$0xf]
      %v3663 = vld [vmem:[%s3284 + $0x50] sm:$0x1]
      %v3664 = vld [vmem:[%s3284 + $0x54] sm:$0xf]
      %v3665 = vld [vmem:[%s3284 + $0x58] sm:$0xf]
      %v3666 = vld [vmem:[%s3284 + $0x5c] sm:$0x1]
      %v3667 = vld [vmem:[%s3284 + $0x60] sm:$0xf]
      %v3668 = vld [vmem:[%s3284 + $0x64] sm:$0xf]
      %v3669 = vld [vmem:[%s3284 + $0x68] sm:$0x1]
      %v3670 = vld [vmem:[%s3284 + $0x6c] sm:$0xf]
      %v3671 = vld [vmem:[%s3284 + $0x70] sm:$0xf]
      %v3672 = vld [vmem:[%s3284 + $0x74] sm:$0x1]
      %v3673 = vld [vmem:[%s3284 + $0x78] sm:$0xf]
      %v3674 = vld [vmem:[%s3284 + $0x7c] sm:$0xf]
      %v3675 = vld [vmem:[%s3284 + $0x80] sm:$0x1]
      %v3676 = vld [vmem:[%s3284 + $0x84] sm:$0xf]
      %v3677 = vld [vmem:[%s3284 + $0x88] sm:$0xf]
      %v3678 = vld [vmem:[%s3284 + $0x8c] sm:$0x1]
      %v3679 = vld [vmem:[%s3284 + $0x90] sm:$0xf]
      %v3680 = vld [vmem:[%s3284 + $0x94] sm:$0xf]
      %v3681 = vld [vmem:[%s3284 + $0x98] sm:$0x1]
      %v3682 = vld [vmem:[%s3284 + $0x9c] sm:$0xf]
      %v3683 = vld [vmem:[%s3284 + $0xa0] sm:$0xf]
      %v3684 = vld [vmem:[%s3284 + $0xa4] sm:$0x1]
      %v3685 = vld [vmem:[%s3284 + $0xa8] sm:$0xf]
      %v3686 = vld [vmem:[%s3284 + $0xac] sm:$0xf]
      %v3687 = vld [vmem:[%s3284 + $0xb0] sm:$0x1]
      %v3688 = vld [vmem:[%s3284 + $0xb4] sm:$0xf]
      %v3689 = vld [vmem:[%s3284 + $0xb8] sm:$0xf]
      %v3690 = vld [vmem:[%s3284 + $0xbc] sm:$0x1]
      %v3692 = vshrl.u32 %v3643, 16
      %v3694 = vrot.slane %v3692, 4
      %v3695 = vshll.u32 %v3643, 16
      %v3697 = vrot.slane %v3695, 5
      %v3698 = vor.u32 %v3694, %v3697
      %v3699 = vrot.slane %v3698, 4
      %v3701 = vshll.u32 %v3644, 16
      %v3703 = vrot.slane %v3701, 5
      %v3704 = vsel %vm331, %v3699, %v3703
      %v3705 = vshrl.u32 %v3644, 16
      %v3707 = vrot.slane %v3705, 4
      %v3708 = vor.u32 %v3707, %v3703
      %v3709 = vrot.slane %v3708, 4
      %v3711 = vshll.u32 %v3645, 16
      %v3713 = vrot.slane %v3711, 5
      %v3714 = vsel %vm331, %v3709, %v3713
      %v3716 = vshrl.u32 %v3646, 16
      %v3718 = vrot.slane %v3716, 4
      %v3719 = vshll.u32 %v3646, 16
      %v3721 = vrot.slane %v3719, 5
      %v3722 = vor.u32 %v3718, %v3721
      %v3723 = vrot.slane %v3722, 4
      %v3725 = vshll.u32 %v3647, 16
      %v3727 = vrot.slane %v3725, 5
      %v3728 = vsel %vm331, %v3723, %v3727
      %v3729 = vshrl.u32 %v3647, 16
      %v3731 = vrot.slane %v3729, 4
      %v3732 = vor.u32 %v3731, %v3727
      %v3733 = vrot.slane %v3732, 4
      %v3735 = vshll.u32 %v3648, 16
      %v3737 = vrot.slane %v3735, 5
      %v3738 = vsel %vm331, %v3733, %v3737
      %v3740 = vshrl.u32 %v3649, 16
      %v3742 = vrot.slane %v3740, 4
      %v3743 = vshll.u32 %v3649, 16
      %v3745 = vrot.slane %v3743, 5
      %v3746 = vor.u32 %v3742, %v3745
      %v3747 = vrot.slane %v3746, 4
      %v3749 = vshll.u32 %v3650, 16
      %v3751 = vrot.slane %v3749, 5
      %v3752 = vsel %vm331, %v3747, %v3751
      %v3753 = vshrl.u32 %v3650, 16
      %v3755 = vrot.slane %v3753, 4
      %v3756 = vor.u32 %v3755, %v3751
      %v3757 = vrot.slane %v3756, 4
      %v3759 = vshll.u32 %v3651, 16
      %v3761 = vrot.slane %v3759, 5
      %v3762 = vsel %vm331, %v3757, %v3761
      %v3764 = vshrl.u32 %v3652, 16
      %v3766 = vrot.slane %v3764, 4
      %v3767 = vshll.u32 %v3652, 16
      %v3769 = vrot.slane %v3767, 5
      %v3770 = vor.u32 %v3766, %v3769
      %v3771 = vrot.slane %v3770, 4
      %v3773 = vshll.u32 %v3653, 16
      %v3775 = vrot.slane %v3773, 5
      %v3776 = vsel %vm331, %v3771, %v3775
      %v3777 = vshrl.u32 %v3653, 16
      %v3779 = vrot.slane %v3777, 4
      %v3780 = vor.u32 %v3779, %v3775
      %v3781 = vrot.slane %v3780, 4
      %v3783 = vshll.u32 %v3654, 16
      %v3785 = vrot.slane %v3783, 5
      %v3786 = vsel %vm331, %v3781, %v3785
      %v3788 = vshrl.u32 %v3655, 16
      %v3790 = vrot.slane %v3788, 4
      %v3791 = vshll.u32 %v3655, 16
      %v3793 = vrot.slane %v3791, 5
      %v3794 = vor.u32 %v3790, %v3793
      %v3795 = vrot.slane %v3794, 4
      %v3797 = vshll.u32 %v3656, 16
      %v3799 = vrot.slane %v3797, 5
      %v3800 = vsel %vm331, %v3795, %v3799
      %v3801 = vshrl.u32 %v3656, 16
      %v3803 = vrot.slane %v3801, 4
      %v3804 = vor.u32 %v3803, %v3799
      %v3805 = vrot.slane %v3804, 4
      %v3807 = vshll.u32 %v3657, 16
      %v3809 = vrot.slane %v3807, 5
      %v3810 = vsel %vm331, %v3805, %v3809
      %v3812 = vshrl.u32 %v3658, 16
      %v3814 = vrot.slane %v3812, 4
      %v3815 = vshll.u32 %v3658, 16
      %v3817 = vrot.slane %v3815, 5
      %v3818 = vor.u32 %v3814, %v3817
      %v3819 = vrot.slane %v3818, 4
      %v3821 = vshll.u32 %v3659, 16
      %v3823 = vrot.slane %v3821, 5
      %v3824 = vsel %vm331, %v3819, %v3823
      %v3825 = vshrl.u32 %v3659, 16
      %v3827 = vrot.slane %v3825, 4
      %v3828 = vor.u32 %v3827, %v3823
      %v3829 = vrot.slane %v3828, 4
      %v3831 = vshll.u32 %v3660, 16
      %v3833 = vrot.slane %v3831, 5
      %v3834 = vsel %vm331, %v3829, %v3833
      %v3836 = vshrl.u32 %v3661, 16
      %v3838 = vrot.slane %v3836, 4
      %v3839 = vshll.u32 %v3661, 16
      %v3841 = vrot.slane %v3839, 5
      %v3842 = vor.u32 %v3838, %v3841
      %v3843 = vrot.slane %v3842, 4
      %v3845 = vshll.u32 %v3662, 16
      %v3847 = vrot.slane %v3845, 5
      %v3848 = vsel %vm331, %v3843, %v3847
      %v3849 = vshrl.u32 %v3662, 16
      %v3851 = vrot.slane %v3849, 4
      %v3852 = vor.u32 %v3851, %v3847
      %v3853 = vrot.slane %v3852, 4
      %v3855 = vshll.u32 %v3663, 16
      %v3857 = vrot.slane %v3855, 5
      %v3858 = vsel %vm331, %v3853, %v3857
      %v3860 = vshrl.u32 %v3664, 16
      %v3862 = vrot.slane %v3860, 4
      %v3863 = vshll.u32 %v3664, 16
      %v3865 = vrot.slane %v3863, 5
      %v3866 = vor.u32 %v3862, %v3865
      %v3867 = vrot.slane %v3866, 4
      %v3869 = vshll.u32 %v3665, 16
      %v3871 = vrot.slane %v3869, 5
      %v3872 = vsel %vm331, %v3867, %v3871
      %v3873 = vshrl.u32 %v3665, 16
      %v3875 = vrot.slane %v3873, 4
      %v3876 = vor.u32 %v3875, %v3871
      %v3877 = vrot.slane %v3876, 4
      %v3879 = vshll.u32 %v3666, 16
      %v3881 = vrot.slane %v3879, 5
      %v3882 = vsel %vm331, %v3877, %v3881
      %v3884 = vshrl.u32 %v3667, 16
      %v3886 = vrot.slane %v3884, 4
      %v3887 = vshll.u32 %v3667, 16
      %v3889 = vrot.slane %v3887, 5
      %v3890 = vor.u32 %v3886, %v3889
      %v3891 = vrot.slane %v3890, 4
      %v3893 = vshll.u32 %v3668, 16
      %v3895 = vrot.slane %v3893, 5
      %v3896 = vsel %vm331, %v3891, %v3895
      %v3897 = vshrl.u32 %v3668, 16
      %v3899 = vrot.slane %v3897, 4
      %v3900 = vor.u32 %v3899, %v3895
      %v3901 = vrot.slane %v3900, 4
      %v3903 = vshll.u32 %v3669, 16
      %v3905 = vrot.slane %v3903, 5
      %v3906 = vsel %vm331, %v3901, %v3905
      %v3908 = vshrl.u32 %v3670, 16
      %v3910 = vrot.slane %v3908, 4
      %v3911 = vshll.u32 %v3670, 16
      %v3913 = vrot.slane %v3911, 5
      %v3914 = vor.u32 %v3910, %v3913
      %v3915 = vrot.slane %v3914, 4
      %v3917 = vshll.u32 %v3671, 16
      %v3919 = vrot.slane %v3917, 5
      %v3920 = vsel %vm331, %v3915, %v3919
      %v3921 = vshrl.u32 %v3671, 16
      %v3923 = vrot.slane %v3921, 4
      %v3924 = vor.u32 %v3923, %v3919
      %v3925 = vrot.slane %v3924, 4
      %v3927 = vshll.u32 %v3672, 16
      %v3929 = vrot.slane %v3927, 5
      %v3930 = vsel %vm331, %v3925, %v3929
      %v3932 = vshrl.u32 %v3673, 16
      %v3934 = vrot.slane %v3932, 4
      %v3935 = vshll.u32 %v3673, 16
      %v3937 = vrot.slane %v3935, 5
      %v3938 = vor.u32 %v3934, %v3937
      %v3939 = vrot.slane %v3938, 4
      %v3941 = vshll.u32 %v3674, 16
      %v3943 = vrot.slane %v3941, 5
      %v3944 = vsel %vm331, %v3939, %v3943
      %v3945 = vshrl.u32 %v3674, 16
      %v3947 = vrot.slane %v3945, 4
      %v3948 = vor.u32 %v3947, %v3943
      %v3949 = vrot.slane %v3948, 4
      %v3951 = vshll.u32 %v3675, 16
      %v3953 = vrot.slane %v3951, 5
      %v3954 = vsel %vm331, %v3949, %v3953
      %v3956 = vshrl.u32 %v3676, 16
      %v3958 = vrot.slane %v3956, 4
      %v3959 = vshll.u32 %v3676, 16
      %v3961 = vrot.slane %v3959, 5
      %v3962 = vor.u32 %v3958, %v3961
      %v3963 = vrot.slane %v3962, 4
      %v3965 = vshll.u32 %v3677, 16
      %v3967 = vrot.slane %v3965, 5
      %v3968 = vsel %vm331, %v3963, %v3967
      %v3969 = vshrl.u32 %v3677, 16
      %v3971 = vrot.slane %v3969, 4
      %v3972 = vor.u32 %v3971, %v3967
      %v3973 = vrot.slane %v3972, 4
      %v3975 = vshll.u32 %v3678, 16
      %v3977 = vrot.slane %v3975, 5
      %v3978 = vsel %vm331, %v3973, %v3977
      %v3980 = vshrl.u32 %v3679, 16
      %v3982 = vrot.slane %v3980, 4
      %v3983 = vshll.u32 %v3679, 16
      %v3985 = vrot.slane %v3983, 5
      %v3986 = vor.u32 %v3982, %v3985
      %v3987 = vrot.slane %v3986, 4
      %v3989 = vshll.u32 %v3680, 16
      %v3991 = vrot.slane %v3989, 5
      %v3992 = vsel %vm331, %v3987, %v3991
      %v3993 = vshrl.u32 %v3680, 16
      %v3995 = vrot.slane %v3993, 4
      %v3996 = vor.u32 %v3995, %v3991
      %v3997 = vrot.slane %v3996, 4
      %v3999 = vshll.u32 %v3681, 16
      %v4001 = vrot.slane %v3999, 5
      %v4002 = vsel %vm331, %v3997, %v4001
      %v4004 = vshrl.u32 %v3682, 16
      %v4006 = vrot.slane %v4004, 4
      %v4007 = vshll.u32 %v3682, 16
      %v4009 = vrot.slane %v4007, 5
      %v4010 = vor.u32 %v4006, %v4009
      %v4011 = vrot.slane %v4010, 4
      %v4013 = vshll.u32 %v3683, 16
      %v4015 = vrot.slane %v4013, 5
      %v4016 = vsel %vm331, %v4011, %v4015
      %v4017 = vshrl.u32 %v3683, 16
      %v4019 = vrot.slane %v4017, 4
      %v4020 = vor.u32 %v4019, %v4015
      %v4021 = vrot.slane %v4020, 4
      %v4023 = vshll.u32 %v3684, 16
      %v4025 = vrot.slane %v4023, 5
      %v4026 = vsel %vm331, %v4021, %v4025
      %v4028 = vshrl.u32 %v3685, 16
      %v4030 = vrot.slane %v4028, 4
      %v4031 = vshll.u32 %v3685, 16
      %v4033 = vrot.slane %v4031, 5
      %v4034 = vor.u32 %v4030, %v4033
      %v4035 = vrot.slane %v4034, 4
      %v4037 = vshll.u32 %v3686, 16
      %v4039 = vrot.slane %v4037, 5
      %v4040 = vsel %vm331, %v4035, %v4039
      %v4041 = vshrl.u32 %v3686, 16
      %v4043 = vrot.slane %v4041, 4
      %v4044 = vor.u32 %v4043, %v4039
      %v4045 = vrot.slane %v4044, 4
      %v4047 = vshll.u32 %v3687, 16
      %v4049 = vrot.slane %v4047, 5
      %v4050 = vsel %vm331, %v4045, %v4049
      %v4052 = vshrl.u32 %v3688, 16
      %v4054 = vrot.slane %v4052, 4
      %v4055 = vshll.u32 %v3688, 16
      %v4057 = vrot.slane %v4055, 5
      %v4058 = vor.u32 %v4054, %v4057
      %v4059 = vrot.slane %v4058, 4
      %v4061 = vshll.u32 %v3689, 16
      %v4063 = vrot.slane %v4061, 5
      %v4064 = vsel %vm331, %v4059, %v4063
      %v4065 = vshrl.u32 %v3689, 16
      %v4067 = vrot.slane %v4065, 4
      %v4068 = vor.u32 %v4067, %v4063
      %v4069 = vrot.slane %v4068, 4
      %v4071 = vshll.u32 %v3690, 16
      %v4073 = vrot.slane %v4071, 5
      %v4074 = vsel %vm331, %v4069, %v4073
      %s4075 = scalar_lea.vmem %s1, 14
      %v4076 = vld [vmem:[%s4075] sm:$0x3]
      %v4077 = vunpack.c.l.b16 %v3704
      %v4078 = vunpack.c.l.b16 %v3714
      %v4079 = vunpack.c.l.b16 %v3728
      %v4080 = vunpack.c.l.b16 %v3738
      %v4081 = vunpack.c.l.b16 %v3752
      %v4082 = vunpack.c.l.b16 %v3762
      %v4083 = vunpack.c.l.b16 %v3776
      %v4084 = vunpack.c.l.b16 %v3786
      %v4085 = vunpack.c.l.b16 %v3800
      %v4086 = vunpack.c.l.b16 %v3810
      %v4087 = vunpack.c.l.b16 %v3824
      %v4088 = vunpack.c.l.b16 %v3834
      %v4089 = vunpack.c.l.b16 %v3848
      %v4090 = vunpack.c.l.b16 %v3858
      %v4091 = vunpack.c.l.b16 %v3872
      %v4092 = vunpack.c.l.b16 %v3882
      %v4093 = vunpack.c.l.b16 %v3896
      %v4094 = vunpack.c.l.b16 %v3906
      %v4095 = vunpack.c.l.b16 %v3920
      %v4096 = vunpack.c.l.b16 %v3930
      %v4097 = vunpack.c.l.b16 %v3944
      %v4098 = vunpack.c.l.b16 %v3954
      %v4099 = vunpack.c.l.b16 %v3968
      %v4100 = vunpack.c.l.b16 %v3978
      %v4101 = vunpack.c.l.b16 %v3992
      %v4102 = vunpack.c.l.b16 %v4002
      %v4103 = vunpack.c.l.b16 %v4016
      %v4104 = vunpack.c.l.b16 %v4026
      %v4105 = vunpack.c.l.b16 %v4040
      %v4106 = vunpack.c.l.b16 %v4050
      %v4107 = vunpack.c.l.b16 %v4064
      %v4108 = vunpack.c.l.b16 %v4074
      %v4109 = vpack.c.b16 %v4078, %v4077
      %v4110 = vpack.c.b16 %v4080, %v4079
      %v4111 = vpack.c.b16 %v4082, %v4081
      %v4112 = vpack.c.b16 %v4084, %v4083
      %v4113 = vpack.c.b16 %v4086, %v4085
      %v4114 = vpack.c.b16 %v4088, %v4087
      %v4115 = vpack.c.b16 %v4090, %v4089
      %v4116 = vpack.c.b16 %v4092, %v4091
      %v4117 = vpack.c.b16 %v4094, %v4093
      %v4118 = vpack.c.b16 %v4096, %v4095
      %v4119 = vpack.c.b16 %v4098, %v4097
      %v4120 = vpack.c.b16 %v4100, %v4099
      %v4121 = vpack.c.b16 %v4102, %v4101
      %v4122 = vpack.c.b16 %v4104, %v4103
      %v4123 = vpack.c.b16 %v4106, %v4105
      %v4124 = vpack.c.b16 %v4108, %v4107
      %v4126 = vsel %vm766, %v4109, 0
      %v4129 = vsel %vm766, %v4110, 0
      %v4132 = vsel %vm766, %v4111, 0
      %v4135 = vsel %vm766, %v4112, 0
      %v4138 = vsel %vm766, %v4113, 0
      %v4141 = vsel %vm766, %v4114, 0
      %v4144 = vsel %vm766, %v4115, 0
      %v4147 = vsel %vm766, %v4116, 0
      %v4150 = vsel %vm766, %v4117, 0
      %v4153 = vsel %vm766, %v4118, 0
      %v4156 = vsel %vm766, %v4119, 0
      %v4159 = vsel %vm766, %v4120, 0
      %v4162 = vsel %vm766, %v4121, 0
      %v4165 = vsel %vm766, %v4122, 0
      %v4168 = vsel %vm766, %v4123, 0
      %v4171 = vsel %vm766, %v4124, 0
      %v4174 = vsel %vm815, %v4076, 0
      %4176 = vmatprep.subr.bf16.mxu0 0
      %4177 = vmatpush1.bf16.msra.mxu0 %v4174
      %4178 = vmatprep.subr.bf16.mxu0 0
      %4179 = vmatpush1.bf16.msra.mxu0 0
      %4180 = vmatprep.subr.bf16.mxu0 0
      %4181 = vmatpush1.bf16.msra.mxu0 0
      %4182 = vmatprep.subr.bf16.mxu0 0
      %4183 = vmatpush1.bf16.msra.mxu0 0
      %4184 = vmatprep.subr.bf16.mxu0 0
      %4185 = vmatpush1.bf16.msra.mxu0 0
      %4186 = vmatprep.subr.bf16.mxu0 0
      %4187 = vmatpush1.bf16.msra.mxu0 0
      %4188 = vmatprep.subr.bf16.mxu0 0
      %4189 = vmatpush1.bf16.msra.mxu0 0
      %4190 = vmatprep.subr.bf16.mxu0 0
      %4191 = vmatpush1.bf16.msra.mxu0 0
      %4192 = vmatprep.subr.bf16.mxu0 0
      %4193 = vmatpush1.bf16.msra.mxu0 0
      %4194 = vmatprep.subr.bf16.mxu0 0
      %4195 = vmatpush1.bf16.msra.mxu0 0
      %4196 = vmatprep.subr.bf16.mxu0 0
      %4197 = vmatpush1.bf16.msra.mxu0 0
      %4198 = vmatprep.subr.bf16.mxu0 0
      %4199 = vmatpush1.bf16.msra.mxu0 0
      %4200 = vmatprep.subr.bf16.mxu0 0
      %4201 = vmatpush1.bf16.msra.mxu0 0
      %4202 = vmatprep.subr.bf16.mxu0 0
      %4203 = vmatpush1.bf16.msra.mxu0 0
      %4204 = vmatprep.subr.bf16.mxu0 0
      %4205 = vmatpush1.bf16.msra.mxu0 0
      %4206 = vmatprep.subr.bf16.mxu0 0
      %4207 = vmatpush1.bf16.msra.mxu0 0
      %4208 = vmatprep.mubr.bf16.mxu0 0
      %4209 = vmatmul.mubr.bf16.gmra.mrb[0].mxu0 %v4126
      %v4210 = vpop.f32.mrb[0].mxu0
      %v4211 = vadd.f32 0.0, %v4210
      %v4212 = vpop.f32.mrb[0].mxu0
      %v4213 = vpop.f32.mrb[0].mxu0
      %v4214 = vadd.f32 0.0, %v4213
      %v4215 = vpop.f32.mrb[0].mxu0
      %4216 = vmatprep.mubr.bf16.mxu0 0
      %4217 = vmatmul.mubr.bf16.gmra.mrb[0].mxu0 %v4129
      %v4218 = vpop.f32.mrb[0].mxu0
      %v4219 = vadd.f32 0.0, %v4218
      %v4220 = vpop.f32.mrb[0].mxu0
      %v4221 = vpop.f32.mrb[0].mxu0
      %v4222 = vadd.f32 0.0, %v4221
      %v4223 = vpop.f32.mrb[0].mxu0
      %4224 = vmatprep.mubr.bf16.mxu0 0
      %4225 = vmatmul.mubr.bf16.gmra.mrb[0].mxu0 %v4132
      %v4226 = vpop.f32.mrb[0].mxu0
      %v4227 = vadd.f32 0.0, %v4226
      %v4228 = vpop.f32.mrb[0].mxu0
      %v4229 = vpop.f32.mrb[0].mxu0
      %v4230 = vadd.f32 0.0, %v4229
      %v4231 = vpop.f32.mrb[0].mxu0
      %4232 = vmatprep.mubr.bf16.mxu0 0
      %4233 = vmatmul.mubr.bf16.gmra.mrb[0].mxu0 %v4135
      %v4234 = vpop.f32.mrb[0].mxu0
      %v4235 = vadd.f32 0.0, %v4234
      %v4236 = vpop.f32.mrb[0].mxu0
      %v4237 = vpop.f32.mrb[0].mxu0
      %v4238 = vadd.f32 0.0, %v4237
      %v4239 = vpop.f32.mrb[0].mxu0
      %4240 = vmatprep.mubr.bf16.mxu0 0
      %4241 = vmatmul.mubr.bf16.gmra.mrb[0].mxu0 %v4138
      %v4242 = vpop.f32.mrb[0].mxu0
      %v4243 = vadd.f32 0.0, %v4242
      %v4244 = vpop.f32.mrb[0].mxu0
      %v4245 = vpop.f32.mrb[0].mxu0
      %v4246 = vadd.f32 0.0, %v4245
      %v4247 = vpop.f32.mrb[0].mxu0
      %4248 = vmatprep.mubr.bf16.mxu0 0
      %4249 = vmatmul.mubr.bf16.gmra.mrb[0].mxu0 %v4141
      %v4250 = vpop.f32.mrb[0].mxu0
      %v4251 = vadd.f32 0.0, %v4250
      %v4252 = vpop.f32.mrb[0].mxu0
      %v4253 = vpop.f32.mrb[0].mxu0
      %v4254 = vadd.f32 0.0, %v4253
      %v4255 = vpop.f32.mrb[0].mxu0
      %4256 = vmatprep.mubr.bf16.mxu0 0
      %4257 = vmatmul.mubr.bf16.gmra.mrb[0].mxu0 %v4144
      %v4258 = vpop.f32.mrb[0].mxu0
      %v4259 = vadd.f32 0.0, %v4258
      %v4260 = vpop.f32.mrb[0].mxu0
      %v4261 = vpop.f32.mrb[0].mxu0
      %v4262 = vadd.f32 0.0, %v4261
      %v4263 = vpop.f32.mrb[0].mxu0
      %4264 = vmatprep.mubr.bf16.mxu0 0
      %4265 = vmatmul.mubr.bf16.gmra.mrb[0].mxu0 %v4147
      %v4266 = vpop.f32.mrb[0].mxu0
      %v4267 = vadd.f32 0.0, %v4266
      %v4268 = vpop.f32.mrb[0].mxu0
      %v4269 = vpop.f32.mrb[0].mxu0
      %v4270 = vadd.f32 0.0, %v4269
      %v4271 = vpop.f32.mrb[0].mxu0
      %4272 = vmatprep.mubr.bf16.mxu0 0
      %4273 = vmatmul.mubr.bf16.gmra.mrb[0].mxu0 %v4150
      %v4274 = vpop.f32.mrb[0].mxu0
      %v4275 = vadd.f32 0.0, %v4274
      %v4276 = vpop.f32.mrb[0].mxu0
      %v4277 = vpop.f32.mrb[0].mxu0
      %v4278 = vadd.f32 0.0, %v4277
      %v4279 = vpop.f32.mrb[0].mxu0
      %4280 = vmatprep.mubr.bf16.mxu0 0
      %4281 = vmatmul.mubr.bf16.gmra.mrb[0].mxu0 %v4153
      %v4282 = vpop.f32.mrb[0].mxu0
      %v4283 = vadd.f32 0.0, %v4282
      %v4284 = vpop.f32.mrb[0].mxu0
      %v4285 = vpop.f32.mrb[0].mxu0
      %v4286 = vadd.f32 0.0, %v4285
      %v4287 = vpop.f32.mrb[0].mxu0
      %4288 = vmatprep.mubr.bf16.mxu0 0
      %4289 = vmatmul.mubr.bf16.gmra.mrb[0].mxu0 %v4156
      %v4290 = vpop.f32.mrb[0].mxu0
      %v4291 = vadd.f32 0.0, %v4290
      %v4292 = vpop.f32.mrb[0].mxu0
      %v4293 = vpop.f32.mrb[0].mxu0
      %v4294 = vadd.f32 0.0, %v4293
      %v4295 = vpop.f32.mrb[0].mxu0
      %4296 = vmatprep.mubr.bf16.mxu0 0
      %4297 = vmatmul.mubr.bf16.gmra.mrb[0].mxu0 %v4159
      %v4298 = vpop.f32.mrb[0].mxu0
      %v4299 = vadd.f32 0.0, %v4298
      %v4300 = vpop.f32.mrb[0].mxu0
      %v4301 = vpop.f32.mrb[0].mxu0
      %v4302 = vadd.f32 0.0, %v4301
      %v4303 = vpop.f32.mrb[0].mxu0
      %4304 = vmatprep.mubr.bf16.mxu0 0
      %4305 = vmatmul.mubr.bf16.gmra.mrb[0].mxu0 %v4162
      %v4306 = vpop.f32.mrb[0].mxu0
      %v4307 = vadd.f32 0.0, %v4306
      %v4308 = vpop.f32.mrb[0].mxu0
      %v4309 = vpop.f32.mrb[0].mxu0
      %v4310 = vadd.f32 0.0, %v4309
      %v4311 = vpop.f32.mrb[0].mxu0
      %4312 = vmatprep.mubr.bf16.mxu0 0
      %4313 = vmatmul.mubr.bf16.gmra.mrb[0].mxu0 %v4165
      %v4314 = vpop.f32.mrb[0].mxu0
      %v4315 = vadd.f32 0.0, %v4314
      %v4316 = vpop.f32.mrb[0].mxu0
      %v4317 = vpop.f32.mrb[0].mxu0
      %v4318 = vadd.f32 0.0, %v4317
      %v4319 = vpop.f32.mrb[0].mxu0
      %4320 = vmatprep.mubr.bf16.mxu0 0
      %4321 = vmatmul.mubr.bf16.gmra.mrb[0].mxu0 %v4168
      %v4322 = vpop.f32.mrb[0].mxu0
      %v4323 = vadd.f32 0.0, %v4322
      %v4324 = vpop.f32.mrb[0].mxu0
      %v4325 = vpop.f32.mrb[0].mxu0
      %v4326 = vadd.f32 0.0, %v4325
      %v4327 = vpop.f32.mrb[0].mxu0
      %4328 = vmatprep.mubr.bf16.mxu0 0
      %4329 = vmatmul.mubr.bf16.gmra.mrb[0].mxu0 %v4171
      %v4330 = vpop.f32.mrb[0].mxu0
      %v4331 = vadd.f32 0.0, %v4330
      %v4332 = vpop.f32.mrb[0].mxu0
      %v4333 = vpop.f32.mrb[0].mxu0
      %v4334 = vadd.f32 0.0, %v4333
      %v4335 = vpop.f32.mrb[0].mxu0
      %4336 = vdwg.mxu0
      %v4337 = vadd.f32 %v3611, %v4211
      %v4338 = vadd.f32 %v3612, %v4214
      %v4339 = vadd.f32 %v3613, %v4219
      %v4340 = vadd.f32 %v3614, %v4222
      %v4341 = vadd.f32 %v3615, %v4227
      %v4342 = vadd.f32 %v3616, %v4230
      %v4343 = vadd.f32 %v3617, %v4235
      %v4344 = vadd.f32 %v3618, %v4238
      %v4345 = vadd.f32 %v3619, %v4243
      %v4346 = vadd.f32 %v3620, %v4246
      %v4347 = vadd.f32 %v3621, %v4251
      %v4348 = vadd.f32 %v3622, %v4254
      %v4349 = vadd.f32 %v3623, %v4259
      %v4350 = vadd.f32 %v3624, %v4262
      %v4351 = vadd.f32 %v3625, %v4267
      %v4352 = vadd.f32 %v3626, %v4270
      %v4353 = vadd.f32 %v3627, %v4275
      %v4354 = vadd.f32 %v3628, %v4278
      %v4355 = vadd.f32 %v3629, %v4283
      %v4356 = vadd.f32 %v3630, %v4286
      %v4357 = vadd.f32 %v3631, %v4291
      %v4358 = vadd.f32 %v3632, %v4294
      %v4359 = vadd.f32 %v3633, %v4299
      %v4360 = vadd.f32 %v3634, %v4302
      %v4361 = vadd.f32 %v3635, %v4307
      %v4362 = vadd.f32 %v3636, %v4310
      %v4363 = vadd.f32 %v3637, %v4315
      %v4364 = vadd.f32 %v3638, %v4318
      %v4365 = vadd.f32 %v3639, %v4323
      %v4366 = vadd.f32 %v3640, %v4326
      %v4367 = vadd.f32 %v3641, %v4331
      %v4368 = vadd.f32 %v3642, %v4334
      %v4369 = vld [vmem:[%s3284] sm:$0xe]
      %v4370 = vld [vmem:[%s3284 + $0xc] sm:$0xe]
      %v4371 = vld [vmem:[%s3284 + $0x18] sm:$0xe]
      %v4372 = vld [vmem:[%s3284 + $0x24] sm:$0xe]
      %v4373 = vld [vmem:[%s3284 + $0x30] sm:$0xe]
      %v4374 = vld [vmem:[%s3284 + $0x3c] sm:$0xe]
      %v4375 = vld [vmem:[%s3284 + $0x48] sm:$0xe]
      %v4376 = vld [vmem:[%s3284 + $0x54] sm:$0xe]
      %v4377 = vld [vmem:[%s3284 + $0x60] sm:$0xe]
      %v4378 = vld [vmem:[%s3284 + $0x6c] sm:$0xe]
      %v4379 = vld [vmem:[%s3284 + $0x78] sm:$0xe]
      %v4380 = vld [vmem:[%s3284 + $0x84] sm:$0xe]
      %v4381 = vld [vmem:[%s3284 + $0x90] sm:$0xe]
      %v4382 = vld [vmem:[%s3284 + $0x9c] sm:$0xe]
      %v4383 = vld [vmem:[%s3284 + $0xa8] sm:$0xe]
      %v4384 = vld [vmem:[%s3284 + $0xb4] sm:$0xe]
      %v4433 = vrot.slane %v4369, 5
      %v4434 = vrot.slane %v4433, 4
      %v4435 = vrot.slane %v3644, 5
      %v4436 = vsel %vm1322, %v4434, %v4435
      %v4437 = vrot.slane %v4435, 4
      %v4438 = vrot.slane %v3645, 5
      %v4439 = vsel %vm1322, %v4437, %v4438
      %v4440 = vrot.slane %v4370, 5
      %v4441 = vrot.slane %v4440, 4
      %v4442 = vrot.slane %v3647, 5
      %v4443 = vsel %vm1322, %v4441, %v4442
      %v4444 = vrot.slane %v4442, 4
      %v4445 = vrot.slane %v3648, 5
      %v4446 = vsel %vm1322, %v4444, %v4445
      %v4447 = vrot.slane %v4371, 5
      %v4448 = vrot.slane %v4447, 4
      %v4449 = vrot.slane %v3650, 5
      %v4450 = vsel %vm1322, %v4448, %v4449
      %v4451 = vrot.slane %v4449, 4
      %v4452 = vrot.slane %v3651, 5
      %v4453 = vsel %vm1322, %v4451, %v4452
      %v4454 = vrot.slane %v4372, 5
      %v4455 = vrot.slane %v4454, 4
      %v4456 = vrot.slane %v3653, 5
      %v4457 = vsel %vm1322, %v4455, %v4456
      %v4458 = vrot.slane %v4456, 4
      %v4459 = vrot.slane %v3654, 5
      %v4460 = vsel %vm1322, %v4458, %v4459
      %v4461 = vrot.slane %v4373, 5
      %v4462 = vrot.slane %v4461, 4
      %v4463 = vrot.slane %v3656, 5
      %v4464 = vsel %vm1322, %v4462, %v4463
      %v4465 = vrot.slane %v4463, 4
      %v4466 = vrot.slane %v3657, 5
      %v4467 = vsel %vm1322, %v4465, %v4466
      %v4468 = vrot.slane %v4374, 5
      %v4469 = vrot.slane %v4468, 4
      %v4470 = vrot.slane %v3659, 5
      %v4471 = vsel %vm1322, %v4469, %v4470
      %v4472 = vrot.slane %v4470, 4
      %v4473 = vrot.slane %v3660, 5
      %v4474 = vsel %vm1322, %v4472, %v4473
      %v4475 = vrot.slane %v4375, 5
      %v4476 = vrot.slane %v4475, 4
      %v4477 = vrot.slane %v3662, 5
      %v4478 = vsel %vm1322, %v4476, %v4477
      %v4479 = vrot.slane %v4477, 4
      %v4480 = vrot.slane %v3663, 5
      %v4481 = vsel %vm1322, %v4479, %v4480
      %v4482 = vrot.slane %v4376, 5
      %v4483 = vrot.slane %v4482, 4
      %v4484 = vrot.slane %v3665, 5
      %v4485 = vsel %vm1322, %v4483, %v4484
      %v4486 = vrot.slane %v4484, 4
      %v4487 = vrot.slane %v3666, 5
      %v4488 = vsel %vm1322, %v4486, %v4487
      %v4489 = vrot.slane %v4377, 5
      %v4490 = vrot.slane %v4489, 4
      %v4491 = vrot.slane %v3668, 5
      %v4492 = vsel %vm1322, %v4490, %v4491
      %v4493 = vrot.slane %v4491, 4
      %v4494 = vrot.slane %v3669, 5
      %v4495 = vsel %vm1322, %v4493, %v4494
      %v4496 = vrot.slane %v4378, 5
      %v4497 = vrot.slane %v4496, 4
      %v4498 = vrot.slane %v3671, 5
      %v4499 = vsel %vm1322, %v4497, %v4498
      %v4500 = vrot.slane %v4498, 4
      %v4501 = vrot.slane %v3672, 5
      %v4502 = vsel %vm1322, %v4500, %v4501
      %v4503 = vrot.slane %v4379, 5
      %v4504 = vrot.slane %v4503, 4
      %v4505 = vrot.slane %v3674, 5
      %v4506 = vsel %vm1322, %v4504, %v4505
      %v4507 = vrot.slane %v4505, 4
      %v4508 = vrot.slane %v3675, 5
      %v4509 = vsel %vm1322, %v4507, %v4508
      %v4510 = vrot.slane %v4380, 5
      %v4511 = vrot.slane %v4510, 4
      %v4512 = vrot.slane %v3677, 5
      %v4513 = vsel %vm1322, %v4511, %v4512
      %v4514 = vrot.slane %v4512, 4
      %v4515 = vrot.slane %v3678, 5
      %v4516 = vsel %vm1322, %v4514, %v4515
      %v4517 = vrot.slane %v4381, 5
      %v4518 = vrot.slane %v4517, 4
      %v4519 = vrot.slane %v3680, 5
      %v4520 = vsel %vm1322, %v4518, %v4519
      %v4521 = vrot.slane %v4519, 4
      %v4522 = vrot.slane %v3681, 5
      %v4523 = vsel %vm1322, %v4521, %v4522
      %v4524 = vrot.slane %v4382, 5
      %v4525 = vrot.slane %v4524, 4
      %v4526 = vrot.slane %v3683, 5
      %v4527 = vsel %vm1322, %v4525, %v4526
      %v4528 = vrot.slane %v4526, 4
      %v4529 = vrot.slane %v3684, 5
      %v4530 = vsel %vm1322, %v4528, %v4529
      %v4531 = vrot.slane %v4383, 5
      %v4532 = vrot.slane %v4531, 4
      %v4533 = vrot.slane %v3686, 5
      %v4534 = vsel %vm1322, %v4532, %v4533
      %v4535 = vrot.slane %v4533, 4
      %v4536 = vrot.slane %v3687, 5
      %v4537 = vsel %vm1322, %v4535, %v4536
      %v4538 = vrot.slane %v4384, 5
      %v4539 = vrot.slane %v4538, 4
      %v4540 = vrot.slane %v3689, 5
      %v4541 = vsel %vm1322, %v4539, %v4540
      %v4542 = vrot.slane %v4540, 4
      %v4543 = vrot.slane %v3690, 5
      %v4544 = vsel %vm1322, %v4542, %v4543
      %s4545 = scalar_lea.vmem %s1, 16
      %v4546 = vld [vmem:[%s4545] sm:$0x3]
      %v4547 = vunpack.c.l.b16 %v4436
      %v4548 = vunpack.c.l.b16 %v4439
      %v4549 = vunpack.c.l.b16 %v4443
      %v4550 = vunpack.c.l.b16 %v4446
      %v4551 = vunpack.c.l.b16 %v4450
      %v4552 = vunpack.c.l.b16 %v4453
      %v4553 = vunpack.c.l.b16 %v4457
      %v4554 = vunpack.c.l.b16 %v4460
      %v4555 = vunpack.c.l.b16 %v4464
      %v4556 = vunpack.c.l.b16 %v4467
      %v4557 = vunpack.c.l.b16 %v4471
      %v4558 = vunpack.c.l.b16 %v4474
      %v4559 = vunpack.c.l.b16 %v4478
      %v4560 = vunpack.c.l.b16 %v4481
      %v4561 = vunpack.c.l.b16 %v4485
      %v4562 = vunpack.c.l.b16 %v4488
      %v4563 = vunpack.c.l.b16 %v4492
      %v4564 = vunpack.c.l.b16 %v4495
      %v4565 = vunpack.c.l.b16 %v4499
      %v4566 = vunpack.c.l.b16 %v4502
      %v4567 = vunpack.c.l.b16 %v4506
      %v4568 = vunpack.c.l.b16 %v4509
      %v4569 = vunpack.c.l.b16 %v4513
      %v4570 = vunpack.c.l.b16 %v4516
      %v4571 = vunpack.c.l.b16 %v4520
      %v4572 = vunpack.c.l.b16 %v4523
      %v4573 = vunpack.c.l.b16 %v4527
      %v4574 = vunpack.c.l.b16 %v4530
      %v4575 = vunpack.c.l.b16 %v4534
      %v4576 = vunpack.c.l.b16 %v4537
      %v4577 = vunpack.c.l.b16 %v4541
      %v4578 = vunpack.c.l.b16 %v4544
      %v4579 = vpack.c.b16 %v4548, %v4547
      %v4580 = vpack.c.b16 %v4550, %v4549
      %v4581 = vpack.c.b16 %v4552, %v4551
      %v4582 = vpack.c.b16 %v4554, %v4553
      %v4583 = vpack.c.b16 %v4556, %v4555
      %v4584 = vpack.c.b16 %v4558, %v4557
      %v4585 = vpack.c.b16 %v4560, %v4559
      %v4586 = vpack.c.b16 %v4562, %v4561
      %v4587 = vpack.c.b16 %v4564, %v4563
      %v4588 = vpack.c.b16 %v4566, %v4565
      %v4589 = vpack.c.b16 %v4568, %v4567
      %v4590 = vpack.c.b16 %v4570, %v4569
      %v4591 = vpack.c.b16 %v4572, %v4571
      %v4592 = vpack.c.b16 %v4574, %v4573
      %v4593 = vpack.c.b16 %v4576, %v4575
      %v4594 = vpack.c.b16 %v4578, %v4577
      %v4596 = vsel %vm766, %v4579, 0
      %v4599 = vsel %vm766, %v4580, 0
      %v4602 = vsel %vm766, %v4581, 0
      %v4605 = vsel %vm766, %v4582, 0
      %v4608 = vsel %vm766, %v4583, 0
      %v4611 = vsel %vm766, %v4584, 0
      %v4614 = vsel %vm766, %v4585, 0
      %v4617 = vsel %vm766, %v4586, 0
      %v4620 = vsel %vm766, %v4587, 0
      %v4623 = vsel %vm766, %v4588, 0
      %v4626 = vsel %vm766, %v4589, 0
      %v4629 = vsel %vm766, %v4590, 0
      %v4632 = vsel %vm766, %v4591, 0
      %v4635 = vsel %vm766, %v4592, 0
      %v4638 = vsel %vm766, %v4593, 0
      %v4641 = vsel %vm766, %v4594, 0
      %v4644 = vsel %vm815, %v4546, 0
      %4646 = vmatprep.subr.bf16.mxu0 0
      %4647 = vmatpush1.bf16.msra.mxu0 %v4644
      %4648 = vmatprep.subr.bf16.mxu0 0
      %4649 = vmatpush1.bf16.msra.mxu0 0
      %4650 = vmatprep.subr.bf16.mxu0 0
      %4651 = vmatpush1.bf16.msra.mxu0 0
      %4652 = vmatprep.subr.bf16.mxu0 0
      %4653 = vmatpush1.bf16.msra.mxu0 0
      %4654 = vmatprep.subr.bf16.mxu0 0
      %4655 = vmatpush1.bf16.msra.mxu0 0
      %4656 = vmatprep.subr.bf16.mxu0 0
      %4657 = vmatpush1.bf16.msra.mxu0 0
      %4658 = vmatprep.subr.bf16.mxu0 0
      %4659 = vmatpush1.bf16.msra.mxu0 0
      %4660 = vmatprep.subr.bf16.mxu0 0
      %4661 = vmatpush1.bf16.msra.mxu0 0
      %4662 = vmatprep.subr.bf16.mxu0 0
      %4663 = vmatpush1.bf16.msra.mxu0 0
      %4664 = vmatprep.subr.bf16.mxu0 0
      %4665 = vmatpush1.bf16.msra.mxu0 0
      %4666 = vmatprep.subr.bf16.mxu0 0
      %4667 = vmatpush1.bf16.msra.mxu0 0
      %4668 = vmatprep.subr.bf16.mxu0 0
      %4669 = vmatpush1.bf16.msra.mxu0 0
      %4670 = vmatprep.subr.bf16.mxu0 0
      %4671 = vmatpush1.bf16.msra.mxu0 0
      %4672 = vmatprep.subr.bf16.mxu0 0
      %4673 = vmatpush1.bf16.msra.mxu0 0
      %4674 = vmatprep.subr.bf16.mxu0 0
      %4675 = vmatpush1.bf16.msra.mxu0 0
      %4676 = vmatprep.subr.bf16.mxu0 0
      %4677 = vmatpush1.bf16.msra.mxu0 0
      %4678 = vmatprep.mubr.bf16.mxu0 0
      %4679 = vmatmul.mubr.bf16.gmra.mrb[0].mxu0 %v4596
      %v4680 = vpop.f32.mrb[0].mxu0
      %v4681 = vadd.f32 0.0, %v4680
      %v4682 = vpop.f32.mrb[0].mxu0
      %v4683 = vpop.f32.mrb[0].mxu0
      %v4684 = vadd.f32 0.0, %v4683
      %v4685 = vpop.f32.mrb[0].mxu0
      %4686 = vmatprep.mubr.bf16.mxu0 0
      %4687 = vmatmul.mubr.bf16.gmra.mrb[0].mxu0 %v4599
      %v4688 = vpop.f32.mrb[0].mxu0
      %v4689 = vadd.f32 0.0, %v4688
      %v4690 = vpop.f32.mrb[0].mxu0
      %v4691 = vpop.f32.mrb[0].mxu0
      %v4692 = vadd.f32 0.0, %v4691
      %v4693 = vpop.f32.mrb[0].mxu0
      %4694 = vmatprep.mubr.bf16.mxu0 0
      %4695 = vmatmul.mubr.bf16.gmra.mrb[0].mxu0 %v4602
      %v4696 = vpop.f32.mrb[0].mxu0
      %v4697 = vadd.f32 0.0, %v4696
      %v4698 = vpop.f32.mrb[0].mxu0
      %v4699 = vpop.f32.mrb[0].mxu0
      %v4700 = vadd.f32 0.0, %v4699
      %v4701 = vpop.f32.mrb[0].mxu0
      %4702 = vmatprep.mubr.bf16.mxu0 0
      %4703 = vmatmul.mubr.bf16.gmra.mrb[0].mxu0 %v4605
      %v4704 = vpop.f32.mrb[0].mxu0
      %v4705 = vadd.f32 0.0, %v4704
      %v4706 = vpop.f32.mrb[0].mxu0
      %v4707 = vpop.f32.mrb[0].mxu0
      %v4708 = vadd.f32 0.0, %v4707
      %v4709 = vpop.f32.mrb[0].mxu0
      %4710 = vmatprep.mubr.bf16.mxu0 0
      %4711 = vmatmul.mubr.bf16.gmra.mrb[0].mxu0 %v4608
      %v4712 = vpop.f32.mrb[0].mxu0
      %v4713 = vadd.f32 0.0, %v4712
      %v4714 = vpop.f32.mrb[0].mxu0
      %v4715 = vpop.f32.mrb[0].mxu0
      %v4716 = vadd.f32 0.0, %v4715
      %v4717 = vpop.f32.mrb[0].mxu0
      %4718 = vmatprep.mubr.bf16.mxu0 0
      %4719 = vmatmul.mubr.bf16.gmra.mrb[0].mxu0 %v4611
      %v4720 = vpop.f32.mrb[0].mxu0
      %v4721 = vadd.f32 0.0, %v4720
      %v4722 = vpop.f32.mrb[0].mxu0
      %v4723 = vpop.f32.mrb[0].mxu0
      %v4724 = vadd.f32 0.0, %v4723
      %v4725 = vpop.f32.mrb[0].mxu0
      %4726 = vmatprep.mubr.bf16.mxu0 0
      %4727 = vmatmul.mubr.bf16.gmra.mrb[0].mxu0 %v4614
      %v4728 = vpop.f32.mrb[0].mxu0
      %v4729 = vadd.f32 0.0, %v4728
      %v4730 = vpop.f32.mrb[0].mxu0
      %v4731 = vpop.f32.mrb[0].mxu0
      %v4732 = vadd.f32 0.0, %v4731
      %v4733 = vpop.f32.mrb[0].mxu0
      %4734 = vmatprep.mubr.bf16.mxu0 0
      %4735 = vmatmul.mubr.bf16.gmra.mrb[0].mxu0 %v4617
      %v4736 = vpop.f32.mrb[0].mxu0
      %v4737 = vadd.f32 0.0, %v4736
      %v4738 = vpop.f32.mrb[0].mxu0
      %v4739 = vpop.f32.mrb[0].mxu0
      %v4740 = vadd.f32 0.0, %v4739
      %v4741 = vpop.f32.mrb[0].mxu0
      %4742 = vmatprep.mubr.bf16.mxu0 0
      %4743 = vmatmul.mubr.bf16.gmra.mrb[0].mxu0 %v4620
      %v4744 = vpop.f32.mrb[0].mxu0
      %v4745 = vadd.f32 0.0, %v4744
      %v4746 = vpop.f32.mrb[0].mxu0
      %v4747 = vpop.f32.mrb[0].mxu0
      %v4748 = vadd.f32 0.0, %v4747
      %v4749 = vpop.f32.mrb[0].mxu0
      %4750 = vmatprep.mubr.bf16.mxu0 0
      %4751 = vmatmul.mubr.bf16.gmra.mrb[0].mxu0 %v4623
      %v4752 = vpop.f32.mrb[0].mxu0
      %v4753 = vadd.f32 0.0, %v4752
      %v4754 = vpop.f32.mrb[0].mxu0
      %v4755 = vpop.f32.mrb[0].mxu0
      %v4756 = vadd.f32 0.0, %v4755
      %v4757 = vpop.f32.mrb[0].mxu0
      %4758 = vmatprep.mubr.bf16.mxu0 0
      %4759 = vmatmul.mubr.bf16.gmra.mrb[0].mxu0 %v4626
      %v4760 = vpop.f32.mrb[0].mxu0
      %v4761 = vadd.f32 0.0, %v4760
      %v4762 = vpop.f32.mrb[0].mxu0
      %v4763 = vpop.f32.mrb[0].mxu0
      %v4764 = vadd.f32 0.0, %v4763
      %v4765 = vpop.f32.mrb[0].mxu0
      %4766 = vmatprep.mubr.bf16.mxu0 0
      %4767 = vmatmul.mubr.bf16.gmra.mrb[0].mxu0 %v4629
      %v4768 = vpop.f32.mrb[0].mxu0
      %v4769 = vadd.f32 0.0, %v4768
      %v4770 = vpop.f32.mrb[0].mxu0
      %v4771 = vpop.f32.mrb[0].mxu0
      %v4772 = vadd.f32 0.0, %v4771
      %v4773 = vpop.f32.mrb[0].mxu0
      %4774 = vmatprep.mubr.bf16.mxu0 0
      %4775 = vmatmul.mubr.bf16.gmra.mrb[0].mxu0 %v4632
      %v4776 = vpop.f32.mrb[0].mxu0
      %v4777 = vadd.f32 0.0, %v4776
      %v4778 = vpop.f32.mrb[0].mxu0
      %v4779 = vpop.f32.mrb[0].mxu0
      %v4780 = vadd.f32 0.0, %v4779
      %v4781 = vpop.f32.mrb[0].mxu0
      %4782 = vmatprep.mubr.bf16.mxu0 0
      %4783 = vmatmul.mubr.bf16.gmra.mrb[0].mxu0 %v4635
      %v4784 = vpop.f32.mrb[0].mxu0
      %v4785 = vadd.f32 0.0, %v4784
      %v4786 = vpop.f32.mrb[0].mxu0
      %v4787 = vpop.f32.mrb[0].mxu0
      %v4788 = vadd.f32 0.0, %v4787
      %v4789 = vpop.f32.mrb[0].mxu0
      %4790 = vmatprep.mubr.bf16.mxu0 0
      %4791 = vmatmul.mubr.bf16.gmra.mrb[0].mxu0 %v4638
      %v4792 = vpop.f32.mrb[0].mxu0
      %v4793 = vadd.f32 0.0, %v4792
      %v4794 = vpop.f32.mrb[0].mxu0
      %v4795 = vpop.f32.mrb[0].mxu0
      %v4796 = vadd.f32 0.0, %v4795
      %v4797 = vpop.f32.mrb[0].mxu0
      %4798 = vmatprep.mubr.bf16.mxu0 0
      %4799 = vmatmul.mubr.bf16.gmra.mrb[0].mxu0 %v4641
      %v4800 = vpop.f32.mrb[0].mxu0
      %v4801 = vadd.f32 0.0, %v4800
      %v4802 = vpop.f32.mrb[0].mxu0
      %v4803 = vpop.f32.mrb[0].mxu0
      %v4804 = vadd.f32 0.0, %v4803
      %v4805 = vpop.f32.mrb[0].mxu0
      %4806 = vdwg.mxu0
      %v4807 = vadd.f32 %v4337, %v4681
      %v4808 = vadd.f32 %v4338, %v4684
      %v4809 = vadd.f32 %v4339, %v4689
      %v4810 = vadd.f32 %v4340, %v4692
      %v4811 = vadd.f32 %v4341, %v4697
      %v4812 = vadd.f32 %v4342, %v4700
      %v4813 = vadd.f32 %v4343, %v4705
      %v4814 = vadd.f32 %v4344, %v4708
      %v4815 = vadd.f32 %v4345, %v4713
      %v4816 = vadd.f32 %v4346, %v4716
      %v4817 = vadd.f32 %v4347, %v4721
      %v4818 = vadd.f32 %v4348, %v4724
      %v4819 = vadd.f32 %v4349, %v4729
      %v4820 = vadd.f32 %v4350, %v4732
      %v4821 = vadd.f32 %v4351, %v4737
      %v4822 = vadd.f32 %v4352, %v4740
      %v4823 = vadd.f32 %v4353, %v4745
      %v4824 = vadd.f32 %v4354, %v4748
      %v4825 = vadd.f32 %v4355, %v4753
      %v4826 = vadd.f32 %v4356, %v4756
      %v4827 = vadd.f32 %v4357, %v4761
      %v4828 = vadd.f32 %v4358, %v4764
      %v4829 = vadd.f32 %v4359, %v4769
      %v4830 = vadd.f32 %v4360, %v4772
      %v4831 = vadd.f32 %v4361, %v4777
      %v4832 = vadd.f32 %v4362, %v4780
      %v4833 = vadd.f32 %v4363, %v4785
      %v4834 = vadd.f32 %v4364, %v4788
      %v4835 = vadd.f32 %v4365, %v4793
      %v4836 = vadd.f32 %v4366, %v4796
      %v4837 = vadd.f32 %v4367, %v4801
      %v4838 = vadd.f32 %v4368, %v4804
      %v4839 = vld [vmem:[%s2] sm:$0x1]
      %v4841 = vlaneseq
      %v4842 = vshrl.u32 %v4841, 7
      %v4843 = vsub.s32 0, %v4842
      %v4844 = vrot.slane %v4839, %v4843
      %v4846 = vadd.f32 %v4807, %v4844
      %v4847 = vadd.f32 %v4808, %v4844
      %v4848 = vadd.f32 %v4809, %v4844
      %v4849 = vadd.f32 %v4810, %v4844
      %v4850 = vadd.f32 %v4811, %v4844
      %v4851 = vadd.f32 %v4812, %v4844
      %v4852 = vadd.f32 %v4813, %v4844
      %v4853 = vadd.f32 %v4814, %v4844
      %v4854 = vadd.f32 %v4815, %v4844
      %v4855 = vadd.f32 %v4816, %v4844
      %v4856 = vadd.f32 %v4817, %v4844
      %v4857 = vadd.f32 %v4818, %v4844
      %v4858 = vadd.f32 %v4819, %v4844
      %v4859 = vadd.f32 %v4820, %v4844
      %v4860 = vadd.f32 %v4821, %v4844
      %v4861 = vadd.f32 %v4822, %v4844
      %v4862 = vadd.f32 %v4823, %v4844
      %v4863 = vadd.f32 %v4824, %v4844
      %v4864 = vadd.f32 %v4825, %v4844
      %v4865 = vadd.f32 %v4826, %v4844
      %v4866 = vadd.f32 %v4827, %v4844
      %v4867 = vadd.f32 %v4828, %v4844
      %v4868 = vadd.f32 %v4829, %v4844
      %v4869 = vadd.f32 %v4830, %v4844
      %v4870 = vadd.f32 %v4831, %v4844
      %v4871 = vadd.f32 %v4832, %v4844
      %v4872 = vadd.f32 %v4833, %v4844
      %v4873 = vadd.f32 %v4834, %v4844
      %v4874 = vadd.f32 %v4835, %v4844
      %v4875 = vadd.f32 %v4836, %v4844
      %v4876 = vadd.f32 %v4837, %v4844
      %v4877 = vadd.f32 %v4838, %v4844
      %v4878 = vmax.f32 %v4846, 0.0
      %v4879 = vmax.f32 %v4847, 0.0
      %v4880 = vmax.f32 %v4848, 0.0
      %v4881 = vmax.f32 %v4849, 0.0
      %v4882 = vmax.f32 %v4850, 0.0
      %v4883 = vmax.f32 %v4851, 0.0
      %v4884 = vmax.f32 %v4852, 0.0
      %v4885 = vmax.f32 %v4853, 0.0
      %v4886 = vmax.f32 %v4854, 0.0
      %v4887 = vmax.f32 %v4855, 0.0
      %v4888 = vmax.f32 %v4856, 0.0
      %v4889 = vmax.f32 %v4857, 0.0
      %v4890 = vmax.f32 %v4858, 0.0
      %v4891 = vmax.f32 %v4859, 0.0
      %v4892 = vmax.f32 %v4860, 0.0
      %v4893 = vmax.f32 %v4861, 0.0
      %v4894 = vmax.f32 %v4862, 0.0
      %v4895 = vmax.f32 %v4863, 0.0
      %v4896 = vmax.f32 %v4864, 0.0
      %v4897 = vmax.f32 %v4865, 0.0
      %v4898 = vmax.f32 %v4866, 0.0
      %v4899 = vmax.f32 %v4867, 0.0
      %v4900 = vmax.f32 %v4868, 0.0
      %v4901 = vmax.f32 %v4869, 0.0
      %v4902 = vmax.f32 %v4870, 0.0
      %v4903 = vmax.f32 %v4871, 0.0
      %v4904 = vmax.f32 %v4872, 0.0
      %v4905 = vmax.f32 %v4873, 0.0
      %v4906 = vmax.f32 %v4874, 0.0
      %v4907 = vmax.f32 %v4875, 0.0
      %v4908 = vmax.f32 %v4876, 0.0
      %v4909 = vmax.f32 %v4877, 0.0
      %v4910 = vpack.c.bf16 %v4879, %v4878
      %v4911 = vpack.c.bf16 %v4881, %v4880
      %v4912 = vpack.c.bf16 %v4883, %v4882
      %v4913 = vpack.c.bf16 %v4885, %v4884
      %v4914 = vpack.c.bf16 %v4887, %v4886
      %v4915 = vpack.c.bf16 %v4889, %v4888
      %v4916 = vpack.c.bf16 %v4891, %v4890
      %v4917 = vpack.c.bf16 %v4893, %v4892
      %v4918 = vpack.c.bf16 %v4895, %v4894
      %v4919 = vpack.c.bf16 %v4897, %v4896
      %v4920 = vpack.c.bf16 %v4899, %v4898
      %v4921 = vpack.c.bf16 %v4901, %v4900
      %v4922 = vpack.c.bf16 %v4903, %v4902
      %v4923 = vpack.c.bf16 %v4905, %v4904
      %v4924 = vpack.c.bf16 %v4907, %v4906
      %v4925 = vpack.c.bf16 %v4909, %v4908
      %v4926 = vld [vmem:[%s3] sm:$0xf]
      %v4927 = vld [vmem:[%s3 + $0x4] sm:$0xf]
      %v4928 = vld [vmem:[%s3 + $0x8] sm:$0xf]
      %v4929 = vld [vmem:[%s3 + $0xc] sm:$0xf]
      %v4930 = vld [vmem:[%s3 + $0x10] sm:$0xf]
      %v4931 = vld [vmem:[%s3 + $0x14] sm:$0xf]
      %v4932 = vld [vmem:[%s3 + $0x18] sm:$0xf]
      %v4933 = vld [vmem:[%s3 + $0x1c] sm:$0xf]
      %v4934 = vld [vmem:[%s3 + $0x20] sm:$0xf]
      %v4935 = vld [vmem:[%s3 + $0x24] sm:$0xf]
      %v4936 = vld [vmem:[%s3 + $0x28] sm:$0xf]
      %v4937 = vld [vmem:[%s3 + $0x2c] sm:$0xf]
      %v4938 = vld [vmem:[%s3 + $0x30] sm:$0xf]
      %v4939 = vld [vmem:[%s3 + $0x34] sm:$0xf]
      %v4940 = vld [vmem:[%s3 + $0x38] sm:$0xf]
      %v4941 = vld [vmem:[%s3 + $0x3c] sm:$0xf]
      %v4942 = vld [vmem:[%s4] sm:$0x1]
      %v4944 = vlaneseq
      %v4945 = vshrl.u32 %v4944, 7
      %v4946 = vsub.s32 0, %v4945
      %v4947 = vrot.slane %v4942, %v4946
      %v4965 = vunpack.c.l.b16 %v4926
      %v4966 = vunpack.c.l.b16 %v4927
      %v4967 = vunpack.c.l.b16 %v4928
      %v4968 = vunpack.c.l.b16 %v4929
      %v4969 = vunpack.c.l.b16 %v4930
      %v4970 = vunpack.c.l.b16 %v4931
      %v4971 = vunpack.c.l.b16 %v4932
      %v4972 = vunpack.c.l.b16 %v4933
      %v4973 = vunpack.c.l.b16 %v4934
      %v4974 = vunpack.c.l.b16 %v4935
      %v4975 = vunpack.c.l.b16 %v4936
      %v4976 = vunpack.c.l.b16 %v4937
      %v4977 = vunpack.c.l.b16 %v4938
      %v4978 = vunpack.c.l.b16 %v4939
      %v4979 = vunpack.c.l.b16 %v4940
      %v4980 = vunpack.c.l.b16 %v4941
      %v4981 = vpack.c.b16 %v4966, %v4965
      %v4982 = vpack.c.b16 %v4968, %v4967
      %v4983 = vpack.c.b16 %v4970, %v4969
      %v4984 = vpack.c.b16 %v4972, %v4971
      %v4985 = vpack.c.b16 %v4974, %v4973
      %v4986 = vpack.c.b16 %v4976, %v4975
      %v4987 = vpack.c.b16 %v4978, %v4977
      %v4988 = vpack.c.b16 %v4980, %v4979
      %4997 = vmatprep.subr.bf16.mxu0 0
      %4998 = vmatpush1.bf16.msra.mxu0 %v4981
      %4999 = vmatprep.subr.bf16.mxu0 0
      %5000 = vmatpush1.bf16.msra.mxu0 %v4982
      %5001 = vmatprep.subr.bf16.mxu0 0
      %5002 = vmatpush1.bf16.msra.mxu0 %v4983
      %5003 = vmatprep.subr.bf16.mxu0 0
      %5004 = vmatpush1.bf16.msra.mxu0 %v4984
      %5005 = vmatprep.subr.bf16.mxu0 0
      %5006 = vmatpush1.bf16.msra.mxu0 %v4985
      %5007 = vmatprep.subr.bf16.mxu0 0
      %5008 = vmatpush1.bf16.msra.mxu0 %v4986
      %5009 = vmatprep.subr.bf16.mxu0 0
      %5010 = vmatpush1.bf16.msra.mxu0 %v4987
      %5011 = vmatprep.subr.bf16.mxu0 0
      %5012 = vmatpush1.bf16.msra.mxu0 %v4988
      %5013 = vmatprep.subr.bf16.mxu0 0
      %5014 = vmatpush1.bf16.msra.mxu0 0
      %5015 = vmatprep.subr.bf16.mxu0 0
      %5016 = vmatpush1.bf16.msra.mxu0 0
      %5017 = vmatprep.subr.bf16.mxu0 0
      %5018 = vmatpush1.bf16.msra.mxu0 0
      %5019 = vmatprep.subr.bf16.mxu0 0
      %5020 = vmatpush1.bf16.msra.mxu0 0
      %5021 = vmatprep.subr.bf16.mxu0 0
      %5022 = vmatpush1.bf16.msra.mxu0 0
      %5023 = vmatprep.subr.bf16.mxu0 0
      %5024 = vmatpush1.bf16.msra.mxu0 0
      %5025 = vmatprep.subr.bf16.mxu0 0
      %5026 = vmatpush1.bf16.msra.mxu0 0
      %5027 = vmatprep.subr.bf16.mxu0 0
      %5028 = vmatpush1.bf16.msra.mxu0 0
      %5029 = vmatprep.mubr.bf16.mxu0 0
      %5030 = vmatmul.mubr.bf16.gmra.mrb[0].mxu0 %v4910
      %v5031 = vpop.f32.mrb[0].mxu0
      %v5032 = vadd.f32 %v4947, %v5031
      %v5033 = vpop.f32.mrb[0].mxu0
      %v5034 = vpop.f32.mrb[0].mxu0
      %v5035 = vadd.f32 %v4947, %v5034
      %v5036 = vpop.f32.mrb[0].mxu0
      %5037 = vmatprep.mubr.bf16.mxu0 0
      %5038 = vmatmul.mubr.bf16.gmra.mrb[0].mxu0 %v4911
      %v5039 = vpop.f32.mrb[0].mxu0
      %v5040 = vadd.f32 %v4947, %v5039
      %v5041 = vpop.f32.mrb[0].mxu0
      %v5042 = vpop.f32.mrb[0].mxu0
      %v5043 = vadd.f32 %v4947, %v5042
      %v5044 = vpop.f32.mrb[0].mxu0
      %5045 = vmatprep.mubr.bf16.mxu0 0
      %5046 = vmatmul.mubr.bf16.gmra.mrb[0].mxu0 %v4912
      %v5047 = vpop.f32.mrb[0].mxu0
      %v5048 = vadd.f32 %v4947, %v5047
      %v5049 = vpop.f32.mrb[0].mxu0
      %v5050 = vpop.f32.mrb[0].mxu0
      %v5051 = vadd.f32 %v4947, %v5050
      %v5052 = vpop.f32.mrb[0].mxu0
      %5053 = vmatprep.mubr.bf16.mxu0 0
      %5054 = vmatmul.mubr.bf16.gmra.mrb[0].mxu0 %v4913
      %v5055 = vpop.f32.mrb[0].mxu0
      %v5056 = vadd.f32 %v4947, %v5055
      %v5057 = vpop.f32.mrb[0].mxu0
      %v5058 = vpop.f32.mrb[0].mxu0
      %v5059 = vadd.f32 %v4947, %v5058
      %v5060 = vpop.f32.mrb[0].mxu0
      %5061 = vmatprep.mubr.bf16.mxu0 0
      %5062 = vmatmul.mubr.bf16.gmra.mrb[0].mxu0 %v4914
      %v5063 = vpop.f32.mrb[0].mxu0
      %v5064 = vadd.f32 %v4947, %v5063
      %v5065 = vpop.f32.mrb[0].mxu0
      %v5066 = vpop.f32.mrb[0].mxu0
      %v5067 = vadd.f32 %v4947, %v5066
      %v5068 = vpop.f32.mrb[0].mxu0
      %5069 = vmatprep.mubr.bf16.mxu0 0
      %5070 = vmatmul.mubr.bf16.gmra.mrb[0].mxu0 %v4915
      %v5071 = vpop.f32.mrb[0].mxu0
      %v5072 = vadd.f32 %v4947, %v5071
      %v5073 = vpop.f32.mrb[0].mxu0
      %v5074 = vpop.f32.mrb[0].mxu0
      %v5075 = vadd.f32 %v4947, %v5074
      %v5076 = vpop.f32.mrb[0].mxu0
      %5077 = vmatprep.mubr.bf16.mxu0 0
      %5078 = vmatmul.mubr.bf16.gmra.mrb[0].mxu0 %v4916
      %v5079 = vpop.f32.mrb[0].mxu0
      %v5080 = vadd.f32 %v4947, %v5079
      %v5081 = vpop.f32.mrb[0].mxu0
      %v5082 = vpop.f32.mrb[0].mxu0
      %v5083 = vadd.f32 %v4947, %v5082
      %v5084 = vpop.f32.mrb[0].mxu0
      %5085 = vmatprep.mubr.bf16.mxu0 0
      %5086 = vmatmul.mubr.bf16.gmra.mrb[0].mxu0 %v4917
      %v5087 = vpop.f32.mrb[0].mxu0
      %v5088 = vadd.f32 %v4947, %v5087
      %v5089 = vpop.f32.mrb[0].mxu0
      %v5090 = vpop.f32.mrb[0].mxu0
      %v5091 = vadd.f32 %v4947, %v5090
      %v5092 = vpop.f32.mrb[0].mxu0
      %5093 = vmatprep.mubr.bf16.mxu0 0
      %5094 = vmatmul.mubr.bf16.gmra.mrb[0].mxu0 %v4918
      %v5095 = vpop.f32.mrb[0].mxu0
      %v5096 = vadd.f32 %v4947, %v5095
      %v5097 = vpop.f32.mrb[0].mxu0
      %v5098 = vpop.f32.mrb[0].mxu0
      %v5099 = vadd.f32 %v4947, %v5098
      %v5100 = vpop.f32.mrb[0].mxu0
      %5101 = vmatprep.mubr.bf16.mxu0 0
      %5102 = vmatmul.mubr.bf16.gmra.mrb[0].mxu0 %v4919
      %v5103 = vpop.f32.mrb[0].mxu0
      %v5104 = vadd.f32 %v4947, %v5103
      %v5105 = vpop.f32.mrb[0].mxu0
      %v5106 = vpop.f32.mrb[0].mxu0
      %v5107 = vadd.f32 %v4947, %v5106
      %v5108 = vpop.f32.mrb[0].mxu0
      %5109 = vmatprep.mubr.bf16.mxu0 0
      %5110 = vmatmul.mubr.bf16.gmra.mrb[0].mxu0 %v4920
      %v5111 = vpop.f32.mrb[0].mxu0
      %v5112 = vadd.f32 %v4947, %v5111
      %v5113 = vpop.f32.mrb[0].mxu0
      %v5114 = vpop.f32.mrb[0].mxu0
      %v5115 = vadd.f32 %v4947, %v5114
      %v5116 = vpop.f32.mrb[0].mxu0
      %5117 = vmatprep.mubr.bf16.mxu0 0
      %5118 = vmatmul.mubr.bf16.gmra.mrb[0].mxu0 %v4921
      %v5119 = vpop.f32.mrb[0].mxu0
      %v5120 = vadd.f32 %v4947, %v5119
      %v5121 = vpop.f32.mrb[0].mxu0
      %v5122 = vpop.f32.mrb[0].mxu0
      %v5123 = vadd.f32 %v4947, %v5122
      %v5124 = vpop.f32.mrb[0].mxu0
      %5125 = vmatprep.mubr.bf16.mxu0 0
      %5126 = vmatmul.mubr.bf16.gmra.mrb[0].mxu0 %v4922
      %v5127 = vpop.f32.mrb[0].mxu0
      %v5128 = vadd.f32 %v4947, %v5127
      %v5129 = vpop.f32.mrb[0].mxu0
      %v5130 = vpop.f32.mrb[0].mxu0
      %v5131 = vadd.f32 %v4947, %v5130
      %v5132 = vpop.f32.mrb[0].mxu0
      %5133 = vmatprep.mubr.bf16.mxu0 0
      %5134 = vmatmul.mubr.bf16.gmra.mrb[0].mxu0 %v4923
      %v5135 = vpop.f32.mrb[0].mxu0
      %v5136 = vadd.f32 %v4947, %v5135
      %v5137 = vpop.f32.mrb[0].mxu0
      %v5138 = vpop.f32.mrb[0].mxu0
      %v5139 = vadd.f32 %v4947, %v5138
      %v5140 = vpop.f32.mrb[0].mxu0
      %5141 = vmatprep.mubr.bf16.mxu0 0
      %5142 = vmatmul.mubr.bf16.gmra.mrb[0].mxu0 %v4924
      %v5143 = vpop.f32.mrb[0].mxu0
      %v5144 = vadd.f32 %v4947, %v5143
      %v5145 = vpop.f32.mrb[0].mxu0
      %v5146 = vpop.f32.mrb[0].mxu0
      %v5147 = vadd.f32 %v4947, %v5146
      %v5148 = vpop.f32.mrb[0].mxu0
      %5149 = vmatprep.mubr.bf16.mxu0 0
      %5150 = vmatmul.mubr.bf16.gmra.mrb[0].mxu0 %v4925
      %v5151 = vpop.f32.mrb[0].mxu0
      %v5152 = vadd.f32 %v4947, %v5151
      %v5153 = vpop.f32.mrb[0].mxu0
      %v5154 = vpop.f32.mrb[0].mxu0
      %v5155 = vadd.f32 %v4947, %v5154
      %v5156 = vpop.f32.mrb[0].mxu0
      %5157 = vdwg.mxu0
      %v5158 = vmax.f32 %v5032, 0.0
      %v5159 = vmax.f32 %v5035, 0.0
      %v5160 = vmax.f32 %v5040, 0.0
      %v5161 = vmax.f32 %v5043, 0.0
      %v5162 = vmax.f32 %v5048, 0.0
      %v5163 = vmax.f32 %v5051, 0.0
      %v5164 = vmax.f32 %v5056, 0.0
      %v5165 = vmax.f32 %v5059, 0.0
      %v5166 = vmax.f32 %v5064, 0.0
      %v5167 = vmax.f32 %v5067, 0.0
      %v5168 = vmax.f32 %v5072, 0.0
      %v5169 = vmax.f32 %v5075, 0.0
      %v5170 = vmax.f32 %v5080, 0.0
      %v5171 = vmax.f32 %v5083, 0.0
      %v5172 = vmax.f32 %v5088, 0.0
      %v5173 = vmax.f32 %v5091, 0.0
      %v5174 = vmax.f32 %v5096, 0.0
      %v5175 = vmax.f32 %v5099, 0.0
      %v5176 = vmax.f32 %v5104, 0.0
      %v5177 = vmax.f32 %v5107, 0.0
      %v5178 = vmax.f32 %v5112, 0.0
      %v5179 = vmax.f32 %v5115, 0.0
      %v5180 = vmax.f32 %v5120, 0.0
      %v5181 = vmax.f32 %v5123, 0.0
      %v5182 = vmax.f32 %v5128, 0.0
      %v5183 = vmax.f32 %v5131, 0.0
      %v5184 = vmax.f32 %v5136, 0.0
      %v5185 = vmax.f32 %v5139, 0.0
      %v5186 = vmax.f32 %v5144, 0.0
      %v5187 = vmax.f32 %v5147, 0.0
      %v5188 = vmax.f32 %v5152, 0.0
      %v5189 = vmax.f32 %v5155, 0.0
      %v5190 = vpack.c.bf16 %v5159, %v5158
      %v5191 = vpack.c.bf16 %v5161, %v5160
      %v5192 = vpack.c.bf16 %v5163, %v5162
      %v5193 = vpack.c.bf16 %v5165, %v5164
      %v5194 = vpack.c.bf16 %v5167, %v5166
      %v5195 = vpack.c.bf16 %v5169, %v5168
      %v5196 = vpack.c.bf16 %v5171, %v5170
      %v5197 = vpack.c.bf16 %v5173, %v5172
      %v5198 = vpack.c.bf16 %v5175, %v5174
      %v5199 = vpack.c.bf16 %v5177, %v5176
      %v5200 = vpack.c.bf16 %v5179, %v5178
      %v5201 = vpack.c.bf16 %v5181, %v5180
      %v5202 = vpack.c.bf16 %v5183, %v5182
      %v5203 = vpack.c.bf16 %v5185, %v5184
      %v5204 = vpack.c.bf16 %v5187, %v5186
      %v5205 = vpack.c.bf16 %v5189, %v5188
      %v5206 = vld [vmem:[%s5] sm:$0xf]
      %v5207 = vld [vmem:[%s5 + $0x4] sm:$0xf]
      %v5208 = vld [vmem:[%s5 + $0x8] sm:$0xf]
      %v5209 = vld [vmem:[%s5 + $0xc] sm:$0xf]
      %v5210 = vld [vmem:[%s5 + $0x10] sm:$0xf]
      %v5211 = vld [vmem:[%s5 + $0x14] sm:$0xf]
      %v5212 = vld [vmem:[%s5 + $0x18] sm:$0xf]
      %v5213 = vld [vmem:[%s5 + $0x1c] sm:$0xf]
      %v5214 = vld [vmem:[%s5 + $0x20] sm:$0xf]
      %v5215 = vld [vmem:[%s5 + $0x24] sm:$0xf]
      %v5216 = vld [vmem:[%s5 + $0x28] sm:$0xf]
      %v5217 = vld [vmem:[%s5 + $0x2c] sm:$0xf]
      %v5218 = vld [vmem:[%s5 + $0x30] sm:$0xf]
      %v5219 = vld [vmem:[%s5 + $0x34] sm:$0xf]
      %v5220 = vld [vmem:[%s5 + $0x38] sm:$0xf]
      %v5221 = vld [vmem:[%s5 + $0x3c] sm:$0xf]
      %v5222 = vld [vmem:[%s6] sm:$0x1]
      %v5224 = vlaneseq
      %v5225 = vshrl.u32 %v5224, 7
      %v5226 = vsub.s32 0, %v5225
      %v5227 = vrot.slane %v5222, %v5226
      %v5245 = vunpack.c.l.b16 %v5206
      %v5246 = vunpack.c.l.b16 %v5207
      %v5247 = vunpack.c.l.b16 %v5208
      %v5248 = vunpack.c.l.b16 %v5209
      %v5249 = vunpack.c.l.b16 %v5210
      %v5250 = vunpack.c.l.b16 %v5211
      %v5251 = vunpack.c.l.b16 %v5212
      %v5252 = vunpack.c.l.b16 %v5213
      %v5253 = vunpack.c.l.b16 %v5214
      %v5254 = vunpack.c.l.b16 %v5215
      %v5255 = vunpack.c.l.b16 %v5216
      %v5256 = vunpack.c.l.b16 %v5217
      %v5257 = vunpack.c.l.b16 %v5218
      %v5258 = vunpack.c.l.b16 %v5219
      %v5259 = vunpack.c.l.b16 %v5220
      %v5260 = vunpack.c.l.b16 %v5221
      %v5261 = vpack.c.b16 %v5246, %v5245
      %v5262 = vpack.c.b16 %v5248, %v5247
      %v5263 = vpack.c.b16 %v5250, %v5249
      %v5264 = vpack.c.b16 %v5252, %v5251
      %v5265 = vpack.c.b16 %v5254, %v5253
      %v5266 = vpack.c.b16 %v5256, %v5255
      %v5267 = vpack.c.b16 %v5258, %v5257
      %v5268 = vpack.c.b16 %v5260, %v5259
      %5277 = vmatprep.subr.bf16.mxu0 0
      %5278 = vmatpush1.bf16.msra.mxu0 %v5261
      %5279 = vmatprep.subr.bf16.mxu0 0
      %5280 = vmatpush1.bf16.msra.mxu0 %v5262
      %5281 = vmatprep.subr.bf16.mxu0 0
      %5282 = vmatpush1.bf16.msra.mxu0 %v5263
      %5283 = vmatprep.subr.bf16.mxu0 0
      %5284 = vmatpush1.bf16.msra.mxu0 %v5264
      %5285 = vmatprep.subr.bf16.mxu0 0
      %5286 = vmatpush1.bf16.msra.mxu0 %v5265
      %5287 = vmatprep.subr.bf16.mxu0 0
      %5288 = vmatpush1.bf16.msra.mxu0 %v5266
      %5289 = vmatprep.subr.bf16.mxu0 0
      %5290 = vmatpush1.bf16.msra.mxu0 %v5267
      %5291 = vmatprep.subr.bf16.mxu0 0
      %5292 = vmatpush1.bf16.msra.mxu0 %v5268
      %5293 = vmatprep.subr.bf16.mxu0 0
      %5294 = vmatpush1.bf16.msra.mxu0 0
      %5295 = vmatprep.subr.bf16.mxu0 0
      %5296 = vmatpush1.bf16.msra.mxu0 0
      %5297 = vmatprep.subr.bf16.mxu0 0
      %5298 = vmatpush1.bf16.msra.mxu0 0
      %5299 = vmatprep.subr.bf16.mxu0 0
      %5300 = vmatpush1.bf16.msra.mxu0 0
      %5301 = vmatprep.subr.bf16.mxu0 0
      %5302 = vmatpush1.bf16.msra.mxu0 0
      %5303 = vmatprep.subr.bf16.mxu0 0
      %5304 = vmatpush1.bf16.msra.mxu0 0
      %5305 = vmatprep.subr.bf16.mxu0 0
      %5306 = vmatpush1.bf16.msra.mxu0 0
      %5307 = vmatprep.subr.bf16.mxu0 0
      %5308 = vmatpush1.bf16.msra.mxu0 0
      %5309 = vmatprep.mubr.bf16.mxu0 0
      %5310 = vmatmul.mubr.bf16.gmra.mrb[0].mxu0 %v5190
      %v5311 = vpop.f32.mrb[0].mxu0
      %v5312 = vadd.f32 %v5227, %v5311
      %v5313 = vpop.f32.mrb[0].mxu0
      %v5314 = vpop.f32.mrb[0].mxu0
      %v5315 = vadd.f32 %v5227, %v5314
      %v5316 = vpop.f32.mrb[0].mxu0
      %5317 = vmatprep.mubr.bf16.mxu0 0
      %5318 = vmatmul.mubr.bf16.gmra.mrb[0].mxu0 %v5191
      %v5319 = vpop.f32.mrb[0].mxu0
      %v5320 = vadd.f32 %v5227, %v5319
      %v5321 = vpop.f32.mrb[0].mxu0
      %v5322 = vpop.f32.mrb[0].mxu0
      %v5323 = vadd.f32 %v5227, %v5322
      %v5324 = vpop.f32.mrb[0].mxu0
      %5325 = vmatprep.mubr.bf16.mxu0 0
      %5326 = vmatmul.mubr.bf16.gmra.mrb[0].mxu0 %v5192
      %v5327 = vpop.f32.mrb[0].mxu0
      %v5328 = vadd.f32 %v5227, %v5327
      %v5329 = vpop.f32.mrb[0].mxu0
      %v5330 = vpop.f32.mrb[0].mxu0
      %v5331 = vadd.f32 %v5227, %v5330
      %v5332 = vpop.f32.mrb[0].mxu0
      %5333 = vmatprep.mubr.bf16.mxu0 0
      %5334 = vmatmul.mubr.bf16.gmra.mrb[0].mxu0 %v5193
      %v5335 = vpop.f32.mrb[0].mxu0
      %v5336 = vadd.f32 %v5227, %v5335
      %v5337 = vpop.f32.mrb[0].mxu0
      %v5338 = vpop.f32.mrb[0].mxu0
      %v5339 = vadd.f32 %v5227, %v5338
      %v5340 = vpop.f32.mrb[0].mxu0
      %5341 = vmatprep.mubr.bf16.mxu0 0
      %5342 = vmatmul.mubr.bf16.gmra.mrb[0].mxu0 %v5194
      %v5343 = vpop.f32.mrb[0].mxu0
      %v5344 = vadd.f32 %v5227, %v5343
      %v5345 = vpop.f32.mrb[0].mxu0
      %v5346 = vpop.f32.mrb[0].mxu0
      %v5347 = vadd.f32 %v5227, %v5346
      %v5348 = vpop.f32.mrb[0].mxu0
      %5349 = vmatprep.mubr.bf16.mxu0 0
      %5350 = vmatmul.mubr.bf16.gmra.mrb[0].mxu0 %v5195
      %v5351 = vpop.f32.mrb[0].mxu0
      %v5352 = vadd.f32 %v5227, %v5351
      %v5353 = vpop.f32.mrb[0].mxu0
      %v5354 = vpop.f32.mrb[0].mxu0
      %v5355 = vadd.f32 %v5227, %v5354
      %v5356 = vpop.f32.mrb[0].mxu0
      %5357 = vmatprep.mubr.bf16.mxu0 0
      %5358 = vmatmul.mubr.bf16.gmra.mrb[0].mxu0 %v5196
      %v5359 = vpop.f32.mrb[0].mxu0
      %v5360 = vadd.f32 %v5227, %v5359
      %v5361 = vpop.f32.mrb[0].mxu0
      %v5362 = vpop.f32.mrb[0].mxu0
      %v5363 = vadd.f32 %v5227, %v5362
      %v5364 = vpop.f32.mrb[0].mxu0
      %5365 = vmatprep.mubr.bf16.mxu0 0
      %5366 = vmatmul.mubr.bf16.gmra.mrb[0].mxu0 %v5197
      %v5367 = vpop.f32.mrb[0].mxu0
      %v5368 = vadd.f32 %v5227, %v5367
      %v5369 = vpop.f32.mrb[0].mxu0
      %v5370 = vpop.f32.mrb[0].mxu0
      %v5371 = vadd.f32 %v5227, %v5370
      %v5372 = vpop.f32.mrb[0].mxu0
      %5373 = vmatprep.mubr.bf16.mxu0 0
      %5374 = vmatmul.mubr.bf16.gmra.mrb[0].mxu0 %v5198
      %v5375 = vpop.f32.mrb[0].mxu0
      %v5376 = vadd.f32 %v5227, %v5375
      %v5377 = vpop.f32.mrb[0].mxu0
      %v5378 = vpop.f32.mrb[0].mxu0
      %v5379 = vadd.f32 %v5227, %v5378
      %v5380 = vpop.f32.mrb[0].mxu0
      %5381 = vmatprep.mubr.bf16.mxu0 0
      %5382 = vmatmul.mubr.bf16.gmra.mrb[0].mxu0 %v5199
      %v5383 = vpop.f32.mrb[0].mxu0
      %v5384 = vadd.f32 %v5227, %v5383
      %v5385 = vpop.f32.mrb[0].mxu0
      %v5386 = vpop.f32.mrb[0].mxu0
      %v5387 = vadd.f32 %v5227, %v5386
      %v5388 = vpop.f32.mrb[0].mxu0
      %5389 = vmatprep.mubr.bf16.mxu0 0
      %5390 = vmatmul.mubr.bf16.gmra.mrb[0].mxu0 %v5200
      %v5391 = vpop.f32.mrb[0].mxu0
      %v5392 = vadd.f32 %v5227, %v5391
      %v5393 = vpop.f32.mrb[0].mxu0
      %v5394 = vpop.f32.mrb[0].mxu0
      %v5395 = vadd.f32 %v5227, %v5394
      %v5396 = vpop.f32.mrb[0].mxu0
      %5397 = vmatprep.mubr.bf16.mxu0 0
      %5398 = vmatmul.mubr.bf16.gmra.mrb[0].mxu0 %v5201
      %v5399 = vpop.f32.mrb[0].mxu0
      %v5400 = vadd.f32 %v5227, %v5399
      %v5401 = vpop.f32.mrb[0].mxu0
      %v5402 = vpop.f32.mrb[0].mxu0
      %v5403 = vadd.f32 %v5227, %v5402
      %v5404 = vpop.f32.mrb[0].mxu0
      %5405 = vmatprep.mubr.bf16.mxu0 0
      %5406 = vmatmul.mubr.bf16.gmra.mrb[0].mxu0 %v5202
      %v5407 = vpop.f32.mrb[0].mxu0
      %v5408 = vadd.f32 %v5227, %v5407
      %v5409 = vpop.f32.mrb[0].mxu0
      %v5410 = vpop.f32.mrb[0].mxu0
      %v5411 = vadd.f32 %v5227, %v5410
      %v5412 = vpop.f32.mrb[0].mxu0
      %5413 = vmatprep.mubr.bf16.mxu0 0
      %5414 = vmatmul.mubr.bf16.gmra.mrb[0].mxu0 %v5203
      %v5415 = vpop.f32.mrb[0].mxu0
      %v5416 = vadd.f32 %v5227, %v5415
      %v5417 = vpop.f32.mrb[0].mxu0
      %v5418 = vpop.f32.mrb[0].mxu0
      %v5419 = vadd.f32 %v5227, %v5418
      %v5420 = vpop.f32.mrb[0].mxu0
      %5421 = vmatprep.mubr.bf16.mxu0 0
      %5422 = vmatmul.mubr.bf16.gmra.mrb[0].mxu0 %v5204
      %v5423 = vpop.f32.mrb[0].mxu0
      %v5424 = vadd.f32 %v5227, %v5423
      %v5425 = vpop.f32.mrb[0].mxu0
      %v5426 = vpop.f32.mrb[0].mxu0
      %v5427 = vadd.f32 %v5227, %v5426
      %v5428 = vpop.f32.mrb[0].mxu0
      %5429 = vmatprep.mubr.bf16.mxu0 0
      %5430 = vmatmul.mubr.bf16.gmra.mrb[0].mxu0 %v5205
      %v5431 = vpop.f32.mrb[0].mxu0
      %v5432 = vadd.f32 %v5227, %v5431
      %v5433 = vpop.f32.mrb[0].mxu0
      %v5434 = vpop.f32.mrb[0].mxu0
      %v5435 = vadd.f32 %v5227, %v5434
      %v5436 = vpop.f32.mrb[0].mxu0
      %5437 = vdwg.mxu0
      %v5438 = vmax.f32 %v5312, 0.0
      %v5439 = vmax.f32 %v5315, 0.0
      %v5440 = vmax.f32 %v5320, 0.0
      %v5441 = vmax.f32 %v5323, 0.0
      %v5442 = vmax.f32 %v5328, 0.0
      %v5443 = vmax.f32 %v5331, 0.0
      %v5444 = vmax.f32 %v5336, 0.0
      %v5445 = vmax.f32 %v5339, 0.0
      %v5446 = vmax.f32 %v5344, 0.0
      %v5447 = vmax.f32 %v5347, 0.0
      %v5448 = vmax.f32 %v5352, 0.0
      %v5449 = vmax.f32 %v5355, 0.0
      %v5450 = vmax.f32 %v5360, 0.0
      %v5451 = vmax.f32 %v5363, 0.0
      %v5452 = vmax.f32 %v5368, 0.0
      %v5453 = vmax.f32 %v5371, 0.0
      %v5454 = vmax.f32 %v5376, 0.0
      %v5455 = vmax.f32 %v5379, 0.0
      %v5456 = vmax.f32 %v5384, 0.0
      %v5457 = vmax.f32 %v5387, 0.0
      %v5458 = vmax.f32 %v5392, 0.0
      %v5459 = vmax.f32 %v5395, 0.0
      %v5460 = vmax.f32 %v5400, 0.0
      %v5461 = vmax.f32 %v5403, 0.0
      %v5462 = vmax.f32 %v5408, 0.0
      %v5463 = vmax.f32 %v5411, 0.0
      %v5464 = vmax.f32 %v5416, 0.0
      %v5465 = vmax.f32 %v5419, 0.0
      %v5466 = vmax.f32 %v5424, 0.0
      %v5467 = vmax.f32 %v5427, 0.0
      %v5468 = vmax.f32 %v5432, 0.0
      %v5469 = vmax.f32 %v5435, 0.0
      %5470 = vst [vmem:[%s278] sm:$0xff] %v5438
      %5471 = vst [vmem:[%s278 + $0x8] sm:$0xff] %v5439
      %5472 = vst [vmem:[%s278 + $0x10] sm:$0xff] %v5440
      %5473 = vst [vmem:[%s278 + $0x18] sm:$0xff] %v5441
      %5474 = vst [vmem:[%s278 + $0x20] sm:$0xff] %v5442
      %5475 = vst [vmem:[%s278 + $0x28] sm:$0xff] %v5443
      %5476 = vst [vmem:[%s278 + $0x30] sm:$0xff] %v5444
      %5477 = vst [vmem:[%s278 + $0x38] sm:$0xff] %v5445
      %5478 = vst [vmem:[%s278 + $0x40] sm:$0xff] %v5446
      %5479 = vst [vmem:[%s278 + $0x48] sm:$0xff] %v5447
      %5480 = vst [vmem:[%s278 + $0x50] sm:$0xff] %v5448
      %5481 = vst [vmem:[%s278 + $0x58] sm:$0xff] %v5449
      %5482 = vst [vmem:[%s278 + $0x60] sm:$0xff] %v5450
      %5483 = vst [vmem:[%s278 + $0x68] sm:$0xff] %v5451
      %5484 = vst [vmem:[%s278 + $0x70] sm:$0xff] %v5452
      %5485 = vst [vmem:[%s278 + $0x78] sm:$0xff] %v5453
      %5486 = vst [vmem:[%s278 + $0x80] sm:$0xff] %v5454
      %5487 = vst [vmem:[%s278 + $0x88] sm:$0xff] %v5455
      %5488 = vst [vmem:[%s278 + $0x90] sm:$0xff] %v5456
      %5489 = vst [vmem:[%s278 + $0x98] sm:$0xff] %v5457
      %5490 = vst [vmem:[%s278 + $0xa0] sm:$0xff] %v5458
      %5491 = vst [vmem:[%s278 + $0xa8] sm:$0xff] %v5459
      %5492 = vst [vmem:[%s278 + $0xb0] sm:$0xff] %v5460
      %5493 = vst [vmem:[%s278 + $0xb8] sm:$0xff] %v5461
      %5494 = vst [vmem:[%s278 + $0xc0] sm:$0xff] %v5462
      %5495 = vst [vmem:[%s278 + $0xc8] sm:$0xff] %v5463
      %5496 = vst [vmem:[%s278 + $0xd0] sm:$0xff] %v5464
      %5497 = vst [vmem:[%s278 + $0xd8] sm:$0xff] %v5465
      %5498 = vst [vmem:[%s278 + $0xe0] sm:$0xff] %v5466
      %5499 = vst [vmem:[%s278 + $0xe8] sm:$0xff] %v5467
      %5500 = vst [vmem:[%s278 + $0xf0] sm:$0xff] %v5468
      %5501 = vst [vmem:[%s278 + $0xf8] sm:$0xff] %v5469
      %p5502 = scmp.lt.s32.totalorder %s18, 1
      %s5503 = scalar_select %p5502, %s18, 1
      %s5504 = smul.addr %s5503, 32
      %s5505 = smul.addr %s5504, 8
      %s5506 = scalar_lea.vmem %s7, %s5505
      // Predicated region
      $region49: #{nin_block_forward.1} parent=47 // pred_check
        %p5507 = pneg %p188
      $region50: #{nin_block_forward.1} parent=47 // pred_check_branch
        %5509 = sbr.rel (%p5507) target = $region52
      $region51: #{nin_block_forward.1} parent=47 // pred_region
        _
      $region52: #{nin_block_forward.1} parent=47 // pred_fallthru
        _
    $region48: #{nin_block_forward.1} parent=5 // pred_fallthru
      _
    %p5510 = scmp.le.s32.totalorder 2, %s13
    // Predicated region
    $region53: #{nin_block_forward.1} parent=5 // pred_check
      %p5511 = pneg %p5510
    $region54: #{nin_block_forward.1} parent=5 // pred_check_branch
      %5513 = sbr.rel (%p5511) target = $region56
    $region55: #{nin_block_forward.1} parent=5 // pred_region
      %s5514 = ssub.s32 %s13, 2
      // Predicated region
      $region57: #{nin_block_forward.1} parent=55 // pred_check
        %p5515 = pneg %p194
      $region58: #{nin_block_forward.1} parent=55 // pred_check_branch
        %5517 = sbr.rel (%p5515) target = $region60
      $region59: #{nin_block_forward.1} parent=55 // pred_region
        %p5518 = scmp.lt.s32.totalorder %s19, 1
        %s5519 = scalar_select %p5518, %s19, 1
        %s5520 = smul.addr %s5519, 32
        %s5521 = smul.addr %s5520, 8
        %s5522 = scalar_lea.vmem %s7, %s5521
      $region60: #{nin_block_forward.1} parent=55 // pred_fallthru
        _
    $region56: #{nin_block_forward.1} parent=5 // pred_fallthru
      _
  $region6: #{nin_block_forward.1} parent=0 // loop_footer
    %s17 = sadd.s32 1, %s13
  $region7: #{nin_block_forward.1} parent=0 // loop_footer_branch
    %12 = sbr.rel target = $region3
  $region8: #{nin_block_forward.1} parent=0 // loop_exit
    _

</llo_original>
